<compile_context>
chip_gen: v7x
topology: tpu7x:2x2x1
jax: 0.10.0
libtpu: 0.0.40
codegen_flags: <defaults>
</compile_context>

<pallas_src>
import functools
import math

import jax
import jax.numpy as jnp
from jax.experimental import pallas as pl
from jax.experimental.pallas import tpu as pltpu


# ----------------------------- Pallas kernel ---------------------------------

def _layernorm(x, gamma, beta, eps=1e-5):
    # one-pass statistics: E[x], E[x^2]
    mean = jnp.mean(x, axis=-1, keepdims=True)
    meansq = jnp.mean(x * x, axis=-1, keepdims=True)
    var = jnp.maximum(meansq - mean * mean, 0.0)
    return (x - mean) * jax.lax.rsqrt(var + eps) * gamma + beta


def encoder_block_kernel(x_ref,
                         wqkv_ref, bqkv_ref, wo_ref, bo_ref,
                         g1_ref, be1_ref,
                         w1_ref, b1_ref, w2_ref, b2_ref,
                         g2_ref, be2_ref,
                         out_ref,
                         *, num_heads, head_dim):
    bb, S, D = x_ref.shape
    R = bb * S

    x_bf = x_ref[...].reshape(R, D)                     # bf16 fused (rows, D) slab
    x_f32 = x_bf.astype(jnp.float32)                    # for residual / LN math

    # ---- QKV projection (bf16 x bf16 -> f32 acc), layout [Q_all|K_all|V_all];
    #      downcast the whole slab to bf16 once (no per-head f32 slices/casts).
    qkv = (jnp.dot(x_bf, wqkv_ref[...], preferred_element_type=jnp.float32)
           + bqkv_ref[...]).astype(jnp.bfloat16)        # (R, 3D) bf16

    scale = 1.0 / math.sqrt(head_dim)
    acc = jnp.zeros((R, D), jnp.float32)                # fused output-proj accumulator
    for h in range(num_heads):                          # static unroll, H is small
        lo = h * head_dim
        hi = lo + head_dim
        # fold the softmax scale into Q (O(R*hd) bf16 mul, not O(B*H*S^2))
        qh = (qkv[:, lo:hi] * scale).reshape(bb, S, head_dim)
        kh = qkv[:, D + lo:D + hi].reshape(bb, S, head_dim)
        vh = qkv[:, 2 * D + lo:2 * D + hi].reshape(bb, S, head_dim)

        # contracting last dims -> no materialized K transpose; batched over bb
        logits = jnp.einsum("bqd,bkd->bqk", qh, kh,
                            preferred_element_type=jnp.float32)
        m = jnp.max(logits, axis=-1, keepdims=True)
        e = jnp.exp(logits - m)
        inv = pl.reciprocal(jnp.sum(e, axis=-1, keepdims=True), approx=True)
        attn = (e * inv).astype(jnp.bfloat16)

        oh = jnp.einsum("bqk,bkd->bqd", attn, vh,
                        preferred_element_type=jnp.float32)
        # fuse the output projection per head: (R, hd) @ Wo[lo:hi, :] -> (R, D)
        # (lane-dense accumulation; no masked column stores, no scratch slab)
        acc = acc + jnp.dot(oh.reshape(R, head_dim).astype(jnp.bfloat16),
                            wo_ref[lo:hi, :],
                            preferred_element_type=jnp.float32)

    attn_out = acc + bo_ref[...]

    # ---- residual + LayerNorm 1 (f32)
    x1 = _layernorm(x_f32 + attn_out, g1_ref[...], be1_ref[...])

    # ---- FFN: Linear -> ReLU -> Linear (bf16 matmuls, f32 accumulate)
    hmid = jnp.dot(x1.astype(jnp.bfloat16), w1_ref[...],
                   preferred_element_type=jnp.float32) + b1_ref[...]
    hmid = jnp.maximum(hmid, 0.0)
    ff = jnp.dot(hmid.astype(jnp.bfloat16), w2_ref[...],
                 preferred_element_type=jnp.float32) + b2_ref[...]

    # ---- residual + LayerNorm 2 (f32)
    x2 = _layernorm(x1 + ff, g2_ref[...], be2_ref[...])

    out_ref[...] = x2.reshape(bb, S, D).astype(out_ref.dtype)


# ------------------------------ Wrapper ---------------------------------------

_PARAM_ORDER = ("wqkv", "bqkv", "wo", "bo", "g1", "be1",
                "w1", "b1", "w2", "b2", "g2", "be2")

# Tracks whether single-buffered invariant weights (pipeline_mode=pl.Buffered(1))
# are supported on this runtime; flipped off on first failure.
_SINGLE_BUFFER_WEIGHTS = [True]


@functools.lru_cache(maxsize=None)
def _vmem_budget_bytes():
    """(block-picking budget, compiler vmem_limit) with headroom per generation."""
    try:
        cap = pltpu.get_tpu_info().vmem_capacity_bytes
    except Exception:
        cap = 64 * 1024 * 1024          # conservative: v7x per-TC physical VMEM
    pick_budget = min(int(cap * 0.70), 96 * 1024 * 1024)
    compiler_limit = min(int(cap * 0.85), 112 * 1024 * 1024)
    return pick_budget, compiler_limit


def _block_vmem_bytes(block_b, S, D, F, weight_bytes):
    """Rough per-grid-step VMEM estimate for a given block_b."""
    rows = block_b * S
    act_blocks = 2 * 2 * rows * D * 2                    # x + out, 2-deep, bf16
    # big temporaries: qkv (f32+bf16), hmid (f32+bf16), LN/residual f32 slabs,
    # per-head logits/attn (f32 + bf16 copy)
    temps = rows * (3 * D * 6 + F * 6 + D * 20) + block_b * S * S * 12
    return act_blocks + weight_bytes + temps


def _pick_block_b(B, S, D, F, weight_bytes, budget,
                  target_rows=256, max_rows=2048):
    """Largest divisor of B whose fused slab fits the VMEM budget; prefer >=2
    grid steps (v7x megacore) when the per-step slab stays >= target_rows."""
    feasible = [d for d in range(1, B + 1)
                if B % d == 0 and d * S <= max_rows
                and _block_vmem_bytes(d, S, D, F, weight_bytes) <= budget]
    if not feasible:
        feasible = [1]
    best = max(feasible)
    if B // best < 2:
        alts = [d for d in feasible if B // d >= 2 and d * S >= target_rows]
        if alts:
            best = max(alts)
    return best


def encoder_block(x, params, num_heads):
    B, S, D = x.shape
    assert D % num_heads == 0, "input_dim must be divisible by num_heads"
    head_dim = D // num_heads
    assert num_heads * head_dim == D
    F = params["w1"].shape[1]
    param_vals = [params[k] for k in _PARAM_ORDER]
    weight_bytes = sum(int(p.size) * p.dtype.itemsize for p in param_vals)

    budget, vmem_limit = _vmem_budget_bytes()
    block_b = _pick_block_b(B, S, D, F, weight_bytes, budget)
    grid = (B // block_b,)

    kernel = functools.partial(encoder_block_kernel,
                               num_heads=num_heads, head_dim=head_dim)

    # Advisory cost estimate so XLA schedules the per-layer calls tightly.
    flops = (2 * B * S * D * 3 * D                       # qkv proj
             + 4 * B * num_heads * S * S * head_dim      # qk^T and attn@v
             + 2 * B * S * D * D                         # output proj
             + 4 * B * S * D * F)                        # ffn (two matmuls)
    transcendentals = B * num_heads * S * S + 4 * B * S
    bytes_accessed = int(x.size * x.dtype.itemsize * 2 + weight_bytes)

    def run(single_buffer_weights):
        in_specs = [pl.BlockSpec((block_b, S, D), lambda b: (b, 0, 0))]
        for p in param_vals:
            if single_buffer_weights:
                # invariant weights: fetched once, keep a single VMEM buffer
                in_specs.append(pl.BlockSpec(p.shape, lambda b: (0, 0),
                                             pipeline_mode=pl.Buffered(1)))
            else:
                in_specs.append(pl.BlockSpec(p.shape, lambda b: (0, 0)))
        return pl.pallas_call(
            kernel,
            out_shape=jax.ShapeDtypeStruct((B, S, D), x.dtype),
            grid_spec=pltpu.PrefetchScalarGridSpec(
                num_scalar_prefetch=0,
                grid=grid,
                in_specs=in_specs,
                out_specs=pl.BlockSpec((block_b, S, D), lambda b: (b, 0, 0)),
            ),
            compiler_params=pltpu.CompilerParams(
                dimension_semantics=("parallel",),
                vmem_limit_bytes=vmem_limit),
            cost_estimate=pl.CostEstimate(flops=flops,
                                          transcendentals=transcendentals,
                                          bytes_accessed=bytes_accessed),
        )(x, *param_vals)

    if _SINGLE_BUFFER_WEIGHTS[0]:
        try:
            return run(True)
        except Exception:
            # runtime without pipeline_mode / Buffered(1): fall back once,
            # remember for subsequent layers.
            _SINGLE_BUFFER_WEIGHTS[0] = False
    return run(False)


def transformer_encoder(x, layer_params, num_heads):
    orig_dtype = x.dtype
    # bf16 activations at the pallas_call boundary: halves x/out HBM traffic.
    y = x.astype(jnp.bfloat16)
    for p in layer_params:
        y = encoder_block(y, p, num_heads)
    return y.astype(orig_dtype)


# -------------------------- Parameter init ------------------------------------

def init_layer_params(key, input_dim, dim_feedforward):
    ks = jax.random.split(key, 6)
    D, F = input_dim, dim_feedforward
    s = 0.05
    bf = jnp.bfloat16
    return {
        # attention (weights stored as (in, out) == W^T of nn.Linear), bf16 on MXU
        # column layout: [Q_all | K_all | V_all], head-major within each block
        "wqkv": (jax.random.normal(ks[0], (D, 3 * D), jnp.float32) * s).astype(bf),
        "bqkv": jnp.zeros((1, 3 * D), jnp.float32),
        "wo":   (jax.random.normal(ks[1], (D, D), jnp.float32) * s).astype(bf),
        "bo":   jnp.zeros((1, D), jnp.float32),
        # layer norms (PyTorch defaults: gamma=1, beta=0), kept f32
        "g1":  jnp.ones((1, D), jnp.float32),
        "be1": jnp.zeros((1, D), jnp.float32),
        "g2":  jnp.ones((1, D), jnp.float32),
        "be2": jnp.zeros((1, D), jnp.float32),
        # feed-forward
        "w1": (jax.random.normal(ks[2], (D, F), jnp.float32) * s).astype(bf),
        "b1": jax.random.normal(ks[3], (1, F), jnp.float32) * s,
        "w2": (jax.random.normal(ks[4], (F, D), jnp.float32) * s).astype(bf),
        "b2": jax.random.normal(ks[5], (1, D), jnp.float32) * s,
    }


# ----------------------- Pure-JAX reference (for check) ------------------------

def ref_block(x, p, num_heads):
    B, S, D = x.shape
    hd = D // num_heads
    qkv = x @ p["wqkv"].astype(jnp.float32) + p["bqkv"]   # (B, S, 3D), [Q|K|V] head-major
    q = qkv[..., 0:D].reshape(B, S, num_heads, hd).transpose(0, 2, 1, 3)
    k = qkv[..., D:2 * D].reshape(B, S, num_heads, hd).transpose(0, 2, 1, 3)
    v = qkv[..., 2 * D:3 * D].reshape(B, S, num_heads, hd).transpose(0, 2, 1, 3)
    logits = jnp.einsum("bhqd,bhkd->bhqk", q, k) / math.sqrt(hd)
    attn = jax.nn.softmax(logits, axis=-1)
    vals = jnp.einsum("bhqk,bhkd->bhqd", attn, v)
    vals = vals.transpose(0, 2, 1, 3).reshape(B, S, D)
    o = vals @ p["wo"].astype(jnp.float32) + p["bo"]

    def ln(y, g, b, eps=1e-5):
        m = jnp.mean(y, axis=-1, keepdims=True)
        var = jnp.mean((y - m) ** 2, axis=-1, keepdims=True)
        return (y - m) * jax.lax.rsqrt(var + eps) * g + b

    x1 = ln(x + o, p["g1"], p["be1"])
    ff = (jnp.maximum(x1 @ p["w1"].astype(jnp.float32) + p["b1"], 0.0)
          @ p["w2"].astype(jnp.float32) + p["b2"])
    return ln(x1 + ff, p["g2"], p["be2"])


def ref_encoder(x, layer_params, num_heads):
    for p in layer_params:
        x = ref_block(x, p, num_heads)
    return x


# ----------------------------------- Main --------------------------------------

if __name__ == "__main__":
    B, S, D = 2, 8, 32          # batch, seq_length, input_dim (= embed_dim)
    NUM_HEADS = 4
    DIM_FF = 64
    NUM_LAYERS = 2

    root = jax.random.PRNGKey(0)
    x_key, *layer_keys = jax.random.split(root, 1 + NUM_LAYERS)

    x = jax.random.normal(x_key, (B, S, D), jnp.float32)
    layer_params = [init_layer_params(k, D, DIM_FF) for k in layer_keys]

    out = transformer_encoder(x, layer_params, NUM_HEADS)
    out = jax.block_until_ready(out)

    expected = ref_encoder(x, layer_params, NUM_HEADS)
    assert out.shape == (B, S, D), out.shape
    max_err = float(jnp.max(jnp.abs(out - expected)))
    # bf16 boundary activations + bf16 matmul operands + approx reciprocal in the
    # kernel vs. an all-f32 reference.
    assert jnp.allclose(out, expected, atol=1e-1, rtol=1e-1), max_err

    print("KERNEL_OK")
</pallas_src>

<mosaic_0001>
module attributes {stable_mosaic.version = 11 : i64} {
  func.func @encoder_block_kernel(%arg0: i32, %arg1: memref<2x8x32xbf16, #tpu.memory_space<vmem>>, %arg2: memref<32x96xbf16, #tpu.memory_space<vmem>>, %arg3: memref<1x96xf32, #tpu.memory_space<vmem>>, %arg4: memref<32x32xbf16, #tpu.memory_space<vmem>>, %arg5: memref<1x32xf32, #tpu.memory_space<vmem>>, %arg6: memref<1x32xf32, #tpu.memory_space<vmem>>, %arg7: memref<1x32xf32, #tpu.memory_space<vmem>>, %arg8: memref<32x64xbf16, #tpu.memory_space<vmem>>, %arg9: memref<1x64xf32, #tpu.memory_space<vmem>>, %arg10: memref<64x32xbf16, #tpu.memory_space<vmem>>, %arg11: memref<1x32xf32, #tpu.memory_space<vmem>>, %arg12: memref<1x32xf32, #tpu.memory_space<vmem>>, %arg13: memref<1x32xf32, #tpu.memory_space<vmem>>, %arg14: memref<2x8x32xbf16, #tpu.memory_space<vmem>>) attributes {dimension_semantics = [#tpu.dimension_semantics<parallel>], iteration_bounds = array<i64: 1>, scalar_prefetch = 0 : i64, scratch_operands = 0 : i64, tpu.core_type = #tpu.core_type<tc>, window_params = [{transform_indices = @transform_0, window_bounds = array<i64: 2, 8, 32>}, {pipeline_mode = #tpu.pipeline_mode<synchronous>, transform_indices = @transform_1, window_bounds = array<i64: 32, 96>}, {pipeline_mode = #tpu.pipeline_mode<synchronous>, transform_indices = @transform_2, window_bounds = array<i64: 1, 96>}, {pipeline_mode = #tpu.pipeline_mode<synchronous>, transform_indices = @transform_3, window_bounds = array<i64: 32, 32>}, {pipeline_mode = #tpu.pipeline_mode<synchronous>, transform_indices = @transform_4, window_bounds = array<i64: 1, 32>}, {pipeline_mode = #tpu.pipeline_mode<synchronous>, transform_indices = @transform_5, window_bounds = array<i64: 1, 32>}, {pipeline_mode = #tpu.pipeline_mode<synchronous>, transform_indices = @transform_6, window_bounds = array<i64: 1, 32>}, {pipeline_mode = #tpu.pipeline_mode<synchronous>, transform_indices = @transform_7, window_bounds = array<i64: 32, 64>}, {pipeline_mode = #tpu.pipeline_mode<synchronous>, transform_indices = @transform_8, window_bounds = array<i64: 1, 64>}, {pipeline_mode = #tpu.pipeline_mode<synchronous>, transform_indices = @transform_9, window_bounds = array<i64: 64, 32>}, {pipeline_mode = #tpu.pipeline_mode<synchronous>, transform_indices = @transform_10, window_bounds = array<i64: 1, 32>}, {pipeline_mode = #tpu.pipeline_mode<synchronous>, transform_indices = @transform_11, window_bounds = array<i64: 1, 32>}, {pipeline_mode = #tpu.pipeline_mode<synchronous>, transform_indices = @transform_12, window_bounds = array<i64: 1, 32>}, {transform_indices = @transform_13, window_bounds = array<i64: 2, 8, 32>}]} {
    %c0 = arith.constant 0 : index
    %c0_0 = arith.constant 0 : index
    %c0_1 = arith.constant 0 : index
    %0 = vector.load %arg1[%c0, %c0_0, %c0_1] : memref<2x8x32xbf16, #tpu.memory_space<vmem>>, vector<2x8x32xbf16>
    %1 = vector.shape_cast %0 : vector<2x8x32xbf16> to vector<16x32xbf16>
    %2 = arith.extf %1 : vector<16x32xbf16> to vector<16x32xf32>
    %c0_2 = arith.constant 0 : index
    %c0_3 = arith.constant 0 : index
    %3 = vector.load %arg2[%c0_2, %c0_3] : memref<32x96xbf16, #tpu.memory_space<vmem>>, vector<32x96xbf16>
    %cst = arith.constant dense<0.000000e+00> : vector<16x96xf32>
    %4 = tpu.matmul %1, %3, %cst {dimension_numbers = #tpu.dot_dimension_numbers<[1], [0], [0], [1], [0, 0, 1, 1], [], []>} : vector<16x32xbf16>, vector<32x96xbf16>, vector<16x96xf32> -> vector<16x96xf32>
    %c0_4 = arith.constant 0 : index
    %c0_5 = arith.constant 0 : index
    %5 = vector.load %arg3[%c0_4, %c0_5] : memref<1x96xf32, #tpu.memory_space<vmem>>, vector<1x96xf32>
    %6 = vector.broadcast %5 : vector<1x96xf32> to vector<16x96xf32>
    %7 = arith.addf %4, %6 : vector<16x96xf32>
    %8 = arith.truncf %7 : vector<16x96xf32> to vector<16x96xbf16>
    %cst_6 = arith.constant 0.000000e+00 : f32
    %9 = vector.broadcast %cst_6 : f32 to vector<16x32xf32>
    %10 = vector.extract_strided_slice %8 {offsets = [0, 0], sizes = [16, 8], strides = [1, 1]} : vector<16x96xbf16> to vector<16x8xbf16>
    %cst_7 = arith.constant 3.535160e-01 : bf16
    %11 = vector.broadcast %cst_7 : bf16 to vector<16x8xbf16>
    %12 = arith.mulf %10, %11 : vector<16x8xbf16>
    %13 = vector.shape_cast %12 : vector<16x8xbf16> to vector<2x8x8xbf16>
    %14 = vector.extract_strided_slice %8 {offsets = [0, 32], sizes = [16, 8], strides = [1, 1]} : vector<16x96xbf16> to vector<16x8xbf16>
    %15 = vector.shape_cast %14 : vector<16x8xbf16> to vector<2x8x8xbf16>
    %16 = vector.extract_strided_slice %8 {offsets = [0, 64], sizes = [16, 8], strides = [1, 1]} : vector<16x96xbf16> to vector<16x8xbf16>
    %17 = vector.shape_cast %16 : vector<16x8xbf16> to vector<2x8x8xbf16>
    "tpu.trace_start"() <{level = 10 : i32, message = "bqd,bkd->bqk"}> : () -> ()
    %cst_8 = arith.constant dense<0.000000e+00> : vector<2x8x8xf32>
    %18 = tpu.matmul %13, %15, %cst_8 {dimension_numbers = #tpu.dot_dimension_numbers<[2], [2], [1], [1], [0, 0, 0, 1, 1, 1], [0], [0]>} : vector<2x8x8xbf16>, vector<2x8x8xbf16>, vector<2x8x8xf32> -> vector<2x8x8xf32>
    "tpu.trace_stop"() : () -> ()
    %cst_9 = arith.constant dense<0xFF800000> : vector<2x8xf32>
    %19 = vector.multi_reduction <maximumf>, %18, %cst_9 [2] : vector<2x8x8xf32> to vector<2x8xf32>
    %20 = vector.shape_cast %19 : vector<2x8xf32> to vector<2x8x1xf32>
    %21 = vector.broadcast %20 : vector<2x8x1xf32> to vector<2x8x8xf32>
    %22 = arith.subf %18, %21 : vector<2x8x8xf32>
    %23 = math.exp %22 : vector<2x8x8xf32>
    %cst_10 = arith.constant dense<0.000000e+00> : vector<2x8xf32>
    %24 = vector.multi_reduction <add>, %23, %cst_10 [2] : vector<2x8x8xf32> to vector<2x8xf32>
    %25 = vector.shape_cast %24 : vector<2x8xf32> to vector<2x8x1xf32>
    %26 = tpu.reciprocal %25 {approx = true} : vector<2x8x1xf32> -> vector<2x8x1xf32>
    %27 = vector.broadcast %26 : vector<2x8x1xf32> to vector<2x8x8xf32>
    %28 = arith.mulf %23, %27 : vector<2x8x8xf32>
    %29 = arith.truncf %28 : vector<2x8x8xf32> to vector<2x8x8xbf16>
    "tpu.trace_start"() <{level = 10 : i32, message = "bqk,bkd->bqd"}> : () -> ()
    %cst_11 = arith.constant dense<0.000000e+00> : vector<2x8x8xf32>
    %30 = tpu.matmul %29, %17, %cst_11 {dimension_numbers = #tpu.dot_dimension_numbers<[2], [1], [1], [2], [0, 0, 0, 1, 1, 2], [0], [0]>} : vector<2x8x8xbf16>, vector<2x8x8xbf16>, vector<2x8x8xf32> -> vector<2x8x8xf32>
    "tpu.trace_stop"() : () -> ()
    %31 = vector.shape_cast %30 : vector<2x8x8xf32> to vector<16x8xf32>
    %32 = arith.truncf %31 : vector<16x8xf32> to vector<16x8xbf16>
    %c0_12 = arith.constant 0 : index
    %c0_13 = arith.constant 0 : index
    %33 = vector.load %arg4[%c0_12, %c0_13] : memref<32x32xbf16, #tpu.memory_space<vmem>>, vector<8x32xbf16>
    %cst_14 = arith.constant dense<0.000000e+00> : vector<16x32xf32>
    %34 = tpu.matmul %32, %33, %cst_14 {dimension_numbers = #tpu.dot_dimension_numbers<[1], [0], [0], [1], [0, 0, 1, 1], [], []>} : vector<16x8xbf16>, vector<8x32xbf16>, vector<16x32xf32> -> vector<16x32xf32>
    %35 = arith.addf %9, %34 : vector<16x32xf32>
    %36 = vector.extract_strided_slice %8 {offsets = [0, 8], sizes = [16, 8], strides = [1, 1]} : vector<16x96xbf16> to vector<16x8xbf16>
    %cst_15 = arith.constant 3.535160e-01 : bf16
    %37 = vector.broadcast %cst_15 : bf16 to vector<16x8xbf16>
    %38 = arith.mulf %36, %37 : vector<16x8xbf16>
    %39 = vector.shape_cast %38 : vector<16x8xbf16> to vector<2x8x8xbf16>
    %40 = vector.extract_strided_slice %8 {offsets = [0, 40], sizes = [16, 8], strides = [1, 1]} : vector<16x96xbf16> to vector<16x8xbf16>
    %41 = vector.shape_cast %40 : vector<16x8xbf16> to vector<2x8x8xbf16>
    %42 = vector.extract_strided_slice %8 {offsets = [0, 72], sizes = [16, 8], strides = [1, 1]} : vector<16x96xbf16> to vector<16x8xbf16>
    %43 = vector.shape_cast %42 : vector<16x8xbf16> to vector<2x8x8xbf16>
    "tpu.trace_start"() <{level = 10 : i32, message = "bqd,bkd->bqk"}> : () -> ()
    %cst_16 = arith.constant dense<0.000000e+00> : vector<2x8x8xf32>
    %44 = tpu.matmul %39, %41, %cst_16 {dimension_numbers = #tpu.dot_dimension_numbers<[2], [2], [1], [1], [0, 0, 0, 1, 1, 1], [0], [0]>} : vector<2x8x8xbf16>, vector<2x8x8xbf16>, vector<2x8x8xf32> -> vector<2x8x8xf32>
    "tpu.trace_stop"() : () -> ()
    %cst_17 = arith.constant dense<0xFF800000> : vector<2x8xf32>
    %45 = vector.multi_reduction <maximumf>, %44, %cst_17 [2] : vector<2x8x8xf32> to vector<2x8xf32>
    %46 = vector.shape_cast %45 : vector<2x8xf32> to vector<2x8x1xf32>
    %47 = vector.broadcast %46 : vector<2x8x1xf32> to vector<2x8x8xf32>
    %48 = arith.subf %44, %47 : vector<2x8x8xf32>
    %49 = math.exp %48 : vector<2x8x8xf32>
    %cst_18 = arith.constant dense<0.000000e+00> : vector<2x8xf32>
    %50 = vector.multi_reduction <add>, %49, %cst_18 [2] : vector<2x8x8xf32> to vector<2x8xf32>
    %51 = vector.shape_cast %50 : vector<2x8xf32> to vector<2x8x1xf32>
    %52 = tpu.reciprocal %51 {approx = true} : vector<2x8x1xf32> -> vector<2x8x1xf32>
    %53 = vector.broadcast %52 : vector<2x8x1xf32> to vector<2x8x8xf32>
    %54 = arith.mulf %49, %53 : vector<2x8x8xf32>
    %55 = arith.truncf %54 : vector<2x8x8xf32> to vector<2x8x8xbf16>
    "tpu.trace_start"() <{level = 10 : i32, message = "bqk,bkd->bqd"}> : () -> ()
    %cst_19 = arith.constant dense<0.000000e+00> : vector<2x8x8xf32>
    %56 = tpu.matmul %55, %43, %cst_19 {dimension_numbers = #tpu.dot_dimension_numbers<[2], [1], [1], [2], [0, 0, 0, 1, 1, 2], [0], [0]>} : vector<2x8x8xbf16>, vector<2x8x8xbf16>, vector<2x8x8xf32> -> vector<2x8x8xf32>
    "tpu.trace_stop"() : () -> ()
    %57 = vector.shape_cast %56 : vector<2x8x8xf32> to vector<16x8xf32>
    %58 = arith.truncf %57 : vector<16x8xf32> to vector<16x8xbf16>
    %c8 = arith.constant 8 : index
    %c0_20 = arith.constant 0 : index
    %59 = vector.load %arg4[%c8, %c0_20] : memref<32x32xbf16, #tpu.memory_space<vmem>>, vector<8x32xbf16>
    %cst_21 = arith.constant dense<0.000000e+00> : vector<16x32xf32>
    %60 = tpu.matmul %58, %59, %cst_21 {dimension_numbers = #tpu.dot_dimension_numbers<[1], [0], [0], [1], [0, 0, 1, 1], [], []>} : vector<16x8xbf16>, vector<8x32xbf16>, vector<16x32xf32> -> vector<16x32xf32>
    %61 = arith.addf %35, %60 : vector<16x32xf32>
    %62 = vector.extract_strided_slice %8 {offsets = [0, 16], sizes = [16, 8], strides = [1, 1]} : vector<16x96xbf16> to vector<16x8xbf16>
    %cst_22 = arith.constant 3.535160e-01 : bf16
    %63 = vector.broadcast %cst_22 : bf16 to vector<16x8xbf16>
    %64 = arith.mulf %62, %63 : vector<16x8xbf16>
    %65 = vector.shape_cast %64 : vector<16x8xbf16> to vector<2x8x8xbf16>
    %66 = vector.extract_strided_slice %8 {offsets = [0, 48], sizes = [16, 8], strides = [1, 1]} : vector<16x96xbf16> to vector<16x8xbf16>
    %67 = vector.shape_cast %66 : vector<16x8xbf16> to vector<2x8x8xbf16>
    %68 = vector.extract_strided_slice %8 {offsets = [0, 80], sizes = [16, 8], strides = [1, 1]} : vector<16x96xbf16> to vector<16x8xbf16>
    %69 = vector.shape_cast %68 : vector<16x8xbf16> to vector<2x8x8xbf16>
    "tpu.trace_start"() <{level = 10 : i32, message = "bqd,bkd->bqk"}> : () -> ()
    %cst_23 = arith.constant dense<0.000000e+00> : vector<2x8x8xf32>
    %70 = tpu.matmul %65, %67, %cst_23 {dimension_numbers = #tpu.dot_dimension_numbers<[2], [2], [1], [1], [0, 0, 0, 1, 1, 1], [0], [0]>} : vector<2x8x8xbf16>, vector<2x8x8xbf16>, vector<2x8x8xf32> -> vector<2x8x8xf32>
    "tpu.trace_stop"() : () -> ()
    %cst_24 = arith.constant dense<0xFF800000> : vector<2x8xf32>
    %71 = vector.multi_reduction <maximumf>, %70, %cst_24 [2] : vector<2x8x8xf32> to vector<2x8xf32>
    %72 = vector.shape_cast %71 : vector<2x8xf32> to vector<2x8x1xf32>
    %73 = vector.broadcast %72 : vector<2x8x1xf32> to vector<2x8x8xf32>
    %74 = arith.subf %70, %73 : vector<2x8x8xf32>
    %75 = math.exp %74 : vector<2x8x8xf32>
    %cst_25 = arith.constant dense<0.000000e+00> : vector<2x8xf32>
    %76 = vector.multi_reduction <add>, %75, %cst_25 [2] : vector<2x8x8xf32> to vector<2x8xf32>
    %77 = vector.shape_cast %76 : vector<2x8xf32> to vector<2x8x1xf32>
    %78 = tpu.reciprocal %77 {approx = true} : vector<2x8x1xf32> -> vector<2x8x1xf32>
    %79 = vector.broadcast %78 : vector<2x8x1xf32> to vector<2x8x8xf32>
    %80 = arith.mulf %75, %79 : vector<2x8x8xf32>
    %81 = arith.truncf %80 : vector<2x8x8xf32> to vector<2x8x8xbf16>
    "tpu.trace_start"() <{level = 10 : i32, message = "bqk,bkd->bqd"}> : () -> ()
    %cst_26 = arith.constant dense<0.000000e+00> : vector<2x8x8xf32>
    %82 = tpu.matmul %81, %69, %cst_26 {dimension_numbers = #tpu.dot_dimension_numbers<[2], [1], [1], [2], [0, 0, 0, 1, 1, 2], [0], [0]>} : vector<2x8x8xbf16>, vector<2x8x8xbf16>, vector<2x8x8xf32> -> vector<2x8x8xf32>
    "tpu.trace_stop"() : () -> ()
    %83 = vector.shape_cast %82 : vector<2x8x8xf32> to vector<16x8xf32>
    %84 = arith.truncf %83 : vector<16x8xf32> to vector<16x8xbf16>
    %c16 = arith.constant 16 : index
    %c0_27 = arith.constant 0 : index
    %85 = vector.load %arg4[%c16, %c0_27] : memref<32x32xbf16, #tpu.memory_space<vmem>>, vector<8x32xbf16>
    %cst_28 = arith.constant dense<0.000000e+00> : vector<16x32xf32>
    %86 = tpu.matmul %84, %85, %cst_28 {dimension_numbers = #tpu.dot_dimension_numbers<[1], [0], [0], [1], [0, 0, 1, 1], [], []>} : vector<16x8xbf16>, vector<8x32xbf16>, vector<16x32xf32> -> vector<16x32xf32>
    %87 = arith.addf %61, %86 : vector<16x32xf32>
    %88 = vector.extract_strided_slice %8 {offsets = [0, 24], sizes = [16, 8], strides = [1, 1]} : vector<16x96xbf16> to vector<16x8xbf16>
    %cst_29 = arith.constant 3.535160e-01 : bf16
    %89 = vector.broadcast %cst_29 : bf16 to vector<16x8xbf16>
    %90 = arith.mulf %88, %89 : vector<16x8xbf16>
    %91 = vector.shape_cast %90 : vector<16x8xbf16> to vector<2x8x8xbf16>
    %92 = vector.extract_strided_slice %8 {offsets = [0, 56], sizes = [16, 8], strides = [1, 1]} : vector<16x96xbf16> to vector<16x8xbf16>
    %93 = vector.shape_cast %92 : vector<16x8xbf16> to vector<2x8x8xbf16>
    %94 = vector.extract_strided_slice %8 {offsets = [0, 88], sizes = [16, 8], strides = [1, 1]} : vector<16x96xbf16> to vector<16x8xbf16>
    %95 = vector.shape_cast %94 : vector<16x8xbf16> to vector<2x8x8xbf16>
    "tpu.trace_start"() <{level = 10 : i32, message = "bqd,bkd->bqk"}> : () -> ()
    %cst_30 = arith.constant dense<0.000000e+00> : vector<2x8x8xf32>
    %96 = tpu.matmul %91, %93, %cst_30 {dimension_numbers = #tpu.dot_dimension_numbers<[2], [2], [1], [1], [0, 0, 0, 1, 1, 1], [0], [0]>} : vector<2x8x8xbf16>, vector<2x8x8xbf16>, vector<2x8x8xf32> -> vector<2x8x8xf32>
    "tpu.trace_stop"() : () -> ()
    %cst_31 = arith.constant dense<0xFF800000> : vector<2x8xf32>
    %97 = vector.multi_reduction <maximumf>, %96, %cst_31 [2] : vector<2x8x8xf32> to vector<2x8xf32>
    %98 = vector.shape_cast %97 : vector<2x8xf32> to vector<2x8x1xf32>
    %99 = vector.broadcast %98 : vector<2x8x1xf32> to vector<2x8x8xf32>
    %100 = arith.subf %96, %99 : vector<2x8x8xf32>
    %101 = math.exp %100 : vector<2x8x8xf32>
    %cst_32 = arith.constant dense<0.000000e+00> : vector<2x8xf32>
    %102 = vector.multi_reduction <add>, %101, %cst_32 [2] : vector<2x8x8xf32> to vector<2x8xf32>
    %103 = vector.shape_cast %102 : vector<2x8xf32> to vector<2x8x1xf32>
    %104 = tpu.reciprocal %103 {approx = true} : vector<2x8x1xf32> -> vector<2x8x1xf32>
    %105 = vector.broadcast %104 : vector<2x8x1xf32> to vector<2x8x8xf32>
    %106 = arith.mulf %101, %105 : vector<2x8x8xf32>
    %107 = arith.truncf %106 : vector<2x8x8xf32> to vector<2x8x8xbf16>
    "tpu.trace_start"() <{level = 10 : i32, message = "bqk,bkd->bqd"}> : () -> ()
    %cst_33 = arith.constant dense<0.000000e+00> : vector<2x8x8xf32>
    %108 = tpu.matmul %107, %95, %cst_33 {dimension_numbers = #tpu.dot_dimension_numbers<[2], [1], [1], [2], [0, 0, 0, 1, 1, 2], [0], [0]>} : vector<2x8x8xbf16>, vector<2x8x8xbf16>, vector<2x8x8xf32> -> vector<2x8x8xf32>
    "tpu.trace_stop"() : () -> ()
    %109 = vector.shape_cast %108 : vector<2x8x8xf32> to vector<16x8xf32>
    %110 = arith.truncf %109 : vector<16x8xf32> to vector<16x8xbf16>
    %c24 = arith.constant 24 : index
    %c0_34 = arith.constant 0 : index
    %111 = vector.load %arg4[%c24, %c0_34] : memref<32x32xbf16, #tpu.memory_space<vmem>>, vector<8x32xbf16>
    %cst_35 = arith.constant dense<0.000000e+00> : vector<16x32xf32>
    %112 = tpu.matmul %110, %111, %cst_35 {dimension_numbers = #tpu.dot_dimension_numbers<[1], [0], [0], [1], [0, 0, 1, 1], [], []>} : vector<16x8xbf16>, vector<8x32xbf16>, vector<16x32xf32> -> vector<16x32xf32>
    %113 = arith.addf %87, %112 : vector<16x32xf32>
    %c0_36 = arith.constant 0 : index
    %c0_37 = arith.constant 0 : index
    %114 = vector.load %arg5[%c0_36, %c0_37] : memref<1x32xf32, #tpu.memory_space<vmem>>, vector<1x32xf32>
    %115 = vector.broadcast %114 : vector<1x32xf32> to vector<16x32xf32>
    %116 = arith.addf %113, %115 : vector<16x32xf32>
    %117 = arith.addf %2, %116 : vector<16x32xf32>
    %c0_38 = arith.constant 0 : index
    %c0_39 = arith.constant 0 : index
    %118 = vector.load %arg6[%c0_38, %c0_39] : memref<1x32xf32, #tpu.memory_space<vmem>>, vector<1x32xf32>
    %c0_40 = arith.constant 0 : index
    %c0_41 = arith.constant 0 : index
    %119 = vector.load %arg7[%c0_40, %c0_41] : memref<1x32xf32, #tpu.memory_space<vmem>>, vector<1x32xf32>
    %cst_42 = arith.constant dense<0.000000e+00> : vector<16xf32>
    %120 = vector.multi_reduction <add>, %117, %cst_42 [1] : vector<16x32xf32> to vector<16xf32>
    %121 = vector.shape_cast %120 : vector<16xf32> to vector<16x1xf32>
    %cst_43 = arith.constant 3.200000e+01 : f32
    %122 = vector.broadcast %cst_43 : f32 to vector<16x1xf32>
    %123 = arith.divf %121, %122 : vector<16x1xf32>
    %124 = arith.mulf %117, %117 : vector<16x32xf32>
    %cst_44 = arith.constant dense<0.000000e+00> : vector<16xf32>
    %125 = vector.multi_reduction <add>, %124, %cst_44 [1] : vector<16x32xf32> to vector<16xf32>
    %126 = vector.shape_cast %125 : vector<16xf32> to vector<16x1xf32>
    %cst_45 = arith.constant 3.200000e+01 : f32
    %127 = vector.broadcast %cst_45 : f32 to vector<16x1xf32>
    %128 = arith.divf %126, %127 : vector<16x1xf32>
    %129 = arith.mulf %123, %123 : vector<16x1xf32>
    %130 = arith.subf %128, %129 : vector<16x1xf32>
    %cst_46 = arith.constant 0.000000e+00 : f32
    %131 = vector.broadcast %cst_46 : f32 to vector<16x1xf32>
    %132 = arith.maximumf %130, %131 : vector<16x1xf32>
    %133 = vector.broadcast %123 : vector<16x1xf32> to vector<16x32xf32>
    %134 = arith.subf %117, %133 : vector<16x32xf32>
    %cst_47 = arith.constant 9.99999974E-6 : f32
    %135 = vector.broadcast %cst_47 : f32 to vector<16x1xf32>
    %136 = arith.addf %132, %135 : vector<16x1xf32>
    %137 = math.rsqrt %136 : vector<16x1xf32>
    %138 = vector.broadcast %137 : vector<16x1xf32> to vector<16x32xf32>
    %139 = arith.mulf %134, %138 : vector<16x32xf32>
    %140 = vector.broadcast %118 : vector<1x32xf32> to vector<16x32xf32>
    %141 = arith.mulf %139, %140 : vector<16x32xf32>
    %142 = vector.broadcast %119 : vector<1x32xf32> to vector<16x32xf32>
    %143 = arith.addf %141, %142 : vector<16x32xf32>
    %144 = arith.truncf %143 : vector<16x32xf32> to vector<16x32xbf16>
    %c0_48 = arith.constant 0 : index
    %c0_49 = arith.constant 0 : index
    %145 = vector.load %arg8[%c0_48, %c0_49] : memref<32x64xbf16, #tpu.memory_space<vmem>>, vector<32x64xbf16>
    %cst_50 = arith.constant dense<0.000000e+00> : vector<16x64xf32>
    %146 = tpu.matmul %144, %145, %cst_50 {dimension_numbers = #tpu.dot_dimension_numbers<[1], [0], [0], [1], [0, 0, 1, 1], [], []>} : vector<16x32xbf16>, vector<32x64xbf16>, vector<16x64xf32> -> vector<16x64xf32>
    %c0_51 = arith.constant 0 : index
    %c0_52 = arith.constant 0 : index
    %147 = vector.load %arg9[%c0_51, %c0_52] : memref<1x64xf32, #tpu.memory_space<vmem>>, vector<1x64xf32>
    %148 = vector.broadcast %147 : vector<1x64xf32> to vector<16x64xf32>
    %149 = arith.addf %146, %148 : vector<16x64xf32>
    %cst_53 = arith.constant 0.000000e+00 : f32
    %150 = vector.broadcast %cst_53 : f32 to vector<16x64xf32>
    %151 = arith.maximumf %149, %150 : vector<16x64xf32>
    %152 = arith.truncf %151 : vector<16x64xf32> to vector<16x64xbf16>
    %c0_54 = arith.constant 0 : index
    %c0_55 = arith.constant 0 : index
    %153 = vector.load %arg10[%c0_54, %c0_55] : memref<64x32xbf16, #tpu.memory_space<vmem>>, vector<64x32xbf16>
    %cst_56 = arith.constant dense<0.000000e+00> : vector<16x32xf32>
    %154 = tpu.matmul %152, %153, %cst_56 {dimension_numbers = #tpu.dot_dimension_numbers<[1], [0], [0], [1], [0, 0, 1, 1], [], []>} : vector<16x64xbf16>, vector<64x32xbf16>, vector<16x32xf32> -> vector<16x32xf32>
    %c0_57 = arith.constant 0 : index
    %c0_58 = arith.constant 0 : index
    %155 = vector.load %arg11[%c0_57, %c0_58] : memref<1x32xf32, #tpu.memory_space<vmem>>, vector<1x32xf32>
    %156 = vector.broadcast %155 : vector<1x32xf32> to vector<16x32xf32>
    %157 = arith.addf %154, %156 : vector<16x32xf32>
    %158 = arith.addf %143, %157 : vector<16x32xf32>
    %c0_59 = arith.constant 0 : index
    %c0_60 = arith.constant 0 : index
    %159 = vector.load %arg12[%c0_59, %c0_60] : memref<1x32xf32, #tpu.memory_space<vmem>>, vector<1x32xf32>
    %c0_61 = arith.constant 0 : index
    %c0_62 = arith.constant 0 : index
    %160 = vector.load %arg13[%c0_61, %c0_62] : memref<1x32xf32, #tpu.memory_space<vmem>>, vector<1x32xf32>
    %cst_63 = arith.constant dense<0.000000e+00> : vector<16xf32>
    %161 = vector.multi_reduction <add>, %158, %cst_63 [1] : vector<16x32xf32> to vector<16xf32>
    %162 = vector.shape_cast %161 : vector<16xf32> to vector<16x1xf32>
    %cst_64 = arith.constant 3.200000e+01 : f32
    %163 = vector.broadcast %cst_64 : f32 to vector<16x1xf32>
    %164 = arith.divf %162, %163 : vector<16x1xf32>
    %165 = arith.mulf %158, %158 : vector<16x32xf32>
    %cst_65 = arith.constant dense<0.000000e+00> : vector<16xf32>
    %166 = vector.multi_reduction <add>, %165, %cst_65 [1] : vector<16x32xf32> to vector<16xf32>
    %167 = vector.shape_cast %166 : vector<16xf32> to vector<16x1xf32>
    %cst_66 = arith.constant 3.200000e+01 : f32
    %168 = vector.broadcast %cst_66 : f32 to vector<16x1xf32>
    %169 = arith.divf %167, %168 : vector<16x1xf32>
    %170 = arith.mulf %164, %164 : vector<16x1xf32>
    %171 = arith.subf %169, %170 : vector<16x1xf32>
    %cst_67 = arith.constant 0.000000e+00 : f32
    %172 = vector.broadcast %cst_67 : f32 to vector<16x1xf32>
    %173 = arith.maximumf %171, %172 : vector<16x1xf32>
    %174 = vector.broadcast %164 : vector<16x1xf32> to vector<16x32xf32>
    %175 = arith.subf %158, %174 : vector<16x32xf32>
    %cst_68 = arith.constant 9.99999974E-6 : f32
    %176 = vector.broadcast %cst_68 : f32 to vector<16x1xf32>
    %177 = arith.addf %173, %176 : vector<16x1xf32>
    %178 = math.rsqrt %177 : vector<16x1xf32>
    %179 = vector.broadcast %178 : vector<16x1xf32> to vector<16x32xf32>
    %180 = arith.mulf %175, %179 : vector<16x32xf32>
    %181 = vector.broadcast %159 : vector<1x32xf32> to vector<16x32xf32>
    %182 = arith.mulf %180, %181 : vector<16x32xf32>
    %183 = vector.broadcast %160 : vector<1x32xf32> to vector<16x32xf32>
    %184 = arith.addf %182, %183 : vector<16x32xf32>
    %185 = vector.shape_cast %184 : vector<16x32xf32> to vector<2x8x32xf32>
    %186 = arith.truncf %185 : vector<2x8x32xf32> to vector<2x8x32xbf16>
    %c0_69 = arith.constant 0 : index
    %c0_70 = arith.constant 0 : index
    %c0_71 = arith.constant 0 : index
    %187 = vector.load %arg14[%c0_69, %c0_70, %c0_71] : memref<2x8x32xbf16, #tpu.memory_space<vmem>>, vector<2x8x32xbf16>
    tpu.vector_store %arg14[%c0_69, %c0_70, %c0_71], %186 {strides = array<i32>} : memref<2x8x32xbf16, #tpu.memory_space<vmem>>, vector<2x8x32xbf16>,
    return
  }
  func.func @transform_0(%arg0: i32) -> (i32, i32, i32) {
    %c0_i32 = arith.constant 0 : i32
    %c0_i32_0 = arith.constant 0 : i32
    %c0_i32_1 = arith.constant 0 : i32
    return %arg0, %c0_i32, %c0_i32_0 : i32, i32, i32
  }
  func.func @transform_1(%arg0: i32) -> (i32, i32) {
    %c0_i32 = arith.constant 0 : i32
    %c0_i32_0 = arith.constant 0 : i32
    %c0_i32_1 = arith.constant 0 : i32
    return %c0_i32, %c0_i32_0 : i32, i32
  }
  func.func @transform_2(%arg0: i32) -> (i32, i32) {
    %c0_i32 = arith.constant 0 : i32
    %c0_i32_0 = arith.constant 0 : i32
    %c0_i32_1 = arith.constant 0 : i32
    return %c0_i32, %c0_i32_0 : i32, i32
  }
  func.func @transform_3(%arg0: i32) -> (i32, i32) {
    %c0_i32 = arith.constant 0 : i32
    %c0_i32_0 = arith.constant 0 : i32
    %c0_i32_1 = arith.constant 0 : i32
    return %c0_i32, %c0_i32_0 : i32, i32
  }
  func.func @transform_4(%arg0: i32) -> (i32, i32) {
    %c0_i32 = arith.constant 0 : i32
    %c0_i32_0 = arith.constant 0 : i32
    %c0_i32_1 = arith.constant 0 : i32
    return %c0_i32, %c0_i32_0 : i32, i32
  }
  func.func @transform_5(%arg0: i32) -> (i32, i32) {
    %c0_i32 = arith.constant 0 : i32
    %c0_i32_0 = arith.constant 0 : i32
    %c0_i32_1 = arith.constant 0 : i32
    return %c0_i32, %c0_i32_0 : i32, i32
  }
  func.func @transform_6(%arg0: i32) -> (i32, i32) {
    %c0_i32 = arith.constant 0 : i32
    %c0_i32_0 = arith.constant 0 : i32
    %c0_i32_1 = arith.constant 0 : i32
    return %c0_i32, %c0_i32_0 : i32, i32
  }
  func.func @transform_7(%arg0: i32) -> (i32, i32) {
    %c0_i32 = arith.constant 0 : i32
    %c0_i32_0 = arith.constant 0 : i32
    %c0_i32_1 = arith.constant 0 : i32
    return %c0_i32, %c0_i32_0 : i32, i32
  }
  func.func @transform_8(%arg0: i32) -> (i32, i32) {
    %c0_i32 = arith.constant 0 : i32
    %c0_i32_0 = arith.constant 0 : i32
    %c0_i32_1 = arith.constant 0 : i32
    return %c0_i32, %c0_i32_0 : i32, i32
  }
  func.func @transform_9(%arg0: i32) -> (i32, i32) {
    %c0_i32 = arith.constant 0 : i32
    %c0_i32_0 = arith.constant 0 : i32
    %c0_i32_1 = arith.constant 0 : i32
    return %c0_i32, %c0_i32_0 : i32, i32
  }
  func.func @transform_10(%arg0: i32) -> (i32, i32) {
    %c0_i32 = arith.constant 0 : i32
    %c0_i32_0 = arith.constant 0 : i32
    %c0_i32_1 = arith.constant 0 : i32
    return %c0_i32, %c0_i32_0 : i32, i32
  }
  func.func @transform_11(%arg0: i32) -> (i32, i32) {
    %c0_i32 = arith.constant 0 : i32
    %c0_i32_0 = arith.constant 0 : i32
    %c0_i32_1 = arith.constant 0 : i32
    return %c0_i32, %c0_i32_0 : i32, i32
  }
  func.func @transform_12(%arg0: i32) -> (i32, i32) {
    %c0_i32 = arith.constant 0 : i32
    %c0_i32_0 = arith.constant 0 : i32
    %c0_i32_1 = arith.constant 0 : i32
    return %c0_i32, %c0_i32_0 : i32, i32
  }
  func.func @transform_13(%arg0: i32) -> (i32, i32, i32) {
    %c0_i32 = arith.constant 0 : i32
    %c0_i32_0 = arith.constant 0 : i32
    %c0_i32_1 = arith.constant 0 : i32
    return %arg0, %c0_i32, %c0_i32_0 : i32, i32, i32
  }
}

module attributes {stable_mosaic.version = 11 : i64} {
  func.func @encoder_block_kernel(%arg0: i32, %arg1: memref<2x8x32xbf16, #tpu.memory_space<vmem>>, %arg2: memref<32x96xbf16, #tpu.memory_space<vmem>>, %arg3: memref<1x96xf32, #tpu.memory_space<vmem>>, %arg4: memref<32x32xbf16, #tpu.memory_space<vmem>>, %arg5: memref<1x32xf32, #tpu.memory_space<vmem>>, %arg6: memref<1x32xf32, #tpu.memory_space<vmem>>, %arg7: memref<1x32xf32, #tpu.memory_space<vmem>>, %arg8: memref<32x64xbf16, #tpu.memory_space<vmem>>, %arg9: memref<1x64xf32, #tpu.memory_space<vmem>>, %arg10: memref<64x32xbf16, #tpu.memory_space<vmem>>, %arg11: memref<1x32xf32, #tpu.memory_space<vmem>>, %arg12: memref<1x32xf32, #tpu.memory_space<vmem>>, %arg13: memref<1x32xf32, #tpu.memory_space<vmem>>, %arg14: memref<2x8x32xbf16, #tpu.memory_space<vmem>>) attributes {dimension_semantics = [#tpu.dimension_semantics<parallel>], iteration_bounds = array<i64: 1>, scalar_prefetch = 0 : i64, scratch_operands = 0 : i64, tpu.core_type = #tpu.core_type<tc>, window_params = [{transform_indices = @transform_0, window_bounds = array<i64: 2, 8, 32>}, {pipeline_mode = #tpu.pipeline_mode<synchronous>, transform_indices = @transform_1, window_bounds = array<i64: 32, 96>}, {pipeline_mode = #tpu.pipeline_mode<synchronous>, transform_indices = @transform_2, window_bounds = array<i64: 1, 96>}, {pipeline_mode = #tpu.pipeline_mode<synchronous>, transform_indices = @transform_3, window_bounds = array<i64: 32, 32>}, {pipeline_mode = #tpu.pipeline_mode<synchronous>, transform_indices = @transform_4, window_bounds = array<i64: 1, 32>}, {pipeline_mode = #tpu.pipeline_mode<synchronous>, transform_indices = @transform_5, window_bounds = array<i64: 1, 32>}, {pipeline_mode = #tpu.pipeline_mode<synchronous>, transform_indices = @transform_6, window_bounds = array<i64: 1, 32>}, {pipeline_mode = #tpu.pipeline_mode<synchronous>, transform_indices = @transform_7, window_bounds = array<i64: 32, 64>}, {pipeline_mode = #tpu.pipeline_mode<synchronous>, transform_indices = @transform_8, window_bounds = array<i64: 1, 64>}, {pipeline_mode = #tpu.pipeline_mode<synchronous>, transform_indices = @transform_9, window_bounds = array<i64: 64, 32>}, {pipeline_mode = #tpu.pipeline_mode<synchronous>, transform_indices = @transform_10, window_bounds = array<i64: 1, 32>}, {pipeline_mode = #tpu.pipeline_mode<synchronous>, transform_indices = @transform_11, window_bounds = array<i64: 1, 32>}, {pipeline_mode = #tpu.pipeline_mode<synchronous>, transform_indices = @transform_12, window_bounds = array<i64: 1, 32>}, {transform_indices = @transform_13, window_bounds = array<i64: 2, 8, 32>}]} {
    %c0 = arith.constant 0 : index
    %c0_0 = arith.constant 0 : index
    %c0_1 = arith.constant 0 : index
    %0 = vector.load %arg1[%c0, %c0_0, %c0_1] : memref<2x8x32xbf16, #tpu.memory_space<vmem>>, vector<2x8x32xbf16>
    %1 = vector.shape_cast %0 : vector<2x8x32xbf16> to vector<16x32xbf16>
    %2 = arith.extf %1 : vector<16x32xbf16> to vector<16x32xf32>
    %c0_2 = arith.constant 0 : index
    %c0_3 = arith.constant 0 : index
    %3 = vector.load %arg2[%c0_2, %c0_3] : memref<32x96xbf16, #tpu.memory_space<vmem>>, vector<32x96xbf16>
    %cst = arith.constant dense<0.000000e+00> : vector<16x96xf32>
    %4 = tpu.matmul %1, %3, %cst {dimension_numbers = #tpu.dot_dimension_numbers<[1], [0], [0], [1], [0, 0, 1, 1], [], []>} : vector<16x32xbf16>, vector<32x96xbf16>, vector<16x96xf32> -> vector<16x96xf32>
    %c0_4 = arith.constant 0 : index
    %c0_5 = arith.constant 0 : index
    %5 = vector.load %arg3[%c0_4, %c0_5] : memref<1x96xf32, #tpu.memory_space<vmem>>, vector<1x96xf32>
    %6 = vector.broadcast %5 : vector<1x96xf32> to vector<16x96xf32>
    %7 = arith.addf %4, %6 : vector<16x96xf32>
    %8 = arith.truncf %7 : vector<16x96xf32> to vector<16x96xbf16>
    %cst_6 = arith.constant 0.000000e+00 : f32
    %9 = vector.broadcast %cst_6 : f32 to vector<16x32xf32>
    %10 = vector.extract_strided_slice %8 {offsets = [0, 0], sizes = [16, 8], strides = [1, 1]} : vector<16x96xbf16> to vector<16x8xbf16>
    %cst_7 = arith.constant 3.535160e-01 : bf16
    %11 = vector.broadcast %cst_7 : bf16 to vector<16x8xbf16>
    %12 = arith.mulf %10, %11 : vector<16x8xbf16>
    %13 = vector.shape_cast %12 : vector<16x8xbf16> to vector<2x8x8xbf16>
    %14 = vector.extract_strided_slice %8 {offsets = [0, 32], sizes = [16, 8], strides = [1, 1]} : vector<16x96xbf16> to vector<16x8xbf16>
    %15 = vector.shape_cast %14 : vector<16x8xbf16> to vector<2x8x8xbf16>
    %16 = vector.extract_strided_slice %8 {offsets = [0, 64], sizes = [16, 8], strides = [1, 1]} : vector<16x96xbf16> to vector<16x8xbf16>
    %17 = vector.shape_cast %16 : vector<16x8xbf16> to vector<2x8x8xbf16>
    "tpu.trace_start"() <{level = 10 : i32, message = "bqd,bkd->bqk"}> : () -> ()
    %cst_8 = arith.constant dense<0.000000e+00> : vector<2x8x8xf32>
    %18 = tpu.matmul %13, %15, %cst_8 {dimension_numbers = #tpu.dot_dimension_numbers<[2], [2], [1], [1], [0, 0, 0, 1, 1, 1], [0], [0]>} : vector<2x8x8xbf16>, vector<2x8x8xbf16>, vector<2x8x8xf32> -> vector<2x8x8xf32>
    "tpu.trace_stop"() : () -> ()
    %cst_9 = arith.constant dense<0xFF800000> : vector<2x8xf32>
    %19 = vector.multi_reduction <maximumf>, %18, %cst_9 [2] : vector<2x8x8xf32> to vector<2x8xf32>
    %20 = vector.shape_cast %19 : vector<2x8xf32> to vector<2x8x1xf32>
    %21 = vector.broadcast %20 : vector<2x8x1xf32> to vector<2x8x8xf32>
    %22 = arith.subf %18, %21 : vector<2x8x8xf32>
    %23 = math.exp %22 : vector<2x8x8xf32>
    %cst_10 = arith.constant dense<0.000000e+00> : vector<2x8xf32>
    %24 = vector.multi_reduction <add>, %23, %cst_10 [2] : vector<2x8x8xf32> to vector<2x8xf32>
    %25 = vector.shape_cast %24 : vector<2x8xf32> to vector<2x8x1xf32>
    %26 = tpu.reciprocal %25 {approx = true} : vector<2x8x1xf32> -> vector<2x8x1xf32>
    %27 = vector.broadcast %26 : vector<2x8x1xf32> to vector<2x8x8xf32>
    %28 = arith.mulf %23, %27 : vector<2x8x8xf32>
    %29 = arith.truncf %28 : vector<2x8x8xf32> to vector<2x8x8xbf16>
    "tpu.trace_start"() <{level = 10 : i32, message = "bqk,bkd->bqd"}> : () -> ()
    %cst_11 = arith.constant dense<0.000000e+00> : vector<2x8x8xf32>
    %30 = tpu.matmul %29, %17, %cst_11 {dimension_numbers = #tpu.dot_dimension_numbers<[2], [1], [1], [2], [0, 0, 0, 1, 1, 2], [0], [0]>} : vector<2x8x8xbf16>, vector<2x8x8xbf16>, vector<2x8x8xf32> -> vector<2x8x8xf32>
    "tpu.trace_stop"() : () -> ()
    %31 = vector.shape_cast %30 : vector<2x8x8xf32> to vector<16x8xf32>
    %32 = arith.truncf %31 : vector<16x8xf32> to vector<16x8xbf16>
    %c0_12 = arith.constant 0 : index
    %c0_13 = arith.constant 0 : index
    %33 = vector.load %arg4[%c0_12, %c0_13] : memref<32x32xbf16, #tpu.memory_space<vmem>>, vector<8x32xbf16>
    %cst_14 = arith.constant dense<0.000000e+00> : vector<16x32xf32>
    %34 = tpu.matmul %32, %33, %cst_14 {dimension_numbers = #tpu.dot_dimension_numbers<[1], [0], [0], [1], [0, 0, 1, 1], [], []>} : vector<16x8xbf16>, vector<8x32xbf16>, vector<16x32xf32> -> vector<16x32xf32>
    %35 = arith.addf %9, %34 : vector<16x32xf32>
    %36 = vector.extract_strided_slice %8 {offsets = [0, 8], sizes = [16, 8], strides = [1, 1]} : vector<16x96xbf16> to vector<16x8xbf16>
    %cst_15 = arith.constant 3.535160e-01 : bf16
    %37 = vector.broadcast %cst_15 : bf16 to vector<16x8xbf16>
    %38 = arith.mulf %36, %37 : vector<16x8xbf16>
    %39 = vector.shape_cast %38 : vector<16x8xbf16> to vector<2x8x8xbf16>
    %40 = vector.extract_strided_slice %8 {offsets = [0, 40], sizes = [16, 8], strides = [1, 1]} : vector<16x96xbf16> to vector<16x8xbf16>
    %41 = vector.shape_cast %40 : vector<16x8xbf16> to vector<2x8x8xbf16>
    %42 = vector.extract_strided_slice %8 {offsets = [0, 72], sizes = [16, 8], strides = [1, 1]} : vector<16x96xbf16> to vector<16x8xbf16>
    %43 = vector.shape_cast %42 : vector<16x8xbf16> to vector<2x8x8xbf16>
    "tpu.trace_start"() <{level = 10 : i32, message = "bqd,bkd->bqk"}> : () -> ()
    %cst_16 = arith.constant dense<0.000000e+00> : vector<2x8x8xf32>
    %44 = tpu.matmul %39, %41, %cst_16 {dimension_numbers = #tpu.dot_dimension_numbers<[2], [2], [1], [1], [0, 0, 0, 1, 1, 1], [0], [0]>} : vector<2x8x8xbf16>, vector<2x8x8xbf16>, vector<2x8x8xf32> -> vector<2x8x8xf32>
    "tpu.trace_stop"() : () -> ()
    %cst_17 = arith.constant dense<0xFF800000> : vector<2x8xf32>
    %45 = vector.multi_reduction <maximumf>, %44, %cst_17 [2] : vector<2x8x8xf32> to vector<2x8xf32>
    %46 = vector.shape_cast %45 : vector<2x8xf32> to vector<2x8x1xf32>
    %47 = vector.broadcast %46 : vector<2x8x1xf32> to vector<2x8x8xf32>
    %48 = arith.subf %44, %47 : vector<2x8x8xf32>
    %49 = math.exp %48 : vector<2x8x8xf32>
    %cst_18 = arith.constant dense<0.000000e+00> : vector<2x8xf32>
    %50 = vector.multi_reduction <add>, %49, %cst_18 [2] : vector<2x8x8xf32> to vector<2x8xf32>
    %51 = vector.shape_cast %50 : vector<2x8xf32> to vector<2x8x1xf32>
    %52 = tpu.reciprocal %51 {approx = true} : vector<2x8x1xf32> -> vector<2x8x1xf32>
    %53 = vector.broadcast %52 : vector<2x8x1xf32> to vector<2x8x8xf32>
    %54 = arith.mulf %49, %53 : vector<2x8x8xf32>
    %55 = arith.truncf %54 : vector<2x8x8xf32> to vector<2x8x8xbf16>
    "tpu.trace_start"() <{level = 10 : i32, message = "bqk,bkd->bqd"}> : () -> ()
    %cst_19 = arith.constant dense<0.000000e+00> : vector<2x8x8xf32>
    %56 = tpu.matmul %55, %43, %cst_19 {dimension_numbers = #tpu.dot_dimension_numbers<[2], [1], [1], [2], [0, 0, 0, 1, 1, 2], [0], [0]>} : vector<2x8x8xbf16>, vector<2x8x8xbf16>, vector<2x8x8xf32> -> vector<2x8x8xf32>
    "tpu.trace_stop"() : () -> ()
    %57 = vector.shape_cast %56 : vector<2x8x8xf32> to vector<16x8xf32>
    %58 = arith.truncf %57 : vector<16x8xf32> to vector<16x8xbf16>
    %c8 = arith.constant 8 : index
    %c0_20 = arith.constant 0 : index
    %59 = vector.load %arg4[%c8, %c0_20] : memref<32x32xbf16, #tpu.memory_space<vmem>>, vector<8x32xbf16>
    %cst_21 = arith.constant dense<0.000000e+00> : vector<16x32xf32>
    %60 = tpu.matmul %58, %59, %cst_21 {dimension_numbers = #tpu.dot_dimension_numbers<[1], [0], [0], [1], [0, 0, 1, 1], [], []>} : vector<16x8xbf16>, vector<8x32xbf16>, vector<16x32xf32> -> vector<16x32xf32>
    %61 = arith.addf %35, %60 : vector<16x32xf32>
    %62 = vector.extract_strided_slice %8 {offsets = [0, 16], sizes = [16, 8], strides = [1, 1]} : vector<16x96xbf16> to vector<16x8xbf16>
    %cst_22 = arith.constant 3.535160e-01 : bf16
    %63 = vector.broadcast %cst_22 : bf16 to vector<16x8xbf16>
    %64 = arith.mulf %62, %63 : vector<16x8xbf16>
    %65 = vector.shape_cast %64 : vector<16x8xbf16> to vector<2x8x8xbf16>
    %66 = vector.extract_strided_slice %8 {offsets = [0, 48], sizes = [16, 8], strides = [1, 1]} : vector<16x96xbf16> to vector<16x8xbf16>
    %67 = vector.shape_cast %66 : vector<16x8xbf16> to vector<2x8x8xbf16>
    %68 = vector.extract_strided_slice %8 {offsets = [0, 80], sizes = [16, 8], strides = [1, 1]} : vector<16x96xbf16> to vector<16x8xbf16>
    %69 = vector.shape_cast %68 : vector<16x8xbf16> to vector<2x8x8xbf16>
    "tpu.trace_start"() <{level = 10 : i32, message = "bqd,bkd->bqk"}> : () -> ()
    %cst_23 = arith.constant dense<0.000000e+00> : vector<2x8x8xf32>
    %70 = tpu.matmul %65, %67, %cst_23 {dimension_numbers = #tpu.dot_dimension_numbers<[2], [2], [1], [1], [0, 0, 0, 1, 1, 1], [0], [0]>} : vector<2x8x8xbf16>, vector<2x8x8xbf16>, vector<2x8x8xf32> -> vector<2x8x8xf32>
    "tpu.trace_stop"() : () -> ()
    %cst_24 = arith.constant dense<0xFF800000> : vector<2x8xf32>
    %71 = vector.multi_reduction <maximumf>, %70, %cst_24 [2] : vector<2x8x8xf32> to vector<2x8xf32>
    %72 = vector.shape_cast %71 : vector<2x8xf32> to vector<2x8x1xf32>
    %73 = vector.broadcast %72 : vector<2x8x1xf32> to vector<2x8x8xf32>
    %74 = arith.subf %70, %73 : vector<2x8x8xf32>
    %75 = math.exp %74 : vector<2x8x8xf32>
    %cst_25 = arith.constant dense<0.000000e+00> : vector<2x8xf32>
    %76 = vector.multi_reduction <add>, %75, %cst_25 [2] : vector<2x8x8xf32> to vector<2x8xf32>
    %77 = vector.shape_cast %76 : vector<2x8xf32> to vector<2x8x1xf32>
    %78 = tpu.reciprocal %77 {approx = true} : vector<2x8x1xf32> -> vector<2x8x1xf32>
    %79 = vector.broadcast %78 : vector<2x8x1xf32> to vector<2x8x8xf32>
    %80 = arith.mulf %75, %79 : vector<2x8x8xf32>
    %81 = arith.truncf %80 : vector<2x8x8xf32> to vector<2x8x8xbf16>
    "tpu.trace_start"() <{level = 10 : i32, message = "bqk,bkd->bqd"}> : () -> ()
    %cst_26 = arith.constant dense<0.000000e+00> : vector<2x8x8xf32>
    %82 = tpu.matmul %81, %69, %cst_26 {dimension_numbers = #tpu.dot_dimension_numbers<[2], [1], [1], [2], [0, 0, 0, 1, 1, 2], [0], [0]>} : vector<2x8x8xbf16>, vector<2x8x8xbf16>, vector<2x8x8xf32> -> vector<2x8x8xf32>
    "tpu.trace_stop"() : () -> ()
    %83 = vector.shape_cast %82 : vector<2x8x8xf32> to vector<16x8xf32>
    %84 = arith.truncf %83 : vector<16x8xf32> to vector<16x8xbf16>
    %c16 = arith.constant 16 : index
    %c0_27 = arith.constant 0 : index
    %85 = vector.load %arg4[%c16, %c0_27] : memref<32x32xbf16, #tpu.memory_space<vmem>>, vector<8x32xbf16>
    %cst_28 = arith.constant dense<0.000000e+00> : vector<16x32xf32>
    %86 = tpu.matmul %84, %85, %cst_28 {dimension_numbers = #tpu.dot_dimension_numbers<[1], [0], [0], [1], [0, 0, 1, 1], [], []>} : vector<16x8xbf16>, vector<8x32xbf16>, vector<16x32xf32> -> vector<16x32xf32>
    %87 = arith.addf %61, %86 : vector<16x32xf32>
    %88 = vector.extract_strided_slice %8 {offsets = [0, 24], sizes = [16, 8], strides = [1, 1]} : vector<16x96xbf16> to vector<16x8xbf16>
    %cst_29 = arith.constant 3.535160e-01 : bf16
    %89 = vector.broadcast %cst_29 : bf16 to vector<16x8xbf16>
    %90 = arith.mulf %88, %89 : vector<16x8xbf16>
    %91 = vector.shape_cast %90 : vector<16x8xbf16> to vector<2x8x8xbf16>
    %92 = vector.extract_strided_slice %8 {offsets = [0, 56], sizes = [16, 8], strides = [1, 1]} : vector<16x96xbf16> to vector<16x8xbf16>
    %93 = vector.shape_cast %92 : vector<16x8xbf16> to vector<2x8x8xbf16>
    %94 = vector.extract_strided_slice %8 {offsets = [0, 88], sizes = [16, 8], strides = [1, 1]} : vector<16x96xbf16> to vector<16x8xbf16>
    %95 = vector.shape_cast %94 : vector<16x8xbf16> to vector<2x8x8xbf16>
    "tpu.trace_start"() <{level = 10 : i32, message = "bqd,bkd->bqk"}> : () -> ()
    %cst_30 = arith.constant dense<0.000000e+00> : vector<2x8x8xf32>
    %96 = tpu.matmul %91, %93, %cst_30 {dimension_numbers = #tpu.dot_dimension_numbers<[2], [2], [1], [1], [0, 0, 0, 1, 1, 1], [0], [0]>} : vector<2x8x8xbf16>, vector<2x8x8xbf16>, vector<2x8x8xf32> -> vector<2x8x8xf32>
    "tpu.trace_stop"() : () -> ()
    %cst_31 = arith.constant dense<0xFF800000> : vector<2x8xf32>
    %97 = vector.multi_reduction <maximumf>, %96, %cst_31 [2] : vector<2x8x8xf32> to vector<2x8xf32>
    %98 = vector.shape_cast %97 : vector<2x8xf32> to vector<2x8x1xf32>
    %99 = vector.broadcast %98 : vector<2x8x1xf32> to vector<2x8x8xf32>
    %100 = arith.subf %96, %99 : vector<2x8x8xf32>
    %101 = math.exp %100 : vector<2x8x8xf32>
    %cst_32 = arith.constant dense<0.000000e+00> : vector<2x8xf32>
    %102 = vector.multi_reduction <add>, %101, %cst_32 [2] : vector<2x8x8xf32> to vector<2x8xf32>
    %103 = vector.shape_cast %102 : vector<2x8xf32> to vector<2x8x1xf32>
    %104 = tpu.reciprocal %103 {approx = true} : vector<2x8x1xf32> -> vector<2x8x1xf32>
    %105 = vector.broadcast %104 : vector<2x8x1xf32> to vector<2x8x8xf32>
    %106 = arith.mulf %101, %105 : vector<2x8x8xf32>
    %107 = arith.truncf %106 : vector<2x8x8xf32> to vector<2x8x8xbf16>
    "tpu.trace_start"() <{level = 10 : i32, message = "bqk,bkd->bqd"}> : () -> ()
    %cst_33 = arith.constant dense<0.000000e+00> : vector<2x8x8xf32>
    %108 = tpu.matmul %107, %95, %cst_33 {dimension_numbers = #tpu.dot_dimension_numbers<[2], [1], [1], [2], [0, 0, 0, 1, 1, 2], [0], [0]>} : vector<2x8x8xbf16>, vector<2x8x8xbf16>, vector<2x8x8xf32> -> vector<2x8x8xf32>
    "tpu.trace_stop"() : () -> ()
    %109 = vector.shape_cast %108 : vector<2x8x8xf32> to vector<16x8xf32>
    %110 = arith.truncf %109 : vector<16x8xf32> to vector<16x8xbf16>
    %c24 = arith.constant 24 : index
    %c0_34 = arith.constant 0 : index
    %111 = vector.load %arg4[%c24, %c0_34] : memref<32x32xbf16, #tpu.memory_space<vmem>>, vector<8x32xbf16>
    %cst_35 = arith.constant dense<0.000000e+00> : vector<16x32xf32>
    %112 = tpu.matmul %110, %111, %cst_35 {dimension_numbers = #tpu.dot_dimension_numbers<[1], [0], [0], [1], [0, 0, 1, 1], [], []>} : vector<16x8xbf16>, vector<8x32xbf16>, vector<16x32xf32> -> vector<16x32xf32>
    %113 = arith.addf %87, %112 : vector<16x32xf32>
    %c0_36 = arith.constant 0 : index
    %c0_37 = arith.constant 0 : index
    %114 = vector.load %arg5[%c0_36, %c0_37] : memref<1x32xf32, #tpu.memory_space<vmem>>, vector<1x32xf32>
    %115 = vector.broadcast %114 : vector<1x32xf32> to vector<16x32xf32>
    %116 = arith.addf %113, %115 : vector<16x32xf32>
    %117 = arith.addf %2, %116 : vector<16x32xf32>
    %c0_38 = arith.constant 0 : index
    %c0_39 = arith.constant 0 : index
    %118 = vector.load %arg6[%c0_38, %c0_39] : memref<1x32xf32, #tpu.memory_space<vmem>>, vector<1x32xf32>
    %c0_40 = arith.constant 0 : index
    %c0_41 = arith.constant 0 : index
    %119 = vector.load %arg7[%c0_40, %c0_41] : memref<1x32xf32, #tpu.memory_space<vmem>>, vector<1x32xf32>
    %cst_42 = arith.constant dense<0.000000e+00> : vector<16xf32>
    %120 = vector.multi_reduction <add>, %117, %cst_42 [1] : vector<16x32xf32> to vector<16xf32>
    %121 = vector.shape_cast %120 : vector<16xf32> to vector<16x1xf32>
    %cst_43 = arith.constant 3.200000e+01 : f32
    %122 = vector.broadcast %cst_43 : f32 to vector<16x1xf32>
    %123 = arith.divf %121, %122 : vector<16x1xf32>
    %124 = arith.mulf %117, %117 : vector<16x32xf32>
    %cst_44 = arith.constant dense<0.000000e+00> : vector<16xf32>
    %125 = vector.multi_reduction <add>, %124, %cst_44 [1] : vector<16x32xf32> to vector<16xf32>
    %126 = vector.shape_cast %125 : vector<16xf32> to vector<16x1xf32>
    %cst_45 = arith.constant 3.200000e+01 : f32
    %127 = vector.broadcast %cst_45 : f32 to vector<16x1xf32>
    %128 = arith.divf %126, %127 : vector<16x1xf32>
    %129 = arith.mulf %123, %123 : vector<16x1xf32>
    %130 = arith.subf %128, %129 : vector<16x1xf32>
    %cst_46 = arith.constant 0.000000e+00 : f32
    %131 = vector.broadcast %cst_46 : f32 to vector<16x1xf32>
    %132 = arith.maximumf %130, %131 : vector<16x1xf32>
    %133 = vector.broadcast %123 : vector<16x1xf32> to vector<16x32xf32>
    %134 = arith.subf %117, %133 : vector<16x32xf32>
    %cst_47 = arith.constant 9.99999974E-6 : f32
    %135 = vector.broadcast %cst_47 : f32 to vector<16x1xf32>
    %136 = arith.addf %132, %135 : vector<16x1xf32>
    %137 = math.rsqrt %136 : vector<16x1xf32>
    %138 = vector.broadcast %137 : vector<16x1xf32> to vector<16x32xf32>
    %139 = arith.mulf %134, %138 : vector<16x32xf32>
    %140 = vector.broadcast %118 : vector<1x32xf32> to vector<16x32xf32>
    %141 = arith.mulf %139, %140 : vector<16x32xf32>
    %142 = vector.broadcast %119 : vector<1x32xf32> to vector<16x32xf32>
    %143 = arith.addf %141, %142 : vector<16x32xf32>
    %144 = arith.truncf %143 : vector<16x32xf32> to vector<16x32xbf16>
    %c0_48 = arith.constant 0 : index
    %c0_49 = arith.constant 0 : index
    %145 = vector.load %arg8[%c0_48, %c0_49] : memref<32x64xbf16, #tpu.memory_space<vmem>>, vector<32x64xbf16>
    %cst_50 = arith.constant dense<0.000000e+00> : vector<16x64xf32>
    %146 = tpu.matmul %144, %145, %cst_50 {dimension_numbers = #tpu.dot_dimension_numbers<[1], [0], [0], [1], [0, 0, 1, 1], [], []>} : vector<16x32xbf16>, vector<32x64xbf16>, vector<16x64xf32> -> vector<16x64xf32>
    %c0_51 = arith.constant 0 : index
    %c0_52 = arith.constant 0 : index
    %147 = vector.load %arg9[%c0_51, %c0_52] : memref<1x64xf32, #tpu.memory_space<vmem>>, vector<1x64xf32>
    %148 = vector.broadcast %147 : vector<1x64xf32> to vector<16x64xf32>
    %149 = arith.addf %146, %148 : vector<16x64xf32>
    %cst_53 = arith.constant 0.000000e+00 : f32
    %150 = vector.broadcast %cst_53 : f32 to vector<16x64xf32>
    %151 = arith.maximumf %149, %150 : vector<16x64xf32>
    %152 = arith.truncf %151 : vector<16x64xf32> to vector<16x64xbf16>
    %c0_54 = arith.constant 0 : index
    %c0_55 = arith.constant 0 : index
    %153 = vector.load %arg10[%c0_54, %c0_55] : memref<64x32xbf16, #tpu.memory_space<vmem>>, vector<64x32xbf16>
    %cst_56 = arith.constant dense<0.000000e+00> : vector<16x32xf32>
    %154 = tpu.matmul %152, %153, %cst_56 {dimension_numbers = #tpu.dot_dimension_numbers<[1], [0], [0], [1], [0, 0, 1, 1], [], []>} : vector<16x64xbf16>, vector<64x32xbf16>, vector<16x32xf32> -> vector<16x32xf32>
    %c0_57 = arith.constant 0 : index
    %c0_58 = arith.constant 0 : index
    %155 = vector.load %arg11[%c0_57, %c0_58] : memref<1x32xf32, #tpu.memory_space<vmem>>, vector<1x32xf32>
    %156 = vector.broadcast %155 : vector<1x32xf32> to vector<16x32xf32>
    %157 = arith.addf %154, %156 : vector<16x32xf32>
    %158 = arith.addf %143, %157 : vector<16x32xf32>
    %c0_59 = arith.constant 0 : index
    %c0_60 = arith.constant 0 : index
    %159 = vector.load %arg12[%c0_59, %c0_60] : memref<1x32xf32, #tpu.memory_space<vmem>>, vector<1x32xf32>
    %c0_61 = arith.constant 0 : index
    %c0_62 = arith.constant 0 : index
    %160 = vector.load %arg13[%c0_61, %c0_62] : memref<1x32xf32, #tpu.memory_space<vmem>>, vector<1x32xf32>
    %cst_63 = arith.constant dense<0.000000e+00> : vector<16xf32>
    %161 = vector.multi_reduction <add>, %158, %cst_63 [1] : vector<16x32xf32> to vector<16xf32>
    %162 = vector.shape_cast %161 : vector<16xf32> to vector<16x1xf32>
    %cst_64 = arith.constant 3.200000e+01 : f32
    %163 = vector.broadcast %cst_64 : f32 to vector<16x1xf32>
    %164 = arith.divf %162, %163 : vector<16x1xf32>
    %165 = arith.mulf %158, %158 : vector<16x32xf32>
    %cst_65 = arith.constant dense<0.000000e+00> : vector<16xf32>
    %166 = vector.multi_reduction <add>, %165, %cst_65 [1] : vector<16x32xf32> to vector<16xf32>
    %167 = vector.shape_cast %166 : vector<16xf32> to vector<16x1xf32>
    %cst_66 = arith.constant 3.200000e+01 : f32
    %168 = vector.broadcast %cst_66 : f32 to vector<16x1xf32>
    %169 = arith.divf %167, %168 : vector<16x1xf32>
    %170 = arith.mulf %164, %164 : vector<16x1xf32>
    %171 = arith.subf %169, %170 : vector<16x1xf32>
    %cst_67 = arith.constant 0.000000e+00 : f32
    %172 = vector.broadcast %cst_67 : f32 to vector<16x1xf32>
    %173 = arith.maximumf %171, %172 : vector<16x1xf32>
    %174 = vector.broadcast %164 : vector<16x1xf32> to vector<16x32xf32>
    %175 = arith.subf %158, %174 : vector<16x32xf32>
    %cst_68 = arith.constant 9.99999974E-6 : f32
    %176 = vector.broadcast %cst_68 : f32 to vector<16x1xf32>
    %177 = arith.addf %173, %176 : vector<16x1xf32>
    %178 = math.rsqrt %177 : vector<16x1xf32>
    %179 = vector.broadcast %178 : vector<16x1xf32> to vector<16x32xf32>
    %180 = arith.mulf %175, %179 : vector<16x32xf32>
    %181 = vector.broadcast %159 : vector<1x32xf32> to vector<16x32xf32>
    %182 = arith.mulf %180, %181 : vector<16x32xf32>
    %183 = vector.broadcast %160 : vector<1x32xf32> to vector<16x32xf32>
    %184 = arith.addf %182, %183 : vector<16x32xf32>
    %185 = vector.shape_cast %184 : vector<16x32xf32> to vector<2x8x32xf32>
    %186 = arith.truncf %185 : vector<2x8x32xf32> to vector<2x8x32xbf16>
    %c0_69 = arith.constant 0 : index
    %c0_70 = arith.constant 0 : index
    %c0_71 = arith.constant 0 : index
    %187 = vector.load %arg14[%c0_69, %c0_70, %c0_71] : memref<2x8x32xbf16, #tpu.memory_space<vmem>>, vector<2x8x32xbf16>
    tpu.vector_store %arg14[%c0_69, %c0_70, %c0_71], %186 {strides = array<i32>} : memref<2x8x32xbf16, #tpu.memory_space<vmem>>, vector<2x8x32xbf16>,
    return
  }
  func.func @transform_0(%arg0: i32) -> (i32, i32, i32) {
    %c0_i32 = arith.constant 0 : i32
    %c0_i32_0 = arith.constant 0 : i32
    %c0_i32_1 = arith.constant 0 : i32
    return %arg0, %c0_i32, %c0_i32_0 : i32, i32, i32
  }
  func.func @transform_1(%arg0: i32) -> (i32, i32) {
    %c0_i32 = arith.constant 0 : i32
    %c0_i32_0 = arith.constant 0 : i32
    %c0_i32_1 = arith.constant 0 : i32
    return %c0_i32, %c0_i32_0 : i32, i32
  }
  func.func @transform_2(%arg0: i32) -> (i32, i32) {
    %c0_i32 = arith.constant 0 : i32
    %c0_i32_0 = arith.constant 0 : i32
    %c0_i32_1 = arith.constant 0 : i32
    return %c0_i32, %c0_i32_0 : i32, i32
  }
  func.func @transform_3(%arg0: i32) -> (i32, i32) {
    %c0_i32 = arith.constant 0 : i32
    %c0_i32_0 = arith.constant 0 : i32
    %c0_i32_1 = arith.constant 0 : i32
    return %c0_i32, %c0_i32_0 : i32, i32
  }
  func.func @transform_4(%arg0: i32) -> (i32, i32) {
    %c0_i32 = arith.constant 0 : i32
    %c0_i32_0 = arith.constant 0 : i32
    %c0_i32_1 = arith.constant 0 : i32
    return %c0_i32, %c0_i32_0 : i32, i32
  }
  func.func @transform_5(%arg0: i32) -> (i32, i32) {
    %c0_i32 = arith.constant 0 : i32
    %c0_i32_0 = arith.constant 0 : i32
    %c0_i32_1 = arith.constant 0 : i32
    return %c0_i32, %c0_i32_0 : i32, i32
  }
  func.func @transform_6(%arg0: i32) -> (i32, i32) {
    %c0_i32 = arith.constant 0 : i32
    %c0_i32_0 = arith.constant 0 : i32
    %c0_i32_1 = arith.constant 0 : i32
    return %c0_i32, %c0_i32_0 : i32, i32
  }
  func.func @transform_7(%arg0: i32) -> (i32, i32) {
    %c0_i32 = arith.constant 0 : i32
    %c0_i32_0 = arith.constant 0 : i32
    %c0_i32_1 = arith.constant 0 : i32
    return %c0_i32, %c0_i32_0 : i32, i32
  }
  func.func @transform_8(%arg0: i32) -> (i32, i32) {
    %c0_i32 = arith.constant 0 : i32
    %c0_i32_0 = arith.constant 0 : i32
    %c0_i32_1 = arith.constant 0 : i32
    return %c0_i32, %c0_i32_0 : i32, i32
  }
  func.func @transform_9(%arg0: i32) -> (i32, i32) {
    %c0_i32 = arith.constant 0 : i32
    %c0_i32_0 = arith.constant 0 : i32
    %c0_i32_1 = arith.constant 0 : i32
    return %c0_i32, %c0_i32_0 : i32, i32
  }
  func.func @transform_10(%arg0: i32) -> (i32, i32) {
    %c0_i32 = arith.constant 0 : i32
    %c0_i32_0 = arith.constant 0 : i32
    %c0_i32_1 = arith.constant 0 : i32
    return %c0_i32, %c0_i32_0 : i32, i32
  }
  func.func @transform_11(%arg0: i32) -> (i32, i32) {
    %c0_i32 = arith.constant 0 : i32
    %c0_i32_0 = arith.constant 0 : i32
    %c0_i32_1 = arith.constant 0 : i32
    return %c0_i32, %c0_i32_0 : i32, i32
  }
  func.func @transform_12(%arg0: i32) -> (i32, i32) {
    %c0_i32 = arith.constant 0 : i32
    %c0_i32_0 = arith.constant 0 : i32
    %c0_i32_1 = arith.constant 0 : i32
    return %c0_i32, %c0_i32_0 : i32, i32
  }
  func.func @transform_13(%arg0: i32) -> (i32, i32, i32) {
    %c0_i32 = arith.constant 0 : i32
    %c0_i32_0 = arith.constant 0 : i32
    %c0_i32_1 = arith.constant 0 : i32
    return %arg0, %c0_i32, %c0_i32_0 : i32, i32, i32
  }
}

</mosaic_0001>

<llo_original>
// kernel: tpu_custom_call.1
$region0: #{tpu_custom_call.1}
  #allocation0 [shape = 'u32[]', space=smem, size = 0x4, offset = 0x4, fixed_abs, tag = 'smem constant byte address 0x4 - core index']
  #allocation1 [shape = 'u32[144,128]{1,0:T(1,128)}', space=vmem, size = 0x12000, scoped, tag = 'internal scratch']
  %s0 = inlined_call_operand.hbm [shape: bf16[2,8,32], index: 0, kind: input, shape index: {}]
  %s1 = inlined_call_operand.vmem [shape: bf16[32,96], index: 1, kind: input, shape index: {}]
  %s2 = inlined_call_operand.vmem [shape: f32[1,96], index: 2, kind: input, shape index: {}]
  %s3 = inlined_call_operand.vmem [shape: bf16[32,32], index: 3, kind: input, shape index: {}]
  %s4 = inlined_call_operand.vmem [shape: f32[1,32], index: 4, kind: input, shape index: {}]
  %s5 = inlined_call_operand.vmem [shape: f32[1,32], index: 5, kind: input, shape index: {}]
  %s6 = inlined_call_operand.vmem [shape: f32[1,32], index: 6, kind: input, shape index: {}]
  %s7 = inlined_call_operand.vmem [shape: bf16[32,64], index: 7, kind: input, shape index: {}]
  %s8 = inlined_call_operand.vmem [shape: f32[1,64], index: 8, kind: input, shape index: {}]
  %s9 = inlined_call_operand.vmem [shape: bf16[64,32], index: 9, kind: input, shape index: {}]
  %s10 = inlined_call_operand.vmem [shape: f32[1,32], index: 10, kind: input, shape index: {}]
  %s11 = inlined_call_operand.vmem [shape: f32[1,32], index: 11, kind: input, shape index: {}]
  %s12 = inlined_call_operand.vmem [shape: f32[1,32], index: 12, kind: input, shape index: {}]
  %s13 = inlined_call_operand.hbm [shape: bf16[2,8,32], index: 13, kind: output, shape index: {}]
  %s14 = sld [smem:[#allocation0]]
  $region66: #{tpu_custom_call.1} parent=0
    _
  %s16 = ssub.s32 1, %s14
  %s17 = scalar_select 0, %s16, %s14
  $region1: #{tpu_custom_call.1} parent=0
    #allocation2 [shape = 'u8[4096]{0}', space=vmem, size = 0x1000, scoped, tag = 'input window, operand 0, single buffered']
    #allocation3 [shape = 's32[1]{0}', space=sflag, size = 0x4, scoped, tag = 'scoped memory for tpu_custom_call.1']
    #allocation4 [shape = 's32[1]{0}', space=sflag, size = 0x4, scoped, tag = 'scoped memory for tpu_custom_call.1']
    #allocation5 [shape = 'u8[4096]{0}', space=vmem, size = 0x1000, scoped, tag = 'output window, operand 0, single buffered']
    %18 = vsyncpa [#allocation3], 0
    %19 = vsyncpa [#allocation4], 0
    // Predicated region
    $region2: #{tpu_custom_call.1} parent=1 // pred_check
      _
    $region3: #{tpu_custom_call.1} parent=1 // pred_check_branch
      %21 = sbr.rel (0) target = $region5
    $region4: #{tpu_custom_call.1} parent=1 // pred_region
      %s23 = ssub.s32 128, 128
      %24 = vsyncadd [#allocation3], %s23
      %s25 = sshll.u32 [#allocation2], 4
      %s26 = int_to_ptr.vmem [resolvable:$true] %s25
      %31 = dma.hbm_to_vmem [thread:$0]  %s0, 128, %s26, [#allocation3], 64, 64, 4
    $region5: #{tpu_custom_call.1} parent=1 // pred_fallthru
      _
    // Predicated region
    $region6: #{tpu_custom_call.1} parent=1 // pred_check
      _
    $region7: #{tpu_custom_call.1} parent=1 // pred_check_branch
      %33 = sbr.rel (0) target = $region9
    $region8: #{tpu_custom_call.1} parent=1 // pred_region
      _
    $region9: #{tpu_custom_call.1} parent=1 // pred_fallthru
      _
    // Predicated region
    $region10: #{tpu_custom_call.1} parent=1 // pred_check
      _
    $region11: #{tpu_custom_call.1} parent=1 // pred_check_branch
      %35 = sbr.rel (0) target = $region13
    $region12: #{tpu_custom_call.1} parent=1 // pred_region
      _
    $region13: #{tpu_custom_call.1} parent=1 // pred_fallthru
      _
    // Predicated region
    $region14: #{tpu_custom_call.1} parent=1 // pred_check
      _
    $region15: #{tpu_custom_call.1} parent=1 // pred_check_branch
      %37 = sbr.rel (0) target = $region17
    $region16: #{tpu_custom_call.1} parent=1 // pred_region
      _
    $region17: #{tpu_custom_call.1} parent=1 // pred_fallthru
      _
    // Predicated region
    $region18: #{tpu_custom_call.1} parent=1 // pred_check
      _
    $region19: #{tpu_custom_call.1} parent=1 // pred_check_branch
      %39 = sbr.rel (0) target = $region21
    $region20: #{tpu_custom_call.1} parent=1 // pred_region
      _
    $region21: #{tpu_custom_call.1} parent=1 // pred_fallthru
      _
    // Predicated region
    $region22: #{tpu_custom_call.1} parent=1 // pred_check
      _
    $region23: #{tpu_custom_call.1} parent=1 // pred_check_branch
      %41 = sbr.rel (0) target = $region25
    $region24: #{tpu_custom_call.1} parent=1 // pred_region
      _
    $region25: #{tpu_custom_call.1} parent=1 // pred_fallthru
      _
    // Predicated region
    $region26: #{tpu_custom_call.1} parent=1 // pred_check
      _
    $region27: #{tpu_custom_call.1} parent=1 // pred_check_branch
      %43 = sbr.rel (0) target = $region29
    $region28: #{tpu_custom_call.1} parent=1 // pred_region
      _
    $region29: #{tpu_custom_call.1} parent=1 // pred_fallthru
      _
    // Predicated region
    $region30: #{tpu_custom_call.1} parent=1 // pred_check
      _
    $region31: #{tpu_custom_call.1} parent=1 // pred_check_branch
      %45 = sbr.rel (0) target = $region33
    $region32: #{tpu_custom_call.1} parent=1 // pred_region
      _
    $region33: #{tpu_custom_call.1} parent=1 // pred_fallthru
      _
    // Predicated region
    $region34: #{tpu_custom_call.1} parent=1 // pred_check
      _
    $region35: #{tpu_custom_call.1} parent=1 // pred_check_branch
      %47 = sbr.rel (0) target = $region37
    $region36: #{tpu_custom_call.1} parent=1 // pred_region
      _
    $region37: #{tpu_custom_call.1} parent=1 // pred_fallthru
      _
    // Predicated region
    $region38: #{tpu_custom_call.1} parent=1 // pred_check
      _
    $region39: #{tpu_custom_call.1} parent=1 // pred_check_branch
      %49 = sbr.rel (0) target = $region41
    $region40: #{tpu_custom_call.1} parent=1 // pred_region
      _
    $region41: #{tpu_custom_call.1} parent=1 // pred_fallthru
      _
    // Predicated region
    $region42: #{tpu_custom_call.1} parent=1 // pred_check
      _
    $region43: #{tpu_custom_call.1} parent=1 // pred_check_branch
      %51 = sbr.rel (0) target = $region45
    $region44: #{tpu_custom_call.1} parent=1 // pred_region
      _
    $region45: #{tpu_custom_call.1} parent=1 // pred_fallthru
      _
    // Predicated region
    $region46: #{tpu_custom_call.1} parent=1 // pred_check
      _
    $region47: #{tpu_custom_call.1} parent=1 // pred_check_branch
      %53 = sbr.rel (0) target = $region49
    $region48: #{tpu_custom_call.1} parent=1 // pred_region
      _
    $region49: #{tpu_custom_call.1} parent=1 // pred_fallthru
      _
    // Predicated region
    $region50: #{tpu_custom_call.1} parent=1 // pred_check
      _
    $region51: #{tpu_custom_call.1} parent=1 // pred_check_branch
      %55 = sbr.rel (0) target = $region53
    $region52: #{tpu_custom_call.1} parent=1 // pred_region
      _
    $region53: #{tpu_custom_call.1} parent=1 // pred_fallthru
      _
    // Predicated region
    $region54: #{tpu_custom_call.1} parent=1 // pred_check
      _
    $region55: #{tpu_custom_call.1} parent=1 // pred_check_branch
      %57 = sbr.rel (0) target = $region57
    $region56: #{tpu_custom_call.1} parent=1 // pred_region
      %58 = dma.done [#allocation3], 128
    $region57: #{tpu_custom_call.1} parent=1 // pred_fallthru
      _
    %v61 = vld [vmem:[#allocation2] sm:$0xf]
    %v62 = vld [vmem:[#allocation2 + $0x4] sm:$0xf]
    %v63 = vunpack.c.l.bf16 %v61
    %v64 = vunpack.c.l.bf16 %v62
    %v65 = vld [vmem:[%s1] sm:$0xf]
    %v66 = vld [vmem:[%s1 + $0x4] sm:$0xf]
    %v67 = vld [vmem:[%s1 + $0x8] sm:$0xf]
    %v68 = vld [vmem:[%s1 + $0xc] sm:$0xf]
    %v69 = vld [vmem:[%s2] sm:$0x1]
    %v71 = vlaneseq
    %v72 = vshrl.u32 %v71, 7
    %v73 = vsub.s32 0, %v72
    %v74 = vrot.slane %v69, %v73
    %v78 = vunpack.c.l.b16 %v61
    %v79 = vunpack.c.l.b16 %v62
    %v80 = vpack.c.b16 %v79, %v78
    %v85 = vunpack.c.l.b16 %v65
    %v86 = vunpack.c.l.b16 %v66
    %v87 = vunpack.c.l.b16 %v67
    %v88 = vunpack.c.l.b16 %v68
    %v89 = vpack.c.b16 %v86, %v85
    %v90 = vpack.c.b16 %v88, %v87
    %vm93 = vcmask 261120
    %v95 = vsel %vm93, %v80, 0
    %97 = vmatprep.subr.bf16.mxu0 0
    %98 = vmatpush1.bf16.msra.mxu0 %v89
    %99 = vmatprep.subr.bf16.mxu0 0
    %100 = vmatpush1.bf16.msra.mxu0 %v90
    %101 = vmatprep.subr.bf16.mxu0 0
    %102 = vmatpush1.bf16.msra.mxu0 0
    %103 = vmatprep.subr.bf16.mxu0 0
    %104 = vmatpush1.bf16.msra.mxu0 0
    %105 = vmatprep.subr.bf16.mxu0 0
    %106 = vmatpush1.bf16.msra.mxu0 0
    %107 = vmatprep.subr.bf16.mxu0 0
    %108 = vmatpush1.bf16.msra.mxu0 0
    %109 = vmatprep.subr.bf16.mxu0 0
    %110 = vmatpush1.bf16.msra.mxu0 0
    %111 = vmatprep.subr.bf16.mxu0 0
    %112 = vmatpush1.bf16.msra.mxu0 0
    %113 = vmatprep.subr.bf16.mxu0 0
    %114 = vmatpush1.bf16.msra.mxu0 0
    %115 = vmatprep.subr.bf16.mxu0 0
    %116 = vmatpush1.bf16.msra.mxu0 0
    %117 = vmatprep.subr.bf16.mxu0 0
    %118 = vmatpush1.bf16.msra.mxu0 0
    %119 = vmatprep.subr.bf16.mxu0 0
    %120 = vmatpush1.bf16.msra.mxu0 0
    %121 = vmatprep.subr.bf16.mxu0 0
    %122 = vmatpush1.bf16.msra.mxu0 0
    %123 = vmatprep.subr.bf16.mxu0 0
    %124 = vmatpush1.bf16.msra.mxu0 0
    %125 = vmatprep.subr.bf16.mxu0 0
    %126 = vmatpush1.bf16.msra.mxu0 0
    %127 = vmatprep.subr.bf16.mxu0 0
    %128 = vmatpush1.bf16.msra.mxu0 0
    %129 = vmatprep.mubr.bf16.mxu0 0
    %130 = vmatmul.mubr.bf16.gmra.mrb[0].mxu0 %v95
    %v131 = vpop.f32.mrb[0].mxu0
    %v132 = vadd.f32 %v74, %v131
    %v133 = vpop.f32.mrb[0].mxu0
    %v134 = vpop.f32.mrb[0].mxu0
    %v135 = vadd.f32 %v74, %v134
    %v136 = vpop.f32.mrb[0].mxu0
    %137 = vdwg.mxu0
    %v138 = vpack.c.bf16 %v135, %v132
    %v139 = vmul.bf16 %v138, 1052065461
    %v141 = vunpack.c.l.b16 %v139
    %v142 = vunpack.c.h.b16 %v139
    %v143 = vpack.c.b16 %v141, %v141
    %v144 = vpack.c.b16 %v142, %v142
    %v146 = vunpack.c.l.b16 %v138
    %v147 = vunpack.c.h.b16 %v138
    %v148 = vpack.c.b16 %v146, %v146
    %149 = vrot.lane.b32.xlu0 %v148, 96
    %v150 = vpop.permute.xlu0 %149
    %vm151 = vcmask 64512
    %v153 = vsel %vm151, %v143, 0
    %v156 = vsel %vm151, %v150, 0
    %158 = vmatprep.subr.bf16.mxu0 0
    %159 = vmatpush1.bf16.xpose.msra.mxu0 %v156
    %160 = vmatprep.subr.bf16.mxu0 0
    %161 = vmatpush1.bf16.xpose.msra.mxu0 0
    %162 = vmatprep.subr.bf16.mxu0 0
    %163 = vmatpush1.bf16.xpose.msra.mxu0 0
    %164 = vmatprep.subr.bf16.mxu0 0
    %165 = vmatpush1.bf16.xpose.msra.mxu0 0
    %166 = vmatprep.subr.bf16.mxu0 0
    %167 = vmatpush1.bf16.xpose.msra.mxu0 0
    %168 = vmatprep.subr.bf16.mxu0 0
    %169 = vmatpush1.bf16.xpose.msra.mxu0 0
    %170 = vmatprep.subr.bf16.mxu0 0
    %171 = vmatpush1.bf16.xpose.msra.mxu0 0
    %172 = vmatprep.subr.bf16.mxu0 0
    %173 = vmatpush1.bf16.xpose.msra.mxu0 0
    %174 = vmatprep.subr.bf16.mxu0 0
    %175 = vmatpush1.bf16.xpose.msra.mxu0 0
    %176 = vmatprep.subr.bf16.mxu0 0
    %177 = vmatpush1.bf16.xpose.msra.mxu0 0
    %178 = vmatprep.subr.bf16.mxu0 0
    %179 = vmatpush1.bf16.xpose.msra.mxu0 0
    %180 = vmatprep.subr.bf16.mxu0 0
    %181 = vmatpush1.bf16.xpose.msra.mxu0 0
    %182 = vmatprep.subr.bf16.mxu0 0
    %183 = vmatpush1.bf16.xpose.msra.mxu0 0
    %184 = vmatprep.subr.bf16.mxu0 0
    %185 = vmatpush1.bf16.xpose.msra.mxu0 0
    %186 = vmatprep.subr.bf16.mxu0 0
    %187 = vmatpush1.bf16.xpose.msra.mxu0 0
    %188 = vmatprep.subr.bf16.mxu0 0
    %189 = vmatpush1.bf16.xpose.msra.mxu0 0
    %190 = vmatprep.mubr.bf16.mxu0 0
    %191 = vmatmul.mubr.bf16.gmra.mrb[0].mxu0 %v153
    %v192 = vpop.f32.mrb[0].mxu0
    %v193 = vadd.f32 0.0, %v192
    %v194 = vpop.f32.mrb[0].mxu0
    %v195 = vpop.f32.mrb[0].mxu0
    %v196 = vpop.f32.mrb[0].mxu0
    %197 = vdwg.mxu0
    %v198 = vpack.c.b16 %v147, %v147
    %199 = vrot.lane.b32.xlu0 %v198, 96
    %v200 = vpop.permute.xlu0 %199
    %v202 = vsel %vm151, %v144, 0
    %v205 = vsel %vm151, %v200, 0
    %207 = vmatprep.subr.bf16.mxu0 0
    %208 = vmatpush1.bf16.xpose.msra.mxu0 %v205
    %209 = vmatprep.subr.bf16.mxu0 0
    %210 = vmatpush1.bf16.xpose.msra.mxu0 0
    %211 = vmatprep.subr.bf16.mxu0 0
    %212 = vmatpush1.bf16.xpose.msra.mxu0 0
    %213 = vmatprep.subr.bf16.mxu0 0
    %214 = vmatpush1.bf16.xpose.msra.mxu0 0
    %215 = vmatprep.subr.bf16.mxu0 0
    %216 = vmatpush1.bf16.xpose.msra.mxu0 0
    %217 = vmatprep.subr.bf16.mxu0 0
    %218 = vmatpush1.bf16.xpose.msra.mxu0 0
    %219 = vmatprep.subr.bf16.mxu0 0
    %220 = vmatpush1.bf16.xpose.msra.mxu0 0
    %221 = vmatprep.subr.bf16.mxu0 0
    %222 = vmatpush1.bf16.xpose.msra.mxu0 0
    %223 = vmatprep.subr.bf16.mxu0 0
    %224 = vmatpush1.bf16.xpose.msra.mxu0 0
    %225 = vmatprep.subr.bf16.mxu0 0
    %226 = vmatpush1.bf16.xpose.msra.mxu0 0
    %227 = vmatprep.subr.bf16.mxu0 0
    %228 = vmatpush1.bf16.xpose.msra.mxu0 0
    %229 = vmatprep.subr.bf16.mxu0 0
    %230 = vmatpush1.bf16.xpose.msra.mxu0 0
    %231 = vmatprep.subr.bf16.mxu0 0
    %232 = vmatpush1.bf16.xpose.msra.mxu0 0
    %233 = vmatprep.subr.bf16.mxu0 0
    %234 = vmatpush1.bf16.xpose.msra.mxu0 0
    %235 = vmatprep.subr.bf16.mxu0 0
    %236 = vmatpush1.bf16.xpose.msra.mxu0 0
    %237 = vmatprep.subr.bf16.mxu0 0
    %238 = vmatpush1.bf16.xpose.msra.mxu0 0
    %239 = vmatprep.mubr.bf16.mxu0 0
    %240 = vmatmul.mubr.bf16.gmra.mrb[0].mxu0 %v202
    %v241 = vpop.f32.mrb[0].mxu0
    %v242 = vadd.f32 0.0, %v241
    %v243 = vpop.f32.mrb[0].mxu0
    %v244 = vpop.f32.mrb[0].mxu0
    %v245 = vpop.f32.mrb[0].mxu0
    %246 = vdwg.mxu0
    %v247 = vsel %vm151, %v193, -inf
    %248 = vmax.xlane.f32.xlu0 %v247
    %v249 = vpop.xlane.xlu0 %248
    %v250 = vsel %vm151, %v242, -inf
    %251 = vmax.xlane.f32.xlu0 %v250
    %v252 = vpop.xlane.xlu0 %251
    %v253 = vsub.f32 %v193, %v249
    %v254 = vsub.f32 %v242, %v252
    %v255 = vmul.f32 %v253, 1.442695
    %v256 = vpow.pop %v255
    %v257 = vmul.f32 %v254, 1.442695
    %v258 = vpow.pop %v257
    %v259 = vsel %vm151, %v256, 0.0
    %260 = vadd.xlane.f32.xlu0 %v259
    %v261 = vpop.xlane.xlu0 %260
    %v262 = vsel %vm151, %v258, 0.0
    %263 = vadd.xlane.f32.xlu0 %v262
    %v264 = vpop.xlane.xlu0 %263
    %v265 = vrcp.pop %v261
    %v266 = vrcp.pop %v264
    %v267 = vmul.f32 %v256, %v265
    %v268 = vmul.f32 %v258, %v266
    %v269 = vpack.c.bf16 %v267, %v267
    %v270 = vpack.c.bf16 %v268, %v268
    %271 = vrot.lane.b32.xlu0 %v148, 64
    %v272 = vpop.permute.xlu0 %271
    %v274 = vsel %vm151, %v269, 0
    %vm276 = vcmask 1043456
    %v278 = vsel %vm276, %v272, 0
    %280 = vmatprep.subr.bf16.mxu0 0
    %281 = vmatpush1.bf16.msra.mxu0 %v278
    %282 = vmatprep.subr.bf16.mxu0 0
    %283 = vmatpush1.bf16.msra.mxu0 0
    %284 = vmatprep.subr.bf16.mxu0 0
    %285 = vmatpush1.bf16.msra.mxu0 0
    %286 = vmatprep.subr.bf16.mxu0 0
    %287 = vmatpush1.bf16.msra.mxu0 0
    %288 = vmatprep.subr.bf16.mxu0 0
    %289 = vmatpush1.bf16.msra.mxu0 0
    %290 = vmatprep.subr.bf16.mxu0 0
    %291 = vmatpush1.bf16.msra.mxu0 0
    %292 = vmatprep.subr.bf16.mxu0 0
    %293 = vmatpush1.bf16.msra.mxu0 0
    %294 = vmatprep.subr.bf16.mxu0 0
    %295 = vmatpush1.bf16.msra.mxu0 0
    %296 = vmatprep.subr.bf16.mxu0 0
    %297 = vmatpush1.bf16.msra.mxu0 0
    %298 = vmatprep.subr.bf16.mxu0 0
    %299 = vmatpush1.bf16.msra.mxu0 0
    %300 = vmatprep.subr.bf16.mxu0 0
    %301 = vmatpush1.bf16.msra.mxu0 0
    %302 = vmatprep.subr.bf16.mxu0 0
    %303 = vmatpush1.bf16.msra.mxu0 0
    %304 = vmatprep.subr.bf16.mxu0 0
    %305 = vmatpush1.bf16.msra.mxu0 0
    %306 = vmatprep.subr.bf16.mxu0 0
    %307 = vmatpush1.bf16.msra.mxu0 0
    %308 = vmatprep.subr.bf16.mxu0 0
    %309 = vmatpush1.bf16.msra.mxu0 0
    %310 = vmatprep.subr.bf16.mxu0 0
    %311 = vmatpush1.bf16.msra.mxu0 0
    %312 = vmatprep.mubr.bf16.mxu0 0
    %313 = vmatmul.mubr.bf16.gmra.mrb[0].mxu0 %v274
    %v314 = vpop.f32.mrb[0].mxu0
    %v315 = vadd.f32 0.0, %v314
    %v316 = vpop.f32.mrb[0].mxu0
    %v317 = vpop.f32.mrb[0].mxu0
    %v318 = vpop.f32.mrb[0].mxu0
    %319 = vdwg.mxu0
    %320 = vrot.lane.b32.xlu0 %v198, 64
    %v321 = vpop.permute.xlu0 %320
    %v323 = vsel %vm151, %v270, 0
    %v326 = vsel %vm276, %v321, 0
    %328 = vmatprep.subr.bf16.mxu0 0
    %329 = vmatpush1.bf16.msra.mxu0 %v326
    %330 = vmatprep.subr.bf16.mxu0 0
    %331 = vmatpush1.bf16.msra.mxu0 0
    %332 = vmatprep.subr.bf16.mxu0 0
    %333 = vmatpush1.bf16.msra.mxu0 0
    %334 = vmatprep.subr.bf16.mxu0 0
    %335 = vmatpush1.bf16.msra.mxu0 0
    %336 = vmatprep.subr.bf16.mxu0 0
    %337 = vmatpush1.bf16.msra.mxu0 0
    %338 = vmatprep.subr.bf16.mxu0 0
    %339 = vmatpush1.bf16.msra.mxu0 0
    %340 = vmatprep.subr.bf16.mxu0 0
    %341 = vmatpush1.bf16.msra.mxu0 0
    %342 = vmatprep.subr.bf16.mxu0 0
    %343 = vmatpush1.bf16.msra.mxu0 0
    %344 = vmatprep.subr.bf16.mxu0 0
    %345 = vmatpush1.bf16.msra.mxu0 0
    %346 = vmatprep.subr.bf16.mxu0 0
    %347 = vmatpush1.bf16.msra.mxu0 0
    %348 = vmatprep.subr.bf16.mxu0 0
    %349 = vmatpush1.bf16.msra.mxu0 0
    %350 = vmatprep.subr.bf16.mxu0 0
    %351 = vmatpush1.bf16.msra.mxu0 0
    %352 = vmatprep.subr.bf16.mxu0 0
    %353 = vmatpush1.bf16.msra.mxu0 0
    %354 = vmatprep.subr.bf16.mxu0 0
    %355 = vmatpush1.bf16.msra.mxu0 0
    %356 = vmatprep.subr.bf16.mxu0 0
    %357 = vmatpush1.bf16.msra.mxu0 0
    %358 = vmatprep.subr.bf16.mxu0 0
    %359 = vmatpush1.bf16.msra.mxu0 0
    %360 = vmatprep.mubr.bf16.mxu0 0
    %361 = vmatmul.mubr.bf16.gmra.mrb[0].mxu0 %v323
    %v362 = vpop.f32.mrb[0].mxu0
    %v363 = vadd.f32 0.0, %v362
    %v364 = vpop.f32.mrb[0].mxu0
    %v365 = vpop.f32.mrb[0].mxu0
    %v366 = vpop.f32.mrb[0].mxu0
    %367 = vdwg.mxu0
    %v368 = vpack.c.bf16 %v363, %v315
    %v369 = vld [vmem:[%s3] sm:$0xf]
    %370 = vrot.lane.b32.xlu0 %v143, 120
    %v371 = vpop.permute.xlu0 %370
    %372 = vrot.lane.b32.xlu0 %v148, 88
    %v373 = vpop.permute.xlu0 %372
    %v375 = vsel %vm151, %v371, 0
    %v378 = vsel %vm151, %v373, 0
    %380 = vmatprep.subr.bf16.mxu0 0
    %381 = vmatpush1.bf16.xpose.msra.mxu0 %v378
    %382 = vmatprep.subr.bf16.mxu0 0
    %383 = vmatpush1.bf16.xpose.msra.mxu0 0
    %384 = vmatprep.subr.bf16.mxu0 0
    %385 = vmatpush1.bf16.xpose.msra.mxu0 0
    %386 = vmatprep.subr.bf16.mxu0 0
    %387 = vmatpush1.bf16.xpose.msra.mxu0 0
    %388 = vmatprep.subr.bf16.mxu0 0
    %389 = vmatpush1.bf16.xpose.msra.mxu0 0
    %390 = vmatprep.subr.bf16.mxu0 0
    %391 = vmatpush1.bf16.xpose.msra.mxu0 0
    %392 = vmatprep.subr.bf16.mxu0 0
    %393 = vmatpush1.bf16.xpose.msra.mxu0 0
    %394 = vmatprep.subr.bf16.mxu0 0
    %395 = vmatpush1.bf16.xpose.msra.mxu0 0
    %396 = vmatprep.subr.bf16.mxu0 0
    %397 = vmatpush1.bf16.xpose.msra.mxu0 0
    %398 = vmatprep.subr.bf16.mxu0 0
    %399 = vmatpush1.bf16.xpose.msra.mxu0 0
    %400 = vmatprep.subr.bf16.mxu0 0
    %401 = vmatpush1.bf16.xpose.msra.mxu0 0
    %402 = vmatprep.subr.bf16.mxu0 0
    %403 = vmatpush1.bf16.xpose.msra.mxu0 0
    %404 = vmatprep.subr.bf16.mxu0 0
    %405 = vmatpush1.bf16.xpose.msra.mxu0 0
    %406 = vmatprep.subr.bf16.mxu0 0
    %407 = vmatpush1.bf16.xpose.msra.mxu0 0
    %408 = vmatprep.subr.bf16.mxu0 0
    %409 = vmatpush1.bf16.xpose.msra.mxu0 0
    %410 = vmatprep.subr.bf16.mxu0 0
    %411 = vmatpush1.bf16.xpose.msra.mxu0 0
    %412 = vmatprep.mubr.bf16.mxu0 0
    %413 = vmatmul.mubr.bf16.gmra.mrb[0].mxu0 %v375
    %v414 = vpop.f32.mrb[0].mxu0
    %v415 = vadd.f32 0.0, %v414
    %v416 = vpop.f32.mrb[0].mxu0
    %v417 = vpop.f32.mrb[0].mxu0
    %v418 = vpop.f32.mrb[0].mxu0
    %419 = vdwg.mxu0
    %420 = vrot.lane.b32.xlu0 %v144, 120
    %v421 = vpop.permute.xlu0 %420
    %422 = vrot.lane.b32.xlu0 %v198, 88
    %v423 = vpop.permute.xlu0 %422
    %v425 = vsel %vm151, %v421, 0
    %v428 = vsel %vm151, %v423, 0
    %430 = vmatprep.subr.bf16.mxu0 0
    %431 = vmatpush1.bf16.xpose.msra.mxu0 %v428
    %432 = vmatprep.subr.bf16.mxu0 0
    %433 = vmatpush1.bf16.xpose.msra.mxu0 0
    %434 = vmatprep.subr.bf16.mxu0 0
    %435 = vmatpush1.bf16.xpose.msra.mxu0 0
    %436 = vmatprep.subr.bf16.mxu0 0
    %437 = vmatpush1.bf16.xpose.msra.mxu0 0
    %438 = vmatprep.subr.bf16.mxu0 0
    %439 = vmatpush1.bf16.xpose.msra.mxu0 0
    %440 = vmatprep.subr.bf16.mxu0 0
    %441 = vmatpush1.bf16.xpose.msra.mxu0 0
    %442 = vmatprep.subr.bf16.mxu0 0
    %443 = vmatpush1.bf16.xpose.msra.mxu0 0
    %444 = vmatprep.subr.bf16.mxu0 0
    %445 = vmatpush1.bf16.xpose.msra.mxu0 0
    %446 = vmatprep.subr.bf16.mxu0 0
    %447 = vmatpush1.bf16.xpose.msra.mxu0 0
    %448 = vmatprep.subr.bf16.mxu0 0
    %449 = vmatpush1.bf16.xpose.msra.mxu0 0
    %450 = vmatprep.subr.bf16.mxu0 0
    %451 = vmatpush1.bf16.xpose.msra.mxu0 0
    %452 = vmatprep.subr.bf16.mxu0 0
    %453 = vmatpush1.bf16.xpose.msra.mxu0 0
    %454 = vmatprep.subr.bf16.mxu0 0
    %455 = vmatpush1.bf16.xpose.msra.mxu0 0
    %456 = vmatprep.subr.bf16.mxu0 0
    %457 = vmatpush1.bf16.xpose.msra.mxu0 0
    %458 = vmatprep.subr.bf16.mxu0 0
    %459 = vmatpush1.bf16.xpose.msra.mxu0 0
    %460 = vmatprep.subr.bf16.mxu0 0
    %461 = vmatpush1.bf16.xpose.msra.mxu0 0
    %462 = vmatprep.mubr.bf16.mxu0 0
    %463 = vmatmul.mubr.bf16.gmra.mrb[0].mxu0 %v425
    %v464 = vpop.f32.mrb[0].mxu0
    %v465 = vadd.f32 0.0, %v464
    %v466 = vpop.f32.mrb[0].mxu0
    %v467 = vpop.f32.mrb[0].mxu0
    %v468 = vpop.f32.mrb[0].mxu0
    %469 = vdwg.mxu0
    %v470 = vsel %vm151, %v415, -inf
    %471 = vmax.xlane.f32.xlu0 %v470
    %v472 = vpop.xlane.xlu0 %471
    %v473 = vsel %vm151, %v465, -inf
    %474 = vmax.xlane.f32.xlu0 %v473
    %v475 = vpop.xlane.xlu0 %474
    %v476 = vsub.f32 %v415, %v472
    %v477 = vsub.f32 %v465, %v475
    %v478 = vmul.f32 %v476, 1.442695
    %v479 = vpow.pop %v478
    %v480 = vmul.f32 %v477, 1.442695
    %v481 = vpow.pop %v480
    %v482 = vsel %vm151, %v479, 0.0
    %483 = vadd.xlane.f32.xlu0 %v482
    %v484 = vpop.xlane.xlu0 %483
    %v485 = vsel %vm151, %v481, 0.0
    %486 = vadd.xlane.f32.xlu0 %v485
    %v487 = vpop.xlane.xlu0 %486
    %v488 = vrcp.pop %v484
    %v489 = vrcp.pop %v487
    %v490 = vmul.f32 %v479, %v488
    %v491 = vmul.f32 %v481, %v489
    %v492 = vpack.c.bf16 %v490, %v490
    %v493 = vpack.c.bf16 %v491, %v491
    %494 = vrot.lane.b32.xlu0 %v148, 56
    %v495 = vpop.permute.xlu0 %494
    %v497 = vsel %vm151, %v492, 0
    %v500 = vsel %vm276, %v495, 0
    %502 = vmatprep.subr.bf16.mxu0 0
    %503 = vmatpush1.bf16.msra.mxu0 %v500
    %504 = vmatprep.subr.bf16.mxu0 0
    %505 = vmatpush1.bf16.msra.mxu0 0
    %506 = vmatprep.subr.bf16.mxu0 0
    %507 = vmatpush1.bf16.msra.mxu0 0
    %508 = vmatprep.subr.bf16.mxu0 0
    %509 = vmatpush1.bf16.msra.mxu0 0
    %510 = vmatprep.subr.bf16.mxu0 0
    %511 = vmatpush1.bf16.msra.mxu0 0
    %512 = vmatprep.subr.bf16.mxu0 0
    %513 = vmatpush1.bf16.msra.mxu0 0
    %514 = vmatprep.subr.bf16.mxu0 0
    %515 = vmatpush1.bf16.msra.mxu0 0
    %516 = vmatprep.subr.bf16.mxu0 0
    %517 = vmatpush1.bf16.msra.mxu0 0
    %518 = vmatprep.subr.bf16.mxu0 0
    %519 = vmatpush1.bf16.msra.mxu0 0
    %520 = vmatprep.subr.bf16.mxu0 0
    %521 = vmatpush1.bf16.msra.mxu0 0
    %522 = vmatprep.subr.bf16.mxu0 0
    %523 = vmatpush1.bf16.msra.mxu0 0
    %524 = vmatprep.subr.bf16.mxu0 0
    %525 = vmatpush1.bf16.msra.mxu0 0
    %526 = vmatprep.subr.bf16.mxu0 0
    %527 = vmatpush1.bf16.msra.mxu0 0
    %528 = vmatprep.subr.bf16.mxu0 0
    %529 = vmatpush1.bf16.msra.mxu0 0
    %530 = vmatprep.subr.bf16.mxu0 0
    %531 = vmatpush1.bf16.msra.mxu0 0
    %532 = vmatprep.subr.bf16.mxu0 0
    %533 = vmatpush1.bf16.msra.mxu0 0
    %534 = vmatprep.mubr.bf16.mxu0 0
    %535 = vmatmul.mubr.bf16.gmra.mrb[0].mxu0 %v497
    %v536 = vpop.f32.mrb[0].mxu0
    %v537 = vadd.f32 0.0, %v536
    %v538 = vpop.f32.mrb[0].mxu0
    %v539 = vpop.f32.mrb[0].mxu0
    %v540 = vpop.f32.mrb[0].mxu0
    %541 = vdwg.mxu0
    %542 = vrot.lane.b32.xlu0 %v198, 56
    %v543 = vpop.permute.xlu0 %542
    %v545 = vsel %vm151, %v493, 0
    %v548 = vsel %vm276, %v543, 0
    %550 = vmatprep.subr.bf16.mxu0 0
    %551 = vmatpush1.bf16.msra.mxu0 %v548
    %552 = vmatprep.subr.bf16.mxu0 0
    %553 = vmatpush1.bf16.msra.mxu0 0
    %554 = vmatprep.subr.bf16.mxu0 0
    %555 = vmatpush1.bf16.msra.mxu0 0
    %556 = vmatprep.subr.bf16.mxu0 0
    %557 = vmatpush1.bf16.msra.mxu0 0
    %558 = vmatprep.subr.bf16.mxu0 0
    %559 = vmatpush1.bf16.msra.mxu0 0
    %560 = vmatprep.subr.bf16.mxu0 0
    %561 = vmatpush1.bf16.msra.mxu0 0
    %562 = vmatprep.subr.bf16.mxu0 0
    %563 = vmatpush1.bf16.msra.mxu0 0
    %564 = vmatprep.subr.bf16.mxu0 0
    %565 = vmatpush1.bf16.msra.mxu0 0
    %566 = vmatprep.subr.bf16.mxu0 0
    %567 = vmatpush1.bf16.msra.mxu0 0
    %568 = vmatprep.subr.bf16.mxu0 0
    %569 = vmatpush1.bf16.msra.mxu0 0
    %570 = vmatprep.subr.bf16.mxu0 0
    %571 = vmatpush1.bf16.msra.mxu0 0
    %572 = vmatprep.subr.bf16.mxu0 0
    %573 = vmatpush1.bf16.msra.mxu0 0
    %574 = vmatprep.subr.bf16.mxu0 0
    %575 = vmatpush1.bf16.msra.mxu0 0
    %576 = vmatprep.subr.bf16.mxu0 0
    %577 = vmatpush1.bf16.msra.mxu0 0
    %578 = vmatprep.subr.bf16.mxu0 0
    %579 = vmatpush1.bf16.msra.mxu0 0
    %580 = vmatprep.subr.bf16.mxu0 0
    %581 = vmatpush1.bf16.msra.mxu0 0
    %582 = vmatprep.mubr.bf16.mxu0 0
    %583 = vmatmul.mubr.bf16.gmra.mrb[0].mxu0 %v545
    %v584 = vpop.f32.mrb[0].mxu0
    %v585 = vadd.f32 0.0, %v584
    %v586 = vpop.f32.mrb[0].mxu0
    %v587 = vpop.f32.mrb[0].mxu0
    %v588 = vpop.f32.mrb[0].mxu0
    %589 = vdwg.mxu0
    %v590 = vpack.c.bf16 %v585, %v537
    %v591 = vld [vmem:[%s3 + $0x4] sm:$0xf]
    %v593 = vsel %vm151, %v590, 0
    %v596 = vsel %vm276, %v591, 0
    %598 = vmatprep.subr.bf16.mxu0 0
    %599 = vmatpush1.bf16.msra.mxu0 %v596
    %600 = vmatprep.subr.bf16.mxu0 0
    %601 = vmatpush1.bf16.msra.mxu0 0
    %602 = vmatprep.subr.bf16.mxu0 0
    %603 = vmatpush1.bf16.msra.mxu0 0
    %604 = vmatprep.subr.bf16.mxu0 0
    %605 = vmatpush1.bf16.msra.mxu0 0
    %606 = vmatprep.subr.bf16.mxu0 0
    %607 = vmatpush1.bf16.msra.mxu0 0
    %608 = vmatprep.subr.bf16.mxu0 0
    %609 = vmatpush1.bf16.msra.mxu0 0
    %610 = vmatprep.subr.bf16.mxu0 0
    %611 = vmatpush1.bf16.msra.mxu0 0
    %612 = vmatprep.subr.bf16.mxu0 0
    %613 = vmatpush1.bf16.msra.mxu0 0
    %614 = vmatprep.subr.bf16.mxu0 0
    %615 = vmatpush1.bf16.msra.mxu0 0
    %616 = vmatprep.subr.bf16.mxu0 0
    %617 = vmatpush1.bf16.msra.mxu0 0
    %618 = vmatprep.subr.bf16.mxu0 0
    %619 = vmatpush1.bf16.msra.mxu0 0
    %620 = vmatprep.subr.bf16.mxu0 0
    %621 = vmatpush1.bf16.msra.mxu0 0
    %622 = vmatprep.subr.bf16.mxu0 0
    %623 = vmatpush1.bf16.msra.mxu0 0
    %624 = vmatprep.subr.bf16.mxu0 0
    %625 = vmatpush1.bf16.msra.mxu0 0
    %626 = vmatprep.subr.bf16.mxu0 0
    %627 = vmatpush1.bf16.msra.mxu0 0
    %628 = vmatprep.subr.bf16.mxu0 0
    %629 = vmatpush1.bf16.msra.mxu0 0
    %630 = vmatprep.mubr.bf16.mxu0 0
    %631 = vmatmul.mubr.bf16.gmra.mrb[0].mxu0 %v593
    %v632 = vpop.f32.mrb[0].mxu0
    %v633 = vadd.f32 0.0, %v632
    %v634 = vpop.f32.mrb[0].mxu0
    %v635 = vpop.f32.mrb[0].mxu0
    %v636 = vadd.f32 0.0, %v635
    %v637 = vpop.f32.mrb[0].mxu0
    %638 = vdwg.mxu0
    %v640 = vsel %vm151, %v368, 0
    %v643 = vsel %vm276, %v369, 0
    %645 = vmatprep.subr.bf16.mxu0 0
    %646 = vmatpush1.bf16.msra.mxu0 %v643
    %647 = vmatprep.subr.bf16.mxu0 0
    %648 = vmatpush1.bf16.msra.mxu0 0
    %649 = vmatprep.subr.bf16.mxu0 0
    %650 = vmatpush1.bf16.msra.mxu0 0
    %651 = vmatprep.subr.bf16.mxu0 0
    %652 = vmatpush1.bf16.msra.mxu0 0
    %653 = vmatprep.subr.bf16.mxu0 0
    %654 = vmatpush1.bf16.msra.mxu0 0
    %655 = vmatprep.subr.bf16.mxu0 0
    %656 = vmatpush1.bf16.msra.mxu0 0
    %657 = vmatprep.subr.bf16.mxu0 0
    %658 = vmatpush1.bf16.msra.mxu0 0
    %659 = vmatprep.subr.bf16.mxu0 0
    %660 = vmatpush1.bf16.msra.mxu0 0
    %661 = vmatprep.subr.bf16.mxu0 0
    %662 = vmatpush1.bf16.msra.mxu0 0
    %663 = vmatprep.subr.bf16.mxu0 0
    %664 = vmatpush1.bf16.msra.mxu0 0
    %665 = vmatprep.subr.bf16.mxu0 0
    %666 = vmatpush1.bf16.msra.mxu0 0
    %667 = vmatprep.subr.bf16.mxu0 0
    %668 = vmatpush1.bf16.msra.mxu0 0
    %669 = vmatprep.subr.bf16.mxu0 0
    %670 = vmatpush1.bf16.msra.mxu0 0
    %671 = vmatprep.subr.bf16.mxu0 0
    %672 = vmatpush1.bf16.msra.mxu0 0
    %673 = vmatprep.subr.bf16.mxu0 0
    %674 = vmatpush1.bf16.msra.mxu0 0
    %675 = vmatprep.subr.bf16.mxu0 0
    %676 = vmatpush1.bf16.msra.mxu0 0
    %677 = vmatprep.mubr.bf16.mxu0 0
    %678 = vmatmul.mubr.bf16.gmra.mrb[0].mxu0 %v640
    %v679 = vpop.f32.mrb[0].mxu0
    %v680 = vadd.f32 %v633, %v679
    %v681 = vpop.f32.mrb[0].mxu0
    %v682 = vpop.f32.mrb[0].mxu0
    %v683 = vadd.f32 %v636, %v682
    %v684 = vpop.f32.mrb[0].mxu0
    %685 = vdwg.mxu0
    %686 = vrot.lane.b32.xlu0 %v143, 112
    %v687 = vpop.permute.xlu0 %686
    %688 = vrot.lane.b32.xlu0 %v148, 80
    %v689 = vpop.permute.xlu0 %688
    %v691 = vsel %vm151, %v687, 0
    %v694 = vsel %vm151, %v689, 0
    %696 = vmatprep.subr.bf16.mxu0 0
    %697 = vmatpush1.bf16.xpose.msra.mxu0 %v694
    %698 = vmatprep.subr.bf16.mxu0 0
    %699 = vmatpush1.bf16.xpose.msra.mxu0 0
    %700 = vmatprep.subr.bf16.mxu0 0
    %701 = vmatpush1.bf16.xpose.msra.mxu0 0
    %702 = vmatprep.subr.bf16.mxu0 0
    %703 = vmatpush1.bf16.xpose.msra.mxu0 0
    %704 = vmatprep.subr.bf16.mxu0 0
    %705 = vmatpush1.bf16.xpose.msra.mxu0 0
    %706 = vmatprep.subr.bf16.mxu0 0
    %707 = vmatpush1.bf16.xpose.msra.mxu0 0
    %708 = vmatprep.subr.bf16.mxu0 0
    %709 = vmatpush1.bf16.xpose.msra.mxu0 0
    %710 = vmatprep.subr.bf16.mxu0 0
    %711 = vmatpush1.bf16.xpose.msra.mxu0 0
    %712 = vmatprep.subr.bf16.mxu0 0
    %713 = vmatpush1.bf16.xpose.msra.mxu0 0
    %714 = vmatprep.subr.bf16.mxu0 0
    %715 = vmatpush1.bf16.xpose.msra.mxu0 0
    %716 = vmatprep.subr.bf16.mxu0 0
    %717 = vmatpush1.bf16.xpose.msra.mxu0 0
    %718 = vmatprep.subr.bf16.mxu0 0
    %719 = vmatpush1.bf16.xpose.msra.mxu0 0
    %720 = vmatprep.subr.bf16.mxu0 0
    %721 = vmatpush1.bf16.xpose.msra.mxu0 0
    %722 = vmatprep.subr.bf16.mxu0 0
    %723 = vmatpush1.bf16.xpose.msra.mxu0 0
    %724 = vmatprep.subr.bf16.mxu0 0
    %725 = vmatpush1.bf16.xpose.msra.mxu0 0
    %726 = vmatprep.subr.bf16.mxu0 0
    %727 = vmatpush1.bf16.xpose.msra.mxu0 0
    %728 = vmatprep.mubr.bf16.mxu0 0
    %729 = vmatmul.mubr.bf16.gmra.mrb[0].mxu0 %v691
    %v730 = vpop.f32.mrb[0].mxu0
    %v731 = vadd.f32 0.0, %v730
    %v732 = vpop.f32.mrb[0].mxu0
    %v733 = vpop.f32.mrb[0].mxu0
    %v734 = vpop.f32.mrb[0].mxu0
    %735 = vdwg.mxu0
    %736 = vrot.lane.b32.xlu0 %v144, 112
    %v737 = vpop.permute.xlu0 %736
    %738 = vrot.lane.b32.xlu0 %v198, 80
    %v739 = vpop.permute.xlu0 %738
    %v741 = vsel %vm151, %v737, 0
    %v744 = vsel %vm151, %v739, 0
    %746 = vmatprep.subr.bf16.mxu0 0
    %747 = vmatpush1.bf16.xpose.msra.mxu0 %v744
    %748 = vmatprep.subr.bf16.mxu0 0
    %749 = vmatpush1.bf16.xpose.msra.mxu0 0
    %750 = vmatprep.subr.bf16.mxu0 0
    %751 = vmatpush1.bf16.xpose.msra.mxu0 0
    %752 = vmatprep.subr.bf16.mxu0 0
    %753 = vmatpush1.bf16.xpose.msra.mxu0 0
    %754 = vmatprep.subr.bf16.mxu0 0
    %755 = vmatpush1.bf16.xpose.msra.mxu0 0
    %756 = vmatprep.subr.bf16.mxu0 0
    %757 = vmatpush1.bf16.xpose.msra.mxu0 0
    %758 = vmatprep.subr.bf16.mxu0 0
    %759 = vmatpush1.bf16.xpose.msra.mxu0 0
    %760 = vmatprep.subr.bf16.mxu0 0
    %761 = vmatpush1.bf16.xpose.msra.mxu0 0
    %762 = vmatprep.subr.bf16.mxu0 0
    %763 = vmatpush1.bf16.xpose.msra.mxu0 0
    %764 = vmatprep.subr.bf16.mxu0 0
    %765 = vmatpush1.bf16.xpose.msra.mxu0 0
    %766 = vmatprep.subr.bf16.mxu0 0
    %767 = vmatpush1.bf16.xpose.msra.mxu0 0
    %768 = vmatprep.subr.bf16.mxu0 0
    %769 = vmatpush1.bf16.xpose.msra.mxu0 0
    %770 = vmatprep.subr.bf16.mxu0 0
    %771 = vmatpush1.bf16.xpose.msra.mxu0 0
    %772 = vmatprep.subr.bf16.mxu0 0
    %773 = vmatpush1.bf16.xpose.msra.mxu0 0
    %774 = vmatprep.subr.bf16.mxu0 0
    %775 = vmatpush1.bf16.xpose.msra.mxu0 0
    %776 = vmatprep.subr.bf16.mxu0 0
    %777 = vmatpush1.bf16.xpose.msra.mxu0 0
    %778 = vmatprep.mubr.bf16.mxu0 0
    %779 = vmatmul.mubr.bf16.gmra.mrb[0].mxu0 %v741
    %v780 = vpop.f32.mrb[0].mxu0
    %v781 = vadd.f32 0.0, %v780
    %v782 = vpop.f32.mrb[0].mxu0
    %v783 = vpop.f32.mrb[0].mxu0
    %v784 = vpop.f32.mrb[0].mxu0
    %785 = vdwg.mxu0
    %v786 = vsel %vm151, %v731, -inf
    %787 = vmax.xlane.f32.xlu0 %v786
    %v788 = vpop.xlane.xlu0 %787
    %v789 = vsel %vm151, %v781, -inf
    %790 = vmax.xlane.f32.xlu0 %v789
    %v791 = vpop.xlane.xlu0 %790
    %v792 = vsub.f32 %v731, %v788
    %v793 = vsub.f32 %v781, %v791
    %v794 = vmul.f32 %v792, 1.442695
    %v795 = vpow.pop %v794
    %v796 = vmul.f32 %v793, 1.442695
    %v797 = vpow.pop %v796
    %v798 = vsel %vm151, %v795, 0.0
    %799 = vadd.xlane.f32.xlu0 %v798
    %v800 = vpop.xlane.xlu0 %799
    %v801 = vsel %vm151, %v797, 0.0
    %802 = vadd.xlane.f32.xlu0 %v801
    %v803 = vpop.xlane.xlu0 %802
    %v804 = vrcp.pop %v800
    %v805 = vrcp.pop %v803
    %v806 = vmul.f32 %v795, %v804
    %v807 = vmul.f32 %v797, %v805
    %v808 = vpack.c.bf16 %v806, %v806
    %v809 = vpack.c.bf16 %v807, %v807
    %810 = vrot.lane.b32.xlu0 %v148, 48
    %v811 = vpop.permute.xlu0 %810
    %v813 = vsel %vm151, %v808, 0
    %v816 = vsel %vm276, %v811, 0
    %818 = vmatprep.subr.bf16.mxu0 0
    %819 = vmatpush1.bf16.msra.mxu0 %v816
    %820 = vmatprep.subr.bf16.mxu0 0
    %821 = vmatpush1.bf16.msra.mxu0 0
    %822 = vmatprep.subr.bf16.mxu0 0
    %823 = vmatpush1.bf16.msra.mxu0 0
    %824 = vmatprep.subr.bf16.mxu0 0
    %825 = vmatpush1.bf16.msra.mxu0 0
    %826 = vmatprep.subr.bf16.mxu0 0
    %827 = vmatpush1.bf16.msra.mxu0 0
    %828 = vmatprep.subr.bf16.mxu0 0
    %829 = vmatpush1.bf16.msra.mxu0 0
    %830 = vmatprep.subr.bf16.mxu0 0
    %831 = vmatpush1.bf16.msra.mxu0 0
    %832 = vmatprep.subr.bf16.mxu0 0
    %833 = vmatpush1.bf16.msra.mxu0 0
    %834 = vmatprep.subr.bf16.mxu0 0
    %835 = vmatpush1.bf16.msra.mxu0 0
    %836 = vmatprep.subr.bf16.mxu0 0
    %837 = vmatpush1.bf16.msra.mxu0 0
    %838 = vmatprep.subr.bf16.mxu0 0
    %839 = vmatpush1.bf16.msra.mxu0 0
    %840 = vmatprep.subr.bf16.mxu0 0
    %841 = vmatpush1.bf16.msra.mxu0 0
    %842 = vmatprep.subr.bf16.mxu0 0
    %843 = vmatpush1.bf16.msra.mxu0 0
    %844 = vmatprep.subr.bf16.mxu0 0
    %845 = vmatpush1.bf16.msra.mxu0 0
    %846 = vmatprep.subr.bf16.mxu0 0
    %847 = vmatpush1.bf16.msra.mxu0 0
    %848 = vmatprep.subr.bf16.mxu0 0
    %849 = vmatpush1.bf16.msra.mxu0 0
    %850 = vmatprep.mubr.bf16.mxu0 0
    %851 = vmatmul.mubr.bf16.gmra.mrb[0].mxu0 %v813
    %v852 = vpop.f32.mrb[0].mxu0
    %v853 = vadd.f32 0.0, %v852
    %v854 = vpop.f32.mrb[0].mxu0
    %v855 = vpop.f32.mrb[0].mxu0
    %v856 = vpop.f32.mrb[0].mxu0
    %857 = vdwg.mxu0
    %858 = vrot.lane.b32.xlu0 %v198, 48
    %v859 = vpop.permute.xlu0 %858
    %v861 = vsel %vm151, %v809, 0
    %v864 = vsel %vm276, %v859, 0
    %866 = vmatprep.subr.bf16.mxu0 0
    %867 = vmatpush1.bf16.msra.mxu0 %v864
    %868 = vmatprep.subr.bf16.mxu0 0
    %869 = vmatpush1.bf16.msra.mxu0 0
    %870 = vmatprep.subr.bf16.mxu0 0
    %871 = vmatpush1.bf16.msra.mxu0 0
    %872 = vmatprep.subr.bf16.mxu0 0
    %873 = vmatpush1.bf16.msra.mxu0 0
    %874 = vmatprep.subr.bf16.mxu0 0
    %875 = vmatpush1.bf16.msra.mxu0 0
    %876 = vmatprep.subr.bf16.mxu0 0
    %877 = vmatpush1.bf16.msra.mxu0 0
    %878 = vmatprep.subr.bf16.mxu0 0
    %879 = vmatpush1.bf16.msra.mxu0 0
    %880 = vmatprep.subr.bf16.mxu0 0
    %881 = vmatpush1.bf16.msra.mxu0 0
    %882 = vmatprep.subr.bf16.mxu0 0
    %883 = vmatpush1.bf16.msra.mxu0 0
    %884 = vmatprep.subr.bf16.mxu0 0
    %885 = vmatpush1.bf16.msra.mxu0 0
    %886 = vmatprep.subr.bf16.mxu0 0
    %887 = vmatpush1.bf16.msra.mxu0 0
    %888 = vmatprep.subr.bf16.mxu0 0
    %889 = vmatpush1.bf16.msra.mxu0 0
    %890 = vmatprep.subr.bf16.mxu0 0
    %891 = vmatpush1.bf16.msra.mxu0 0
    %892 = vmatprep.subr.bf16.mxu0 0
    %893 = vmatpush1.bf16.msra.mxu0 0
    %894 = vmatprep.subr.bf16.mxu0 0
    %895 = vmatpush1.bf16.msra.mxu0 0
    %896 = vmatprep.subr.bf16.mxu0 0
    %897 = vmatpush1.bf16.msra.mxu0 0
    %898 = vmatprep.mubr.bf16.mxu0 0
    %899 = vmatmul.mubr.bf16.gmra.mrb[0].mxu0 %v861
    %v900 = vpop.f32.mrb[0].mxu0
    %v901 = vadd.f32 0.0, %v900
    %v902 = vpop.f32.mrb[0].mxu0
    %v903 = vpop.f32.mrb[0].mxu0
    %v904 = vpop.f32.mrb[0].mxu0
    %905 = vdwg.mxu0
    %v906 = vpack.c.bf16 %v901, %v853
    %v907 = vld [vmem:[%s3 + $0x8] sm:$0xf]
    %v909 = vsel %vm151, %v906, 0
    %v912 = vsel %vm276, %v907, 0
    %914 = vmatprep.subr.bf16.mxu0 0
    %915 = vmatpush1.bf16.msra.mxu0 %v912
    %916 = vmatprep.subr.bf16.mxu0 0
    %917 = vmatpush1.bf16.msra.mxu0 0
    %918 = vmatprep.subr.bf16.mxu0 0
    %919 = vmatpush1.bf16.msra.mxu0 0
    %920 = vmatprep.subr.bf16.mxu0 0
    %921 = vmatpush1.bf16.msra.mxu0 0
    %922 = vmatprep.subr.bf16.mxu0 0
    %923 = vmatpush1.bf16.msra.mxu0 0
    %924 = vmatprep.subr.bf16.mxu0 0
    %925 = vmatpush1.bf16.msra.mxu0 0
    %926 = vmatprep.subr.bf16.mxu0 0
    %927 = vmatpush1.bf16.msra.mxu0 0
    %928 = vmatprep.subr.bf16.mxu0 0
    %929 = vmatpush1.bf16.msra.mxu0 0
    %930 = vmatprep.subr.bf16.mxu0 0
    %931 = vmatpush1.bf16.msra.mxu0 0
    %932 = vmatprep.subr.bf16.mxu0 0
    %933 = vmatpush1.bf16.msra.mxu0 0
    %934 = vmatprep.subr.bf16.mxu0 0
    %935 = vmatpush1.bf16.msra.mxu0 0
    %936 = vmatprep.subr.bf16.mxu0 0
    %937 = vmatpush1.bf16.msra.mxu0 0
    %938 = vmatprep.subr.bf16.mxu0 0
    %939 = vmatpush1.bf16.msra.mxu0 0
    %940 = vmatprep.subr.bf16.mxu0 0
    %941 = vmatpush1.bf16.msra.mxu0 0
    %942 = vmatprep.subr.bf16.mxu0 0
    %943 = vmatpush1.bf16.msra.mxu0 0
    %944 = vmatprep.subr.bf16.mxu0 0
    %945 = vmatpush1.bf16.msra.mxu0 0
    %946 = vmatprep.mubr.bf16.mxu0 0
    %947 = vmatmul.mubr.bf16.gmra.mrb[0].mxu0 %v909
    %v948 = vpop.f32.mrb[0].mxu0
    %v949 = vadd.f32 0.0, %v948
    %v950 = vpop.f32.mrb[0].mxu0
    %v951 = vpop.f32.mrb[0].mxu0
    %v952 = vadd.f32 0.0, %v951
    %v953 = vpop.f32.mrb[0].mxu0
    %954 = vdwg.mxu0
    %v955 = vadd.f32 %v680, %v949
    %v956 = vadd.f32 %v683, %v952
    %957 = vrot.lane.b32.xlu0 %v143, 104
    %v958 = vpop.permute.xlu0 %957
    %959 = vrot.lane.b32.xlu0 %v148, 72
    %v960 = vpop.permute.xlu0 %959
    %v962 = vsel %vm151, %v958, 0
    %v965 = vsel %vm151, %v960, 0
    %967 = vmatprep.subr.bf16.mxu0 0
    %968 = vmatpush1.bf16.xpose.msra.mxu0 %v965
    %969 = vmatprep.subr.bf16.mxu0 0
    %970 = vmatpush1.bf16.xpose.msra.mxu0 0
    %971 = vmatprep.subr.bf16.mxu0 0
    %972 = vmatpush1.bf16.xpose.msra.mxu0 0
    %973 = vmatprep.subr.bf16.mxu0 0
    %974 = vmatpush1.bf16.xpose.msra.mxu0 0
    %975 = vmatprep.subr.bf16.mxu0 0
    %976 = vmatpush1.bf16.xpose.msra.mxu0 0
    %977 = vmatprep.subr.bf16.mxu0 0
    %978 = vmatpush1.bf16.xpose.msra.mxu0 0
    %979 = vmatprep.subr.bf16.mxu0 0
    %980 = vmatpush1.bf16.xpose.msra.mxu0 0
    %981 = vmatprep.subr.bf16.mxu0 0
    %982 = vmatpush1.bf16.xpose.msra.mxu0 0
    %983 = vmatprep.subr.bf16.mxu0 0
    %984 = vmatpush1.bf16.xpose.msra.mxu0 0
    %985 = vmatprep.subr.bf16.mxu0 0
    %986 = vmatpush1.bf16.xpose.msra.mxu0 0
    %987 = vmatprep.subr.bf16.mxu0 0
    %988 = vmatpush1.bf16.xpose.msra.mxu0 0
    %989 = vmatprep.subr.bf16.mxu0 0
    %990 = vmatpush1.bf16.xpose.msra.mxu0 0
    %991 = vmatprep.subr.bf16.mxu0 0
    %992 = vmatpush1.bf16.xpose.msra.mxu0 0
    %993 = vmatprep.subr.bf16.mxu0 0
    %994 = vmatpush1.bf16.xpose.msra.mxu0 0
    %995 = vmatprep.subr.bf16.mxu0 0
    %996 = vmatpush1.bf16.xpose.msra.mxu0 0
    %997 = vmatprep.subr.bf16.mxu0 0
    %998 = vmatpush1.bf16.xpose.msra.mxu0 0
    %999 = vmatprep.mubr.bf16.mxu0 0
    %1000 = vmatmul.mubr.bf16.gmra.mrb[0].mxu0 %v962
    %v1001 = vpop.f32.mrb[0].mxu0
    %v1002 = vadd.f32 0.0, %v1001
    %v1003 = vpop.f32.mrb[0].mxu0
    %v1004 = vpop.f32.mrb[0].mxu0
    %v1005 = vpop.f32.mrb[0].mxu0
    %1006 = vdwg.mxu0
    %1007 = vrot.lane.b32.xlu0 %v144, 104
    %v1008 = vpop.permute.xlu0 %1007
    %1009 = vrot.lane.b32.xlu0 %v198, 72
    %v1010 = vpop.permute.xlu0 %1009
    %v1012 = vsel %vm151, %v1008, 0
    %v1015 = vsel %vm151, %v1010, 0
    %1017 = vmatprep.subr.bf16.mxu0 0
    %1018 = vmatpush1.bf16.xpose.msra.mxu0 %v1015
    %1019 = vmatprep.subr.bf16.mxu0 0
    %1020 = vmatpush1.bf16.xpose.msra.mxu0 0
    %1021 = vmatprep.subr.bf16.mxu0 0
    %1022 = vmatpush1.bf16.xpose.msra.mxu0 0
    %1023 = vmatprep.subr.bf16.mxu0 0
    %1024 = vmatpush1.bf16.xpose.msra.mxu0 0
    %1025 = vmatprep.subr.bf16.mxu0 0
    %1026 = vmatpush1.bf16.xpose.msra.mxu0 0
    %1027 = vmatprep.subr.bf16.mxu0 0
    %1028 = vmatpush1.bf16.xpose.msra.mxu0 0
    %1029 = vmatprep.subr.bf16.mxu0 0
    %1030 = vmatpush1.bf16.xpose.msra.mxu0 0
    %1031 = vmatprep.subr.bf16.mxu0 0
    %1032 = vmatpush1.bf16.xpose.msra.mxu0 0
    %1033 = vmatprep.subr.bf16.mxu0 0
    %1034 = vmatpush1.bf16.xpose.msra.mxu0 0
    %1035 = vmatprep.subr.bf16.mxu0 0
    %1036 = vmatpush1.bf16.xpose.msra.mxu0 0
    %1037 = vmatprep.subr.bf16.mxu0 0
    %1038 = vmatpush1.bf16.xpose.msra.mxu0 0
    %1039 = vmatprep.subr.bf16.mxu0 0
    %1040 = vmatpush1.bf16.xpose.msra.mxu0 0
    %1041 = vmatprep.subr.bf16.mxu0 0
    %1042 = vmatpush1.bf16.xpose.msra.mxu0 0
    %1043 = vmatprep.subr.bf16.mxu0 0
    %1044 = vmatpush1.bf16.xpose.msra.mxu0 0
    %1045 = vmatprep.subr.bf16.mxu0 0
    %1046 = vmatpush1.bf16.xpose.msra.mxu0 0
    %1047 = vmatprep.subr.bf16.mxu0 0
    %1048 = vmatpush1.bf16.xpose.msra.mxu0 0
    %1049 = vmatprep.mubr.bf16.mxu0 0
    %1050 = vmatmul.mubr.bf16.gmra.mrb[0].mxu0 %v1012
    %v1051 = vpop.f32.mrb[0].mxu0
    %v1052 = vadd.f32 0.0, %v1051
    %v1053 = vpop.f32.mrb[0].mxu0
    %v1054 = vpop.f32.mrb[0].mxu0
    %v1055 = vpop.f32.mrb[0].mxu0
    %1056 = vdwg.mxu0
    %v1057 = vsel %vm151, %v1002, -inf
    %1058 = vmax.xlane.f32.xlu0 %v1057
    %v1059 = vpop.xlane.xlu0 %1058
    %v1060 = vsel %vm151, %v1052, -inf
    %1061 = vmax.xlane.f32.xlu0 %v1060
    %v1062 = vpop.xlane.xlu0 %1061
    %v1063 = vsub.f32 %v1002, %v1059
    %v1064 = vsub.f32 %v1052, %v1062
    %v1065 = vmul.f32 %v1063, 1.442695
    %v1066 = vpow.pop %v1065
    %v1067 = vmul.f32 %v1064, 1.442695
    %v1068 = vpow.pop %v1067
    %v1069 = vsel %vm151, %v1066, 0.0
    %1070 = vadd.xlane.f32.xlu0 %v1069
    %v1071 = vpop.xlane.xlu0 %1070
    %v1072 = vsel %vm151, %v1068, 0.0
    %1073 = vadd.xlane.f32.xlu0 %v1072
    %v1074 = vpop.xlane.xlu0 %1073
    %v1075 = vrcp.pop %v1071
    %v1076 = vrcp.pop %v1074
    %v1077 = vmul.f32 %v1066, %v1075
    %v1078 = vmul.f32 %v1068, %v1076
    %v1079 = vpack.c.bf16 %v1077, %v1077
    %v1080 = vpack.c.bf16 %v1078, %v1078
    %1081 = vrot.lane.b32.xlu0 %v148, 40
    %v1082 = vpop.permute.xlu0 %1081
    %v1084 = vsel %vm151, %v1079, 0
    %v1087 = vsel %vm276, %v1082, 0
    %1089 = vmatprep.subr.bf16.mxu0 0
    %1090 = vmatpush1.bf16.msra.mxu0 %v1087
    %1091 = vmatprep.subr.bf16.mxu0 0
    %1092 = vmatpush1.bf16.msra.mxu0 0
    %1093 = vmatprep.subr.bf16.mxu0 0
    %1094 = vmatpush1.bf16.msra.mxu0 0
    %1095 = vmatprep.subr.bf16.mxu0 0
    %1096 = vmatpush1.bf16.msra.mxu0 0
    %1097 = vmatprep.subr.bf16.mxu0 0
    %1098 = vmatpush1.bf16.msra.mxu0 0
    %1099 = vmatprep.subr.bf16.mxu0 0
    %1100 = vmatpush1.bf16.msra.mxu0 0
    %1101 = vmatprep.subr.bf16.mxu0 0
    %1102 = vmatpush1.bf16.msra.mxu0 0
    %1103 = vmatprep.subr.bf16.mxu0 0
    %1104 = vmatpush1.bf16.msra.mxu0 0
    %1105 = vmatprep.subr.bf16.mxu0 0
    %1106 = vmatpush1.bf16.msra.mxu0 0
    %1107 = vmatprep.subr.bf16.mxu0 0
    %1108 = vmatpush1.bf16.msra.mxu0 0
    %1109 = vmatprep.subr.bf16.mxu0 0
    %1110 = vmatpush1.bf16.msra.mxu0 0
    %1111 = vmatprep.subr.bf16.mxu0 0
    %1112 = vmatpush1.bf16.msra.mxu0 0
    %1113 = vmatprep.subr.bf16.mxu0 0
    %1114 = vmatpush1.bf16.msra.mxu0 0
    %1115 = vmatprep.subr.bf16.mxu0 0
    %1116 = vmatpush1.bf16.msra.mxu0 0
    %1117 = vmatprep.subr.bf16.mxu0 0
    %1118 = vmatpush1.bf16.msra.mxu0 0
    %1119 = vmatprep.subr.bf16.mxu0 0
    %1120 = vmatpush1.bf16.msra.mxu0 0
    %1121 = vmatprep.mubr.bf16.mxu0 0
    %1122 = vmatmul.mubr.bf16.gmra.mrb[0].mxu0 %v1084
    %v1123 = vpop.f32.mrb[0].mxu0
    %v1124 = vadd.f32 0.0, %v1123
    %v1125 = vpop.f32.mrb[0].mxu0
    %v1126 = vpop.f32.mrb[0].mxu0
    %v1127 = vpop.f32.mrb[0].mxu0
    %1128 = vdwg.mxu0
    %1129 = vrot.lane.b32.xlu0 %v198, 40
    %v1130 = vpop.permute.xlu0 %1129
    %v1132 = vsel %vm151, %v1080, 0
    %v1135 = vsel %vm276, %v1130, 0
    %1137 = vmatprep.subr.bf16.mxu0 0
    %1138 = vmatpush1.bf16.msra.mxu0 %v1135
    %1139 = vmatprep.subr.bf16.mxu0 0
    %1140 = vmatpush1.bf16.msra.mxu0 0
    %1141 = vmatprep.subr.bf16.mxu0 0
    %1142 = vmatpush1.bf16.msra.mxu0 0
    %1143 = vmatprep.subr.bf16.mxu0 0
    %1144 = vmatpush1.bf16.msra.mxu0 0
    %1145 = vmatprep.subr.bf16.mxu0 0
    %1146 = vmatpush1.bf16.msra.mxu0 0
    %1147 = vmatprep.subr.bf16.mxu0 0
    %1148 = vmatpush1.bf16.msra.mxu0 0
    %1149 = vmatprep.subr.bf16.mxu0 0
    %1150 = vmatpush1.bf16.msra.mxu0 0
    %1151 = vmatprep.subr.bf16.mxu0 0
    %1152 = vmatpush1.bf16.msra.mxu0 0
    %1153 = vmatprep.subr.bf16.mxu0 0
    %1154 = vmatpush1.bf16.msra.mxu0 0
    %1155 = vmatprep.subr.bf16.mxu0 0
    %1156 = vmatpush1.bf16.msra.mxu0 0
    %1157 = vmatprep.subr.bf16.mxu0 0
    %1158 = vmatpush1.bf16.msra.mxu0 0
    %1159 = vmatprep.subr.bf16.mxu0 0
    %1160 = vmatpush1.bf16.msra.mxu0 0
    %1161 = vmatprep.subr.bf16.mxu0 0
    %1162 = vmatpush1.bf16.msra.mxu0 0
    %1163 = vmatprep.subr.bf16.mxu0 0
    %1164 = vmatpush1.bf16.msra.mxu0 0
    %1165 = vmatprep.subr.bf16.mxu0 0
    %1166 = vmatpush1.bf16.msra.mxu0 0
    %1167 = vmatprep.subr.bf16.mxu0 0
    %1168 = vmatpush1.bf16.msra.mxu0 0
    %1169 = vmatprep.mubr.bf16.mxu0 0
    %1170 = vmatmul.mubr.bf16.gmra.mrb[0].mxu0 %v1132
    %v1171 = vpop.f32.mrb[0].mxu0
    %v1172 = vadd.f32 0.0, %v1171
    %v1173 = vpop.f32.mrb[0].mxu0
    %v1174 = vpop.f32.mrb[0].mxu0
    %v1175 = vpop.f32.mrb[0].mxu0
    %1176 = vdwg.mxu0
    %v1177 = vpack.c.bf16 %v1172, %v1124
    %v1178 = vld [vmem:[%s3 + $0xc] sm:$0xf]
    %v1180 = vsel %vm151, %v1177, 0
    %v1183 = vsel %vm276, %v1178, 0
    %1185 = vmatprep.subr.bf16.mxu0 0
    %1186 = vmatpush1.bf16.msra.mxu0 %v1183
    %1187 = vmatprep.subr.bf16.mxu0 0
    %1188 = vmatpush1.bf16.msra.mxu0 0
    %1189 = vmatprep.subr.bf16.mxu0 0
    %1190 = vmatpush1.bf16.msra.mxu0 0
    %1191 = vmatprep.subr.bf16.mxu0 0
    %1192 = vmatpush1.bf16.msra.mxu0 0
    %1193 = vmatprep.subr.bf16.mxu0 0
    %1194 = vmatpush1.bf16.msra.mxu0 0
    %1195 = vmatprep.subr.bf16.mxu0 0
    %1196 = vmatpush1.bf16.msra.mxu0 0
    %1197 = vmatprep.subr.bf16.mxu0 0
    %1198 = vmatpush1.bf16.msra.mxu0 0
    %1199 = vmatprep.subr.bf16.mxu0 0
    %1200 = vmatpush1.bf16.msra.mxu0 0
    %1201 = vmatprep.subr.bf16.mxu0 0
    %1202 = vmatpush1.bf16.msra.mxu0 0
    %1203 = vmatprep.subr.bf16.mxu0 0
    %1204 = vmatpush1.bf16.msra.mxu0 0
    %1205 = vmatprep.subr.bf16.mxu0 0
    %1206 = vmatpush1.bf16.msra.mxu0 0
    %1207 = vmatprep.subr.bf16.mxu0 0
    %1208 = vmatpush1.bf16.msra.mxu0 0
    %1209 = vmatprep.subr.bf16.mxu0 0
    %1210 = vmatpush1.bf16.msra.mxu0 0
    %1211 = vmatprep.subr.bf16.mxu0 0
    %1212 = vmatpush1.bf16.msra.mxu0 0
    %1213 = vmatprep.subr.bf16.mxu0 0
    %1214 = vmatpush1.bf16.msra.mxu0 0
    %1215 = vmatprep.subr.bf16.mxu0 0
    %1216 = vmatpush1.bf16.msra.mxu0 0
    %1217 = vmatprep.mubr.bf16.mxu0 0
    %1218 = vmatmul.mubr.bf16.gmra.mrb[0].mxu0 %v1180
    %v1219 = vpop.f32.mrb[0].mxu0
    %v1220 = vadd.f32 0.0, %v1219
    %v1221 = vpop.f32.mrb[0].mxu0
    %v1222 = vpop.f32.mrb[0].mxu0
    %v1223 = vadd.f32 0.0, %v1222
    %v1224 = vpop.f32.mrb[0].mxu0
    %1225 = vdwg.mxu0
    %v1226 = vadd.f32 %v955, %v1220
    %v1227 = vadd.f32 %v956, %v1223
    %v1228 = vld [vmem:[%s4] sm:$0x1]
    %v1230 = vlaneseq
    %v1231 = vshrl.u32 %v1230, 7
    %v1232 = vsub.s32 0, %v1231
    %v1233 = vrot.slane %v1228, %v1232
    %v1235 = vadd.f32 %v1226, %v1233
    %v1236 = vadd.f32 %v1227, %v1233
    %v1237 = vadd.f32 %v63, %v1235
    %v1238 = vadd.f32 %v64, %v1236
    %v1239 = vld [vmem:[%s5] sm:$0x1]
    %v1240 = vld [vmem:[%s6] sm:$0x1]
    %v1241 = vsel %vm93, %v1237, 0.0
    %1242 = vadd.xlane.f32.xlu0 %v1241
    %v1243 = vpop.xlane.xlu0 %1242
    %v1244 = vsel %vm93, %v1238, 0.0
    %1245 = vadd.xlane.f32.xlu0 %v1244
    %v1246 = vpop.xlane.xlu0 %1245
    %v1247 = vrcp.pop 32.0
    %v1248 = vmul.f32 %v1243, %v1247
    %v1249 = vmul.f32 %v1246, %v1247
    %v1250 = vmul.f32 %v1237, %v1237
    %v1251 = vmul.f32 %v1238, %v1238
    %v1252 = vsel %vm93, %v1250, 0.0
    %1253 = vadd.xlane.f32.xlu0 %v1252
    %v1254 = vpop.xlane.xlu0 %1253
    %v1255 = vsel %vm93, %v1251, 0.0
    %1256 = vadd.xlane.f32.xlu0 %v1255
    %v1257 = vpop.xlane.xlu0 %1256
    %v1258 = vmul.f32 %v1254, %v1247
    %v1259 = vmul.f32 %v1257, %v1247
    %v1260 = vmul.f32 %v1248, %v1248
    %v1261 = vmul.f32 %v1249, %v1249
    %v1262 = vsub.f32 %v1258, %v1260
    %v1263 = vsub.f32 %v1259, %v1261
    %v1264 = vmax.f32 %v1262, 0.0
    %v1265 = vmax.f32 %v1263, 0.0
    %v1266 = vsub.f32 %v1237, %v1248
    %v1267 = vsub.f32 %v1238, %v1249
    %v1268 = vadd.f32 %v1264, 1e-05
    %v1269 = vadd.f32 %v1265, 1e-05
    %v1270 = vrsqrt.pop %v1268
    %v1271 = vrsqrt.pop %v1269
    %v1272 = vmul.f32 %v1266, %v1270
    %v1273 = vmul.f32 %v1267, %v1271
    %v1275 = vlaneseq
    %v1276 = vshrl.u32 %v1275, 7
    %v1277 = vsub.s32 0, %v1276
    %v1278 = vrot.slane %v1239, %v1277
    %v1280 = vmul.f32 %v1272, %v1278
    %v1281 = vmul.f32 %v1273, %v1278
    %v1283 = vlaneseq
    %v1284 = vshrl.u32 %v1283, 7
    %v1285 = vsub.s32 0, %v1284
    %v1286 = vrot.slane %v1240, %v1285
    %v1288 = vadd.f32 %v1280, %v1286
    %v1289 = vadd.f32 %v1281, %v1286
    %v1290 = vpack.c.bf16 %v1289, %v1288
    %v1291 = vld [vmem:[%s7] sm:$0xf]
    %v1292 = vld [vmem:[%s7 + $0x4] sm:$0xf]
    %v1293 = vld [vmem:[%s7 + $0x8] sm:$0xf]
    %v1294 = vld [vmem:[%s7 + $0xc] sm:$0xf]
    %v1295 = vld [vmem:[%s8] sm:$0x1]
    %v1297 = vlaneseq
    %v1298 = vshrl.u32 %v1297, 7
    %v1299 = vsub.s32 0, %v1298
    %v1300 = vrot.slane %v1295, %v1299
    %v1306 = vunpack.c.l.b16 %v1291
    %v1307 = vunpack.c.l.b16 %v1292
    %v1308 = vunpack.c.l.b16 %v1293
    %v1309 = vunpack.c.l.b16 %v1294
    %v1310 = vpack.c.b16 %v1307, %v1306
    %v1311 = vpack.c.b16 %v1309, %v1308
    %v1315 = vsel %vm93, %v1290, 0
    %1317 = vmatprep.subr.bf16.mxu0 0
    %1318 = vmatpush1.bf16.msra.mxu0 %v1310
    %1319 = vmatprep.subr.bf16.mxu0 0
    %1320 = vmatpush1.bf16.msra.mxu0 %v1311
    %1321 = vmatprep.subr.bf16.mxu0 0
    %1322 = vmatpush1.bf16.msra.mxu0 0
    %1323 = vmatprep.subr.bf16.mxu0 0
    %1324 = vmatpush1.bf16.msra.mxu0 0
    %1325 = vmatprep.subr.bf16.mxu0 0
    %1326 = vmatpush1.bf16.msra.mxu0 0
    %1327 = vmatprep.subr.bf16.mxu0 0
    %1328 = vmatpush1.bf16.msra.mxu0 0
    %1329 = vmatprep.subr.bf16.mxu0 0
    %1330 = vmatpush1.bf16.msra.mxu0 0
    %1331 = vmatprep.subr.bf16.mxu0 0
    %1332 = vmatpush1.bf16.msra.mxu0 0
    %1333 = vmatprep.subr.bf16.mxu0 0
    %1334 = vmatpush1.bf16.msra.mxu0 0
    %1335 = vmatprep.subr.bf16.mxu0 0
    %1336 = vmatpush1.bf16.msra.mxu0 0
    %1337 = vmatprep.subr.bf16.mxu0 0
    %1338 = vmatpush1.bf16.msra.mxu0 0
    %1339 = vmatprep.subr.bf16.mxu0 0
    %1340 = vmatpush1.bf16.msra.mxu0 0
    %1341 = vmatprep.subr.bf16.mxu0 0
    %1342 = vmatpush1.bf16.msra.mxu0 0
    %1343 = vmatprep.subr.bf16.mxu0 0
    %1344 = vmatpush1.bf16.msra.mxu0 0
    %1345 = vmatprep.subr.bf16.mxu0 0
    %1346 = vmatpush1.bf16.msra.mxu0 0
    %1347 = vmatprep.subr.bf16.mxu0 0
    %1348 = vmatpush1.bf16.msra.mxu0 0
    %1349 = vmatprep.mubr.bf16.mxu0 0
    %1350 = vmatmul.mubr.bf16.gmra.mrb[0].mxu0 %v1315
    %v1351 = vpop.f32.mrb[0].mxu0
    %v1352 = vadd.f32 %v1300, %v1351
    %v1353 = vpop.f32.mrb[0].mxu0
    %v1354 = vpop.f32.mrb[0].mxu0
    %v1355 = vadd.f32 %v1300, %v1354
    %v1356 = vpop.f32.mrb[0].mxu0
    %1357 = vdwg.mxu0
    %v1358 = vmax.f32 %v1352, 0.0
    %v1359 = vmax.f32 %v1355, 0.0
    %v1360 = vpack.c.bf16 %v1359, %v1358
    %v1361 = vld [vmem:[%s9] sm:$0xf]
    %v1362 = vld [vmem:[%s9 + $0x4] sm:$0xf]
    %v1363 = vld [vmem:[%s9 + $0x8] sm:$0xf]
    %v1364 = vld [vmem:[%s9 + $0xc] sm:$0xf]
    %v1365 = vld [vmem:[%s9 + $0x10] sm:$0xf]
    %v1366 = vld [vmem:[%s9 + $0x14] sm:$0xf]
    %v1367 = vld [vmem:[%s9 + $0x18] sm:$0xf]
    %v1368 = vld [vmem:[%s9 + $0x1c] sm:$0xf]
    %v1369 = vld [vmem:[%s10] sm:$0x1]
    %v1371 = vlaneseq
    %v1372 = vshrl.u32 %v1371, 7
    %v1373 = vsub.s32 0, %v1372
    %v1374 = vrot.slane %v1369, %v1373
    %v1384 = vunpack.c.l.b16 %v1361
    %v1385 = vunpack.c.l.b16 %v1362
    %v1386 = vunpack.c.l.b16 %v1363
    %v1387 = vunpack.c.l.b16 %v1364
    %v1388 = vunpack.c.l.b16 %v1365
    %v1389 = vunpack.c.l.b16 %v1366
    %v1390 = vunpack.c.l.b16 %v1367
    %v1391 = vunpack.c.l.b16 %v1368
    %v1392 = vpack.c.b16 %v1385, %v1384
    %v1393 = vpack.c.b16 %v1387, %v1386
    %v1394 = vpack.c.b16 %v1389, %v1388
    %v1395 = vpack.c.b16 %v1391, %v1390
    %vm1400 = vcmask 523264
    %v1402 = vsel %vm1400, %v1360, 0
    %1404 = vmatprep.subr.bf16.mxu0 0
    %1405 = vmatpush1.bf16.msra.mxu0 %v1392
    %1406 = vmatprep.subr.bf16.mxu0 0
    %1407 = vmatpush1.bf16.msra.mxu0 %v1393
    %1408 = vmatprep.subr.bf16.mxu0 0
    %1409 = vmatpush1.bf16.msra.mxu0 %v1394
    %1410 = vmatprep.subr.bf16.mxu0 0
    %1411 = vmatpush1.bf16.msra.mxu0 %v1395
    %1412 = vmatprep.subr.bf16.mxu0 0
    %1413 = vmatpush1.bf16.msra.mxu0 0
    %1414 = vmatprep.subr.bf16.mxu0 0
    %1415 = vmatpush1.bf16.msra.mxu0 0
    %1416 = vmatprep.subr.bf16.mxu0 0
    %1417 = vmatpush1.bf16.msra.mxu0 0
    %1418 = vmatprep.subr.bf16.mxu0 0
    %1419 = vmatpush1.bf16.msra.mxu0 0
    %1420 = vmatprep.subr.bf16.mxu0 0
    %1421 = vmatpush1.bf16.msra.mxu0 0
    %1422 = vmatprep.subr.bf16.mxu0 0
    %1423 = vmatpush1.bf16.msra.mxu0 0
    %1424 = vmatprep.subr.bf16.mxu0 0
    %1425 = vmatpush1.bf16.msra.mxu0 0
    %1426 = vmatprep.subr.bf16.mxu0 0
    %1427 = vmatpush1.bf16.msra.mxu0 0
    %1428 = vmatprep.subr.bf16.mxu0 0
    %1429 = vmatpush1.bf16.msra.mxu0 0
    %1430 = vmatprep.subr.bf16.mxu0 0
    %1431 = vmatpush1.bf16.msra.mxu0 0
    %1432 = vmatprep.subr.bf16.mxu0 0
    %1433 = vmatpush1.bf16.msra.mxu0 0
    %1434 = vmatprep.subr.bf16.mxu0 0
    %1435 = vmatpush1.bf16.msra.mxu0 0
    %1436 = vmatprep.mubr.bf16.mxu0 0
    %1437 = vmatmul.mubr.bf16.gmra.mrb[0].mxu0 %v1402
    %v1438 = vpop.f32.mrb[0].mxu0
    %v1439 = vadd.f32 %v1374, %v1438
    %v1440 = vpop.f32.mrb[0].mxu0
    %v1441 = vpop.f32.mrb[0].mxu0
    %v1442 = vadd.f32 %v1374, %v1441
    %v1443 = vpop.f32.mrb[0].mxu0
    %1444 = vdwg.mxu0
    %v1445 = vadd.f32 %v1288, %v1439
    %v1446 = vadd.f32 %v1289, %v1442
    %v1447 = vld [vmem:[%s11] sm:$0x1]
    %v1448 = vld [vmem:[%s12] sm:$0x1]
    %v1449 = vsel %vm93, %v1445, 0.0
    %1450 = vadd.xlane.f32.xlu0 %v1449
    %v1451 = vpop.xlane.xlu0 %1450
    %v1452 = vsel %vm93, %v1446, 0.0
    %1453 = vadd.xlane.f32.xlu0 %v1452
    %v1454 = vpop.xlane.xlu0 %1453
    %v1455 = vmul.f32 %v1451, %v1247
    %v1456 = vmul.f32 %v1454, %v1247
    %v1457 = vmul.f32 %v1445, %v1445
    %v1458 = vmul.f32 %v1446, %v1446
    %v1459 = vsel %vm93, %v1457, 0.0
    %1460 = vadd.xlane.f32.xlu0 %v1459
    %v1461 = vpop.xlane.xlu0 %1460
    %v1462 = vsel %vm93, %v1458, 0.0
    %1463 = vadd.xlane.f32.xlu0 %v1462
    %v1464 = vpop.xlane.xlu0 %1463
    %v1465 = vmul.f32 %v1461, %v1247
    %v1466 = vmul.f32 %v1464, %v1247
    %v1467 = vmul.f32 %v1455, %v1455
    %v1468 = vmul.f32 %v1456, %v1456
    %v1469 = vsub.f32 %v1465, %v1467
    %v1470 = vsub.f32 %v1466, %v1468
    %v1471 = vmax.f32 %v1469, 0.0
    %v1472 = vmax.f32 %v1470, 0.0
    %v1473 = vsub.f32 %v1445, %v1455
    %v1474 = vsub.f32 %v1446, %v1456
    %v1475 = vadd.f32 %v1471, 1e-05
    %v1476 = vadd.f32 %v1472, 1e-05
    %v1477 = vrsqrt.pop %v1475
    %v1478 = vrsqrt.pop %v1476
    %v1479 = vmul.f32 %v1473, %v1477
    %v1480 = vmul.f32 %v1474, %v1478
    %v1482 = vlaneseq
    %v1483 = vshrl.u32 %v1482, 7
    %v1484 = vsub.s32 0, %v1483
    %v1485 = vrot.slane %v1447, %v1484
    %v1487 = vmul.f32 %v1479, %v1485
    %v1488 = vmul.f32 %v1480, %v1485
    %v1490 = vlaneseq
    %v1491 = vshrl.u32 %v1490, 7
    %v1492 = vsub.s32 0, %v1491
    %v1493 = vrot.slane %v1448, %v1492
    %v1495 = vadd.f32 %v1487, %v1493
    %v1496 = vadd.f32 %v1488, %v1493
    %v1497 = vpack.c.bf16 %v1495, %v1495
    %v1498 = vpack.c.bf16 %v1496, %v1496
    %vm1499 = vcmask 257024
    %1500 = vst.msk [vmem:[#allocation5] sm:$0xf] %vm1499, %v1497
    %1501 = vst.msk [vmem:[#allocation5 + $0x4] sm:$0xf] %vm1499, %v1498
    // Predicated region
    $region58: #{tpu_custom_call.1} parent=1 // pred_check
      _
    $region59: #{tpu_custom_call.1} parent=1 // pred_check_branch
      %1503 = sbr.rel (0) target = $region61
    $region60: #{tpu_custom_call.1} parent=1 // pred_region
      %s1505 = ssub.s32 128, 128
      %1506 = vsyncadd [#allocation4], %s1505
      %s1507 = sshll.u32 [#allocation5], 4
      %s1508 = int_to_ptr.vmem [resolvable:$true] %s1507
      %1513 = dma.vmem_to_hbm [thread:$0]  %s1508, 128, %s13, [#allocation4], 64, 64, 4
    $region61: #{tpu_custom_call.1} parent=1 // pred_fallthru
      _
    // Predicated region
    $region62: #{tpu_custom_call.1} parent=1 // pred_check
      _
    $region63: #{tpu_custom_call.1} parent=1 // pred_check_branch
      %1515 = sbr.rel (0) target = $region65
    $region64: #{tpu_custom_call.1} parent=1 // pred_region
      %1516 = dma.done [#allocation4], 128
    $region65: #{tpu_custom_call.1} parent=1 // pred_fallthru
      _
    %1517 = vsyncpa [#allocation3], 1
    %1518 = vsyncpa [#allocation4], 1

// kernel: tpu_custom_call.1
$region0: #{tpu_custom_call.1}
  #allocation0 [shape = 'u32[]', space=smem, size = 0x4, offset = 0x4, fixed_abs, tag = 'smem constant byte address 0x4 - core index']
  #allocation1 [shape = 'u32[144,128]{1,0:T(1,128)}', space=vmem, size = 0x12000, scoped, tag = 'internal scratch']
  %s0 = inlined_call_operand.hbm [shape: bf16[2,8,32], index: 0, kind: input, shape index: {}]
  %s1 = inlined_call_operand.vmem [shape: bf16[32,96], index: 1, kind: input, shape index: {}]
  %s2 = inlined_call_operand.vmem [shape: f32[1,96], index: 2, kind: input, shape index: {}]
  %s3 = inlined_call_operand.vmem [shape: bf16[32,32], index: 3, kind: input, shape index: {}]
  %s4 = inlined_call_operand.vmem [shape: f32[1,32], index: 4, kind: input, shape index: {}]
  %s5 = inlined_call_operand.vmem [shape: f32[1,32], index: 5, kind: input, shape index: {}]
  %s6 = inlined_call_operand.vmem [shape: f32[1,32], index: 6, kind: input, shape index: {}]
  %s7 = inlined_call_operand.vmem [shape: bf16[32,64], index: 7, kind: input, shape index: {}]
  %s8 = inlined_call_operand.vmem [shape: f32[1,64], index: 8, kind: input, shape index: {}]
  %s9 = inlined_call_operand.vmem [shape: bf16[64,32], index: 9, kind: input, shape index: {}]
  %s10 = inlined_call_operand.vmem [shape: f32[1,32], index: 10, kind: input, shape index: {}]
  %s11 = inlined_call_operand.vmem [shape: f32[1,32], index: 11, kind: input, shape index: {}]
  %s12 = inlined_call_operand.vmem [shape: f32[1,32], index: 12, kind: input, shape index: {}]
  %s13 = inlined_call_operand.hbm [shape: bf16[2,8,32], index: 13, kind: output, shape index: {}]
  %s14 = sld [smem:[#allocation0]]
  $region66: #{tpu_custom_call.1} parent=0
    _
  %s16 = ssub.s32 1, %s14
  %s17 = scalar_select 0, %s16, %s14
  $region1: #{tpu_custom_call.1} parent=0
    #allocation2 [shape = 'u8[4096]{0}', space=vmem, size = 0x1000, scoped, tag = 'input window, operand 0, single buffered']
    #allocation3 [shape = 's32[1]{0}', space=sflag, size = 0x4, scoped, tag = 'scoped memory for tpu_custom_call.1']
    #allocation4 [shape = 's32[1]{0}', space=sflag, size = 0x4, scoped, tag = 'scoped memory for tpu_custom_call.1']
    #allocation5 [shape = 'u8[4096]{0}', space=vmem, size = 0x1000, scoped, tag = 'output window, operand 0, single buffered']
    %18 = vsyncpa [#allocation3], 0
    %19 = vsyncpa [#allocation4], 0
    // Predicated region
    $region2: #{tpu_custom_call.1} parent=1 // pred_check
      _
    $region3: #{tpu_custom_call.1} parent=1 // pred_check_branch
      %21 = sbr.rel (0) target = $region5
    $region4: #{tpu_custom_call.1} parent=1 // pred_region
      %s23 = ssub.s32 128, 128
      %24 = vsyncadd [#allocation3], %s23
      %s25 = sshll.u32 [#allocation2], 4
      %s26 = int_to_ptr.vmem [resolvable:$true] %s25
      %31 = dma.hbm_to_vmem [thread:$0]  %s0, 128, %s26, [#allocation3], 64, 64, 4
    $region5: #{tpu_custom_call.1} parent=1 // pred_fallthru
      _
    // Predicated region
    $region6: #{tpu_custom_call.1} parent=1 // pred_check
      _
    $region7: #{tpu_custom_call.1} parent=1 // pred_check_branch
      %33 = sbr.rel (0) target = $region9
    $region8: #{tpu_custom_call.1} parent=1 // pred_region
      _
    $region9: #{tpu_custom_call.1} parent=1 // pred_fallthru
      _
    // Predicated region
    $region10: #{tpu_custom_call.1} parent=1 // pred_check
      _
    $region11: #{tpu_custom_call.1} parent=1 // pred_check_branch
      %35 = sbr.rel (0) target = $region13
    $region12: #{tpu_custom_call.1} parent=1 // pred_region
      _
    $region13: #{tpu_custom_call.1} parent=1 // pred_fallthru
      _
    // Predicated region
    $region14: #{tpu_custom_call.1} parent=1 // pred_check
      _
    $region15: #{tpu_custom_call.1} parent=1 // pred_check_branch
      %37 = sbr.rel (0) target = $region17
    $region16: #{tpu_custom_call.1} parent=1 // pred_region
      _
    $region17: #{tpu_custom_call.1} parent=1 // pred_fallthru
      _
    // Predicated region
    $region18: #{tpu_custom_call.1} parent=1 // pred_check
      _
    $region19: #{tpu_custom_call.1} parent=1 // pred_check_branch
      %39 = sbr.rel (0) target = $region21
    $region20: #{tpu_custom_call.1} parent=1 // pred_region
      _
    $region21: #{tpu_custom_call.1} parent=1 // pred_fallthru
      _
    // Predicated region
    $region22: #{tpu_custom_call.1} parent=1 // pred_check
      _
    $region23: #{tpu_custom_call.1} parent=1 // pred_check_branch
      %41 = sbr.rel (0) target = $region25
    $region24: #{tpu_custom_call.1} parent=1 // pred_region
      _
    $region25: #{tpu_custom_call.1} parent=1 // pred_fallthru
      _
    // Predicated region
    $region26: #{tpu_custom_call.1} parent=1 // pred_check
      _
    $region27: #{tpu_custom_call.1} parent=1 // pred_check_branch
      %43 = sbr.rel (0) target = $region29
    $region28: #{tpu_custom_call.1} parent=1 // pred_region
      _
    $region29: #{tpu_custom_call.1} parent=1 // pred_fallthru
      _
    // Predicated region
    $region30: #{tpu_custom_call.1} parent=1 // pred_check
      _
    $region31: #{tpu_custom_call.1} parent=1 // pred_check_branch
      %45 = sbr.rel (0) target = $region33
    $region32: #{tpu_custom_call.1} parent=1 // pred_region
      _
    $region33: #{tpu_custom_call.1} parent=1 // pred_fallthru
      _
    // Predicated region
    $region34: #{tpu_custom_call.1} parent=1 // pred_check
      _
    $region35: #{tpu_custom_call.1} parent=1 // pred_check_branch
      %47 = sbr.rel (0) target = $region37
    $region36: #{tpu_custom_call.1} parent=1 // pred_region
      _
    $region37: #{tpu_custom_call.1} parent=1 // pred_fallthru
      _
    // Predicated region
    $region38: #{tpu_custom_call.1} parent=1 // pred_check
      _
    $region39: #{tpu_custom_call.1} parent=1 // pred_check_branch
      %49 = sbr.rel (0) target = $region41
    $region40: #{tpu_custom_call.1} parent=1 // pred_region
      _
    $region41: #{tpu_custom_call.1} parent=1 // pred_fallthru
      _
    // Predicated region
    $region42: #{tpu_custom_call.1} parent=1 // pred_check
      _
    $region43: #{tpu_custom_call.1} parent=1 // pred_check_branch
      %51 = sbr.rel (0) target = $region45
    $region44: #{tpu_custom_call.1} parent=1 // pred_region
      _
    $region45: #{tpu_custom_call.1} parent=1 // pred_fallthru
      _
    // Predicated region
    $region46: #{tpu_custom_call.1} parent=1 // pred_check
      _
    $region47: #{tpu_custom_call.1} parent=1 // pred_check_branch
      %53 = sbr.rel (0) target = $region49
    $region48: #{tpu_custom_call.1} parent=1 // pred_region
      _
    $region49: #{tpu_custom_call.1} parent=1 // pred_fallthru
      _
    // Predicated region
    $region50: #{tpu_custom_call.1} parent=1 // pred_check
      _
    $region51: #{tpu_custom_call.1} parent=1 // pred_check_branch
      %55 = sbr.rel (0) target = $region53
    $region52: #{tpu_custom_call.1} parent=1 // pred_region
      _
    $region53: #{tpu_custom_call.1} parent=1 // pred_fallthru
      _
    // Predicated region
    $region54: #{tpu_custom_call.1} parent=1 // pred_check
      _
    $region55: #{tpu_custom_call.1} parent=1 // pred_check_branch
      %57 = sbr.rel (0) target = $region57
    $region56: #{tpu_custom_call.1} parent=1 // pred_region
      %58 = dma.done [#allocation3], 128
    $region57: #{tpu_custom_call.1} parent=1 // pred_fallthru
      _
    %v61 = vld [vmem:[#allocation2] sm:$0xf]
    %v62 = vld [vmem:[#allocation2 + $0x4] sm:$0xf]
    %v63 = vunpack.c.l.bf16 %v61
    %v64 = vunpack.c.l.bf16 %v62
    %v65 = vld [vmem:[%s1] sm:$0xf]
    %v66 = vld [vmem:[%s1 + $0x4] sm:$0xf]
    %v67 = vld [vmem:[%s1 + $0x8] sm:$0xf]
    %v68 = vld [vmem:[%s1 + $0xc] sm:$0xf]
    %v69 = vld [vmem:[%s2] sm:$0x1]
    %v71 = vlaneseq
    %v72 = vshrl.u32 %v71, 7
    %v73 = vsub.s32 0, %v72
    %v74 = vrot.slane %v69, %v73
    %v78 = vunpack.c.l.b16 %v61
    %v79 = vunpack.c.l.b16 %v62
    %v80 = vpack.c.b16 %v79, %v78
    %v85 = vunpack.c.l.b16 %v65
    %v86 = vunpack.c.l.b16 %v66
    %v87 = vunpack.c.l.b16 %v67
    %v88 = vunpack.c.l.b16 %v68
    %v89 = vpack.c.b16 %v86, %v85
    %v90 = vpack.c.b16 %v88, %v87
    %vm93 = vcmask 261120
    %v95 = vsel %vm93, %v80, 0
    %97 = vmatprep.subr.bf16.mxu0 0
    %98 = vmatpush1.bf16.msra.mxu0 %v89
    %99 = vmatprep.subr.bf16.mxu0 0
    %100 = vmatpush1.bf16.msra.mxu0 %v90
    %101 = vmatprep.subr.bf16.mxu0 0
    %102 = vmatpush1.bf16.msra.mxu0 0
    %103 = vmatprep.subr.bf16.mxu0 0
    %104 = vmatpush1.bf16.msra.mxu0 0
    %105 = vmatprep.subr.bf16.mxu0 0
    %106 = vmatpush1.bf16.msra.mxu0 0
    %107 = vmatprep.subr.bf16.mxu0 0
    %108 = vmatpush1.bf16.msra.mxu0 0
    %109 = vmatprep.subr.bf16.mxu0 0
    %110 = vmatpush1.bf16.msra.mxu0 0
    %111 = vmatprep.subr.bf16.mxu0 0
    %112 = vmatpush1.bf16.msra.mxu0 0
    %113 = vmatprep.subr.bf16.mxu0 0
    %114 = vmatpush1.bf16.msra.mxu0 0
    %115 = vmatprep.subr.bf16.mxu0 0
    %116 = vmatpush1.bf16.msra.mxu0 0
    %117 = vmatprep.subr.bf16.mxu0 0
    %118 = vmatpush1.bf16.msra.mxu0 0
    %119 = vmatprep.subr.bf16.mxu0 0
    %120 = vmatpush1.bf16.msra.mxu0 0
    %121 = vmatprep.subr.bf16.mxu0 0
    %122 = vmatpush1.bf16.msra.mxu0 0
    %123 = vmatprep.subr.bf16.mxu0 0
    %124 = vmatpush1.bf16.msra.mxu0 0
    %125 = vmatprep.subr.bf16.mxu0 0
    %126 = vmatpush1.bf16.msra.mxu0 0
    %127 = vmatprep.subr.bf16.mxu0 0
    %128 = vmatpush1.bf16.msra.mxu0 0
    %129 = vmatprep.mubr.bf16.mxu0 0
    %130 = vmatmul.mubr.bf16.gmra.mrb[0].mxu0 %v95
    %v131 = vpop.f32.mrb[0].mxu0
    %v132 = vadd.f32 %v74, %v131
    %v133 = vpop.f32.mrb[0].mxu0
    %v134 = vpop.f32.mrb[0].mxu0
    %v135 = vadd.f32 %v74, %v134
    %v136 = vpop.f32.mrb[0].mxu0
    %137 = vdwg.mxu0
    %v138 = vpack.c.bf16 %v135, %v132
    %v139 = vmul.bf16 %v138, 1052065461
    %v141 = vunpack.c.l.b16 %v139
    %v142 = vunpack.c.h.b16 %v139
    %v143 = vpack.c.b16 %v141, %v141
    %v144 = vpack.c.b16 %v142, %v142
    %v146 = vunpack.c.l.b16 %v138
    %v147 = vunpack.c.h.b16 %v138
    %v148 = vpack.c.b16 %v146, %v146
    %149 = vrot.lane.b32.xlu0 %v148, 96
    %v150 = vpop.permute.xlu0 %149
    %vm151 = vcmask 64512
    %v153 = vsel %vm151, %v143, 0
    %v156 = vsel %vm151, %v150, 0
    %158 = vmatprep.subr.bf16.mxu0 0
    %159 = vmatpush1.bf16.xpose.msra.mxu0 %v156
    %160 = vmatprep.subr.bf16.mxu0 0
    %161 = vmatpush1.bf16.xpose.msra.mxu0 0
    %162 = vmatprep.subr.bf16.mxu0 0
    %163 = vmatpush1.bf16.xpose.msra.mxu0 0
    %164 = vmatprep.subr.bf16.mxu0 0
    %165 = vmatpush1.bf16.xpose.msra.mxu0 0
    %166 = vmatprep.subr.bf16.mxu0 0
    %167 = vmatpush1.bf16.xpose.msra.mxu0 0
    %168 = vmatprep.subr.bf16.mxu0 0
    %169 = vmatpush1.bf16.xpose.msra.mxu0 0
    %170 = vmatprep.subr.bf16.mxu0 0
    %171 = vmatpush1.bf16.xpose.msra.mxu0 0
    %172 = vmatprep.subr.bf16.mxu0 0
    %173 = vmatpush1.bf16.xpose.msra.mxu0 0
    %174 = vmatprep.subr.bf16.mxu0 0
    %175 = vmatpush1.bf16.xpose.msra.mxu0 0
    %176 = vmatprep.subr.bf16.mxu0 0
    %177 = vmatpush1.bf16.xpose.msra.mxu0 0
    %178 = vmatprep.subr.bf16.mxu0 0
    %179 = vmatpush1.bf16.xpose.msra.mxu0 0
    %180 = vmatprep.subr.bf16.mxu0 0
    %181 = vmatpush1.bf16.xpose.msra.mxu0 0
    %182 = vmatprep.subr.bf16.mxu0 0
    %183 = vmatpush1.bf16.xpose.msra.mxu0 0
    %184 = vmatprep.subr.bf16.mxu0 0
    %185 = vmatpush1.bf16.xpose.msra.mxu0 0
    %186 = vmatprep.subr.bf16.mxu0 0
    %187 = vmatpush1.bf16.xpose.msra.mxu0 0
    %188 = vmatprep.subr.bf16.mxu0 0
    %189 = vmatpush1.bf16.xpose.msra.mxu0 0
    %190 = vmatprep.mubr.bf16.mxu0 0
    %191 = vmatmul.mubr.bf16.gmra.mrb[0].mxu0 %v153
    %v192 = vpop.f32.mrb[0].mxu0
    %v193 = vadd.f32 0.0, %v192
    %v194 = vpop.f32.mrb[0].mxu0
    %v195 = vpop.f32.mrb[0].mxu0
    %v196 = vpop.f32.mrb[0].mxu0
    %197 = vdwg.mxu0
    %v198 = vpack.c.b16 %v147, %v147
    %199 = vrot.lane.b32.xlu0 %v198, 96
    %v200 = vpop.permute.xlu0 %199
    %v202 = vsel %vm151, %v144, 0
    %v205 = vsel %vm151, %v200, 0
    %207 = vmatprep.subr.bf16.mxu0 0
    %208 = vmatpush1.bf16.xpose.msra.mxu0 %v205
    %209 = vmatprep.subr.bf16.mxu0 0
    %210 = vmatpush1.bf16.xpose.msra.mxu0 0
    %211 = vmatprep.subr.bf16.mxu0 0
    %212 = vmatpush1.bf16.xpose.msra.mxu0 0
    %213 = vmatprep.subr.bf16.mxu0 0
    %214 = vmatpush1.bf16.xpose.msra.mxu0 0
    %215 = vmatprep.subr.bf16.mxu0 0
    %216 = vmatpush1.bf16.xpose.msra.mxu0 0
    %217 = vmatprep.subr.bf16.mxu0 0
    %218 = vmatpush1.bf16.xpose.msra.mxu0 0
    %219 = vmatprep.subr.bf16.mxu0 0
    %220 = vmatpush1.bf16.xpose.msra.mxu0 0
    %221 = vmatprep.subr.bf16.mxu0 0
    %222 = vmatpush1.bf16.xpose.msra.mxu0 0
    %223 = vmatprep.subr.bf16.mxu0 0
    %224 = vmatpush1.bf16.xpose.msra.mxu0 0
    %225 = vmatprep.subr.bf16.mxu0 0
    %226 = vmatpush1.bf16.xpose.msra.mxu0 0
    %227 = vmatprep.subr.bf16.mxu0 0
    %228 = vmatpush1.bf16.xpose.msra.mxu0 0
    %229 = vmatprep.subr.bf16.mxu0 0
    %230 = vmatpush1.bf16.xpose.msra.mxu0 0
    %231 = vmatprep.subr.bf16.mxu0 0
    %232 = vmatpush1.bf16.xpose.msra.mxu0 0
    %233 = vmatprep.subr.bf16.mxu0 0
    %234 = vmatpush1.bf16.xpose.msra.mxu0 0
    %235 = vmatprep.subr.bf16.mxu0 0
    %236 = vmatpush1.bf16.xpose.msra.mxu0 0
    %237 = vmatprep.subr.bf16.mxu0 0
    %238 = vmatpush1.bf16.xpose.msra.mxu0 0
    %239 = vmatprep.mubr.bf16.mxu0 0
    %240 = vmatmul.mubr.bf16.gmra.mrb[0].mxu0 %v202
    %v241 = vpop.f32.mrb[0].mxu0
    %v242 = vadd.f32 0.0, %v241
    %v243 = vpop.f32.mrb[0].mxu0
    %v244 = vpop.f32.mrb[0].mxu0
    %v245 = vpop.f32.mrb[0].mxu0
    %246 = vdwg.mxu0
    %v247 = vsel %vm151, %v193, -inf
    %248 = vmax.xlane.f32.xlu0 %v247
    %v249 = vpop.xlane.xlu0 %248
    %v250 = vsel %vm151, %v242, -inf
    %251 = vmax.xlane.f32.xlu0 %v250
    %v252 = vpop.xlane.xlu0 %251
    %v253 = vsub.f32 %v193, %v249
    %v254 = vsub.f32 %v242, %v252
    %v255 = vmul.f32 %v253, 1.442695
    %v256 = vpow.pop %v255
    %v257 = vmul.f32 %v254, 1.442695
    %v258 = vpow.pop %v257
    %v259 = vsel %vm151, %v256, 0.0
    %260 = vadd.xlane.f32.xlu0 %v259
    %v261 = vpop.xlane.xlu0 %260
    %v262 = vsel %vm151, %v258, 0.0
    %263 = vadd.xlane.f32.xlu0 %v262
    %v264 = vpop.xlane.xlu0 %263
    %v265 = vrcp.pop %v261
    %v266 = vrcp.pop %v264
    %v267 = vmul.f32 %v256, %v265
    %v268 = vmul.f32 %v258, %v266
    %v269 = vpack.c.bf16 %v267, %v267
    %v270 = vpack.c.bf16 %v268, %v268
    %271 = vrot.lane.b32.xlu0 %v148, 64
    %v272 = vpop.permute.xlu0 %271
    %v274 = vsel %vm151, %v269, 0
    %vm276 = vcmask 1043456
    %v278 = vsel %vm276, %v272, 0
    %280 = vmatprep.subr.bf16.mxu0 0
    %281 = vmatpush1.bf16.msra.mxu0 %v278
    %282 = vmatprep.subr.bf16.mxu0 0
    %283 = vmatpush1.bf16.msra.mxu0 0
    %284 = vmatprep.subr.bf16.mxu0 0
    %285 = vmatpush1.bf16.msra.mxu0 0
    %286 = vmatprep.subr.bf16.mxu0 0
    %287 = vmatpush1.bf16.msra.mxu0 0
    %288 = vmatprep.subr.bf16.mxu0 0
    %289 = vmatpush1.bf16.msra.mxu0 0
    %290 = vmatprep.subr.bf16.mxu0 0
    %291 = vmatpush1.bf16.msra.mxu0 0
    %292 = vmatprep.subr.bf16.mxu0 0
    %293 = vmatpush1.bf16.msra.mxu0 0
    %294 = vmatprep.subr.bf16.mxu0 0
    %295 = vmatpush1.bf16.msra.mxu0 0
    %296 = vmatprep.subr.bf16.mxu0 0
    %297 = vmatpush1.bf16.msra.mxu0 0
    %298 = vmatprep.subr.bf16.mxu0 0
    %299 = vmatpush1.bf16.msra.mxu0 0
    %300 = vmatprep.subr.bf16.mxu0 0
    %301 = vmatpush1.bf16.msra.mxu0 0
    %302 = vmatprep.subr.bf16.mxu0 0
    %303 = vmatpush1.bf16.msra.mxu0 0
    %304 = vmatprep.subr.bf16.mxu0 0
    %305 = vmatpush1.bf16.msra.mxu0 0
    %306 = vmatprep.subr.bf16.mxu0 0
    %307 = vmatpush1.bf16.msra.mxu0 0
    %308 = vmatprep.subr.bf16.mxu0 0
    %309 = vmatpush1.bf16.msra.mxu0 0
    %310 = vmatprep.subr.bf16.mxu0 0
    %311 = vmatpush1.bf16.msra.mxu0 0
    %312 = vmatprep.mubr.bf16.mxu0 0
    %313 = vmatmul.mubr.bf16.gmra.mrb[0].mxu0 %v274
    %v314 = vpop.f32.mrb[0].mxu0
    %v315 = vadd.f32 0.0, %v314
    %v316 = vpop.f32.mrb[0].mxu0
    %v317 = vpop.f32.mrb[0].mxu0
    %v318 = vpop.f32.mrb[0].mxu0
    %319 = vdwg.mxu0
    %320 = vrot.lane.b32.xlu0 %v198, 64
    %v321 = vpop.permute.xlu0 %320
    %v323 = vsel %vm151, %v270, 0
    %v326 = vsel %vm276, %v321, 0
    %328 = vmatprep.subr.bf16.mxu0 0
    %329 = vmatpush1.bf16.msra.mxu0 %v326
    %330 = vmatprep.subr.bf16.mxu0 0
    %331 = vmatpush1.bf16.msra.mxu0 0
    %332 = vmatprep.subr.bf16.mxu0 0
    %333 = vmatpush1.bf16.msra.mxu0 0
    %334 = vmatprep.subr.bf16.mxu0 0
    %335 = vmatpush1.bf16.msra.mxu0 0
    %336 = vmatprep.subr.bf16.mxu0 0
    %337 = vmatpush1.bf16.msra.mxu0 0
    %338 = vmatprep.subr.bf16.mxu0 0
    %339 = vmatpush1.bf16.msra.mxu0 0
    %340 = vmatprep.subr.bf16.mxu0 0
    %341 = vmatpush1.bf16.msra.mxu0 0
    %342 = vmatprep.subr.bf16.mxu0 0
    %343 = vmatpush1.bf16.msra.mxu0 0
    %344 = vmatprep.subr.bf16.mxu0 0
    %345 = vmatpush1.bf16.msra.mxu0 0
    %346 = vmatprep.subr.bf16.mxu0 0
    %347 = vmatpush1.bf16.msra.mxu0 0
    %348 = vmatprep.subr.bf16.mxu0 0
    %349 = vmatpush1.bf16.msra.mxu0 0
    %350 = vmatprep.subr.bf16.mxu0 0
    %351 = vmatpush1.bf16.msra.mxu0 0
    %352 = vmatprep.subr.bf16.mxu0 0
    %353 = vmatpush1.bf16.msra.mxu0 0
    %354 = vmatprep.subr.bf16.mxu0 0
    %355 = vmatpush1.bf16.msra.mxu0 0
    %356 = vmatprep.subr.bf16.mxu0 0
    %357 = vmatpush1.bf16.msra.mxu0 0
    %358 = vmatprep.subr.bf16.mxu0 0
    %359 = vmatpush1.bf16.msra.mxu0 0
    %360 = vmatprep.mubr.bf16.mxu0 0
    %361 = vmatmul.mubr.bf16.gmra.mrb[0].mxu0 %v323
    %v362 = vpop.f32.mrb[0].mxu0
    %v363 = vadd.f32 0.0, %v362
    %v364 = vpop.f32.mrb[0].mxu0
    %v365 = vpop.f32.mrb[0].mxu0
    %v366 = vpop.f32.mrb[0].mxu0
    %367 = vdwg.mxu0
    %v368 = vpack.c.bf16 %v363, %v315
    %v369 = vld [vmem:[%s3] sm:$0xf]
    %370 = vrot.lane.b32.xlu0 %v143, 120
    %v371 = vpop.permute.xlu0 %370
    %372 = vrot.lane.b32.xlu0 %v148, 88
    %v373 = vpop.permute.xlu0 %372
    %v375 = vsel %vm151, %v371, 0
    %v378 = vsel %vm151, %v373, 0
    %380 = vmatprep.subr.bf16.mxu0 0
    %381 = vmatpush1.bf16.xpose.msra.mxu0 %v378
    %382 = vmatprep.subr.bf16.mxu0 0
    %383 = vmatpush1.bf16.xpose.msra.mxu0 0
    %384 = vmatprep.subr.bf16.mxu0 0
    %385 = vmatpush1.bf16.xpose.msra.mxu0 0
    %386 = vmatprep.subr.bf16.mxu0 0
    %387 = vmatpush1.bf16.xpose.msra.mxu0 0
    %388 = vmatprep.subr.bf16.mxu0 0
    %389 = vmatpush1.bf16.xpose.msra.mxu0 0
    %390 = vmatprep.subr.bf16.mxu0 0
    %391 = vmatpush1.bf16.xpose.msra.mxu0 0
    %392 = vmatprep.subr.bf16.mxu0 0
    %393 = vmatpush1.bf16.xpose.msra.mxu0 0
    %394 = vmatprep.subr.bf16.mxu0 0
    %395 = vmatpush1.bf16.xpose.msra.mxu0 0
    %396 = vmatprep.subr.bf16.mxu0 0
    %397 = vmatpush1.bf16.xpose.msra.mxu0 0
    %398 = vmatprep.subr.bf16.mxu0 0
    %399 = vmatpush1.bf16.xpose.msra.mxu0 0
    %400 = vmatprep.subr.bf16.mxu0 0
    %401 = vmatpush1.bf16.xpose.msra.mxu0 0
    %402 = vmatprep.subr.bf16.mxu0 0
    %403 = vmatpush1.bf16.xpose.msra.mxu0 0
    %404 = vmatprep.subr.bf16.mxu0 0
    %405 = vmatpush1.bf16.xpose.msra.mxu0 0
    %406 = vmatprep.subr.bf16.mxu0 0
    %407 = vmatpush1.bf16.xpose.msra.mxu0 0
    %408 = vmatprep.subr.bf16.mxu0 0
    %409 = vmatpush1.bf16.xpose.msra.mxu0 0
    %410 = vmatprep.subr.bf16.mxu0 0
    %411 = vmatpush1.bf16.xpose.msra.mxu0 0
    %412 = vmatprep.mubr.bf16.mxu0 0
    %413 = vmatmul.mubr.bf16.gmra.mrb[0].mxu0 %v375
    %v414 = vpop.f32.mrb[0].mxu0
    %v415 = vadd.f32 0.0, %v414
    %v416 = vpop.f32.mrb[0].mxu0
    %v417 = vpop.f32.mrb[0].mxu0
    %v418 = vpop.f32.mrb[0].mxu0
    %419 = vdwg.mxu0
    %420 = vrot.lane.b32.xlu0 %v144, 120
    %v421 = vpop.permute.xlu0 %420
    %422 = vrot.lane.b32.xlu0 %v198, 88
    %v423 = vpop.permute.xlu0 %422
    %v425 = vsel %vm151, %v421, 0
    %v428 = vsel %vm151, %v423, 0
    %430 = vmatprep.subr.bf16.mxu0 0
    %431 = vmatpush1.bf16.xpose.msra.mxu0 %v428
    %432 = vmatprep.subr.bf16.mxu0 0
    %433 = vmatpush1.bf16.xpose.msra.mxu0 0
    %434 = vmatprep.subr.bf16.mxu0 0
    %435 = vmatpush1.bf16.xpose.msra.mxu0 0
    %436 = vmatprep.subr.bf16.mxu0 0
    %437 = vmatpush1.bf16.xpose.msra.mxu0 0
    %438 = vmatprep.subr.bf16.mxu0 0
    %439 = vmatpush1.bf16.xpose.msra.mxu0 0
    %440 = vmatprep.subr.bf16.mxu0 0
    %441 = vmatpush1.bf16.xpose.msra.mxu0 0
    %442 = vmatprep.subr.bf16.mxu0 0
    %443 = vmatpush1.bf16.xpose.msra.mxu0 0
    %444 = vmatprep.subr.bf16.mxu0 0
    %445 = vmatpush1.bf16.xpose.msra.mxu0 0
    %446 = vmatprep.subr.bf16.mxu0 0
    %447 = vmatpush1.bf16.xpose.msra.mxu0 0
    %448 = vmatprep.subr.bf16.mxu0 0
    %449 = vmatpush1.bf16.xpose.msra.mxu0 0
    %450 = vmatprep.subr.bf16.mxu0 0
    %451 = vmatpush1.bf16.xpose.msra.mxu0 0
    %452 = vmatprep.subr.bf16.mxu0 0
    %453 = vmatpush1.bf16.xpose.msra.mxu0 0
    %454 = vmatprep.subr.bf16.mxu0 0
    %455 = vmatpush1.bf16.xpose.msra.mxu0 0
    %456 = vmatprep.subr.bf16.mxu0 0
    %457 = vmatpush1.bf16.xpose.msra.mxu0 0
    %458 = vmatprep.subr.bf16.mxu0 0
    %459 = vmatpush1.bf16.xpose.msra.mxu0 0
    %460 = vmatprep.subr.bf16.mxu0 0
    %461 = vmatpush1.bf16.xpose.msra.mxu0 0
    %462 = vmatprep.mubr.bf16.mxu0 0
    %463 = vmatmul.mubr.bf16.gmra.mrb[0].mxu0 %v425
    %v464 = vpop.f32.mrb[0].mxu0
    %v465 = vadd.f32 0.0, %v464
    %v466 = vpop.f32.mrb[0].mxu0
    %v467 = vpop.f32.mrb[0].mxu0
    %v468 = vpop.f32.mrb[0].mxu0
    %469 = vdwg.mxu0
    %v470 = vsel %vm151, %v415, -inf
    %471 = vmax.xlane.f32.xlu0 %v470
    %v472 = vpop.xlane.xlu0 %471
    %v473 = vsel %vm151, %v465, -inf
    %474 = vmax.xlane.f32.xlu0 %v473
    %v475 = vpop.xlane.xlu0 %474
    %v476 = vsub.f32 %v415, %v472
    %v477 = vsub.f32 %v465, %v475
    %v478 = vmul.f32 %v476, 1.442695
    %v479 = vpow.pop %v478
    %v480 = vmul.f32 %v477, 1.442695
    %v481 = vpow.pop %v480
    %v482 = vsel %vm151, %v479, 0.0
    %483 = vadd.xlane.f32.xlu0 %v482
    %v484 = vpop.xlane.xlu0 %483
    %v485 = vsel %vm151, %v481, 0.0
    %486 = vadd.xlane.f32.xlu0 %v485
    %v487 = vpop.xlane.xlu0 %486
    %v488 = vrcp.pop %v484
    %v489 = vrcp.pop %v487
    %v490 = vmul.f32 %v479, %v488
    %v491 = vmul.f32 %v481, %v489
    %v492 = vpack.c.bf16 %v490, %v490
    %v493 = vpack.c.bf16 %v491, %v491
    %494 = vrot.lane.b32.xlu0 %v148, 56
    %v495 = vpop.permute.xlu0 %494
    %v497 = vsel %vm151, %v492, 0
    %v500 = vsel %vm276, %v495, 0
    %502 = vmatprep.subr.bf16.mxu0 0
    %503 = vmatpush1.bf16.msra.mxu0 %v500
    %504 = vmatprep.subr.bf16.mxu0 0
    %505 = vmatpush1.bf16.msra.mxu0 0
    %506 = vmatprep.subr.bf16.mxu0 0
    %507 = vmatpush1.bf16.msra.mxu0 0
    %508 = vmatprep.subr.bf16.mxu0 0
    %509 = vmatpush1.bf16.msra.mxu0 0
    %510 = vmatprep.subr.bf16.mxu0 0
    %511 = vmatpush1.bf16.msra.mxu0 0
    %512 = vmatprep.subr.bf16.mxu0 0
    %513 = vmatpush1.bf16.msra.mxu0 0
    %514 = vmatprep.subr.bf16.mxu0 0
    %515 = vmatpush1.bf16.msra.mxu0 0
    %516 = vmatprep.subr.bf16.mxu0 0
    %517 = vmatpush1.bf16.msra.mxu0 0
    %518 = vmatprep.subr.bf16.mxu0 0
    %519 = vmatpush1.bf16.msra.mxu0 0
    %520 = vmatprep.subr.bf16.mxu0 0
    %521 = vmatpush1.bf16.msra.mxu0 0
    %522 = vmatprep.subr.bf16.mxu0 0
    %523 = vmatpush1.bf16.msra.mxu0 0
    %524 = vmatprep.subr.bf16.mxu0 0
    %525 = vmatpush1.bf16.msra.mxu0 0
    %526 = vmatprep.subr.bf16.mxu0 0
    %527 = vmatpush1.bf16.msra.mxu0 0
    %528 = vmatprep.subr.bf16.mxu0 0
    %529 = vmatpush1.bf16.msra.mxu0 0
    %530 = vmatprep.subr.bf16.mxu0 0
    %531 = vmatpush1.bf16.msra.mxu0 0
    %532 = vmatprep.subr.bf16.mxu0 0
    %533 = vmatpush1.bf16.msra.mxu0 0
    %534 = vmatprep.mubr.bf16.mxu0 0
    %535 = vmatmul.mubr.bf16.gmra.mrb[0].mxu0 %v497
    %v536 = vpop.f32.mrb[0].mxu0
    %v537 = vadd.f32 0.0, %v536
    %v538 = vpop.f32.mrb[0].mxu0
    %v539 = vpop.f32.mrb[0].mxu0
    %v540 = vpop.f32.mrb[0].mxu0
    %541 = vdwg.mxu0
    %542 = vrot.lane.b32.xlu0 %v198, 56
    %v543 = vpop.permute.xlu0 %542
    %v545 = vsel %vm151, %v493, 0
    %v548 = vsel %vm276, %v543, 0
    %550 = vmatprep.subr.bf16.mxu0 0
    %551 = vmatpush1.bf16.msra.mxu0 %v548
    %552 = vmatprep.subr.bf16.mxu0 0
    %553 = vmatpush1.bf16.msra.mxu0 0
    %554 = vmatprep.subr.bf16.mxu0 0
    %555 = vmatpush1.bf16.msra.mxu0 0
    %556 = vmatprep.subr.bf16.mxu0 0
    %557 = vmatpush1.bf16.msra.mxu0 0
    %558 = vmatprep.subr.bf16.mxu0 0
    %559 = vmatpush1.bf16.msra.mxu0 0
    %560 = vmatprep.subr.bf16.mxu0 0
    %561 = vmatpush1.bf16.msra.mxu0 0
    %562 = vmatprep.subr.bf16.mxu0 0
    %563 = vmatpush1.bf16.msra.mxu0 0
    %564 = vmatprep.subr.bf16.mxu0 0
    %565 = vmatpush1.bf16.msra.mxu0 0
    %566 = vmatprep.subr.bf16.mxu0 0
    %567 = vmatpush1.bf16.msra.mxu0 0
    %568 = vmatprep.subr.bf16.mxu0 0
    %569 = vmatpush1.bf16.msra.mxu0 0
    %570 = vmatprep.subr.bf16.mxu0 0
    %571 = vmatpush1.bf16.msra.mxu0 0
    %572 = vmatprep.subr.bf16.mxu0 0
    %573 = vmatpush1.bf16.msra.mxu0 0
    %574 = vmatprep.subr.bf16.mxu0 0
    %575 = vmatpush1.bf16.msra.mxu0 0
    %576 = vmatprep.subr.bf16.mxu0 0
    %577 = vmatpush1.bf16.msra.mxu0 0
    %578 = vmatprep.subr.bf16.mxu0 0
    %579 = vmatpush1.bf16.msra.mxu0 0
    %580 = vmatprep.subr.bf16.mxu0 0
    %581 = vmatpush1.bf16.msra.mxu0 0
    %582 = vmatprep.mubr.bf16.mxu0 0
    %583 = vmatmul.mubr.bf16.gmra.mrb[0].mxu0 %v545
    %v584 = vpop.f32.mrb[0].mxu0
    %v585 = vadd.f32 0.0, %v584
    %v586 = vpop.f32.mrb[0].mxu0
    %v587 = vpop.f32.mrb[0].mxu0
    %v588 = vpop.f32.mrb[0].mxu0
    %589 = vdwg.mxu0
    %v590 = vpack.c.bf16 %v585, %v537
    %v591 = vld [vmem:[%s3 + $0x4] sm:$0xf]
    %v593 = vsel %vm151, %v590, 0
    %v596 = vsel %vm276, %v591, 0
    %598 = vmatprep.subr.bf16.mxu0 0
    %599 = vmatpush1.bf16.msra.mxu0 %v596
    %600 = vmatprep.subr.bf16.mxu0 0
    %601 = vmatpush1.bf16.msra.mxu0 0
    %602 = vmatprep.subr.bf16.mxu0 0
    %603 = vmatpush1.bf16.msra.mxu0 0
    %604 = vmatprep.subr.bf16.mxu0 0
    %605 = vmatpush1.bf16.msra.mxu0 0
    %606 = vmatprep.subr.bf16.mxu0 0
    %607 = vmatpush1.bf16.msra.mxu0 0
    %608 = vmatprep.subr.bf16.mxu0 0
    %609 = vmatpush1.bf16.msra.mxu0 0
    %610 = vmatprep.subr.bf16.mxu0 0
    %611 = vmatpush1.bf16.msra.mxu0 0
    %612 = vmatprep.subr.bf16.mxu0 0
    %613 = vmatpush1.bf16.msra.mxu0 0
    %614 = vmatprep.subr.bf16.mxu0 0
    %615 = vmatpush1.bf16.msra.mxu0 0
    %616 = vmatprep.subr.bf16.mxu0 0
    %617 = vmatpush1.bf16.msra.mxu0 0
    %618 = vmatprep.subr.bf16.mxu0 0
    %619 = vmatpush1.bf16.msra.mxu0 0
    %620 = vmatprep.subr.bf16.mxu0 0
    %621 = vmatpush1.bf16.msra.mxu0 0
    %622 = vmatprep.subr.bf16.mxu0 0
    %623 = vmatpush1.bf16.msra.mxu0 0
    %624 = vmatprep.subr.bf16.mxu0 0
    %625 = vmatpush1.bf16.msra.mxu0 0
    %626 = vmatprep.subr.bf16.mxu0 0
    %627 = vmatpush1.bf16.msra.mxu0 0
    %628 = vmatprep.subr.bf16.mxu0 0
    %629 = vmatpush1.bf16.msra.mxu0 0
    %630 = vmatprep.mubr.bf16.mxu0 0
    %631 = vmatmul.mubr.bf16.gmra.mrb[0].mxu0 %v593
    %v632 = vpop.f32.mrb[0].mxu0
    %v633 = vadd.f32 0.0, %v632
    %v634 = vpop.f32.mrb[0].mxu0
    %v635 = vpop.f32.mrb[0].mxu0
    %v636 = vadd.f32 0.0, %v635
    %v637 = vpop.f32.mrb[0].mxu0
    %638 = vdwg.mxu0
    %v640 = vsel %vm151, %v368, 0
    %v643 = vsel %vm276, %v369, 0
    %645 = vmatprep.subr.bf16.mxu0 0
    %646 = vmatpush1.bf16.msra.mxu0 %v643
    %647 = vmatprep.subr.bf16.mxu0 0
    %648 = vmatpush1.bf16.msra.mxu0 0
    %649 = vmatprep.subr.bf16.mxu0 0
    %650 = vmatpush1.bf16.msra.mxu0 0
    %651 = vmatprep.subr.bf16.mxu0 0
    %652 = vmatpush1.bf16.msra.mxu0 0
    %653 = vmatprep.subr.bf16.mxu0 0
    %654 = vmatpush1.bf16.msra.mxu0 0
    %655 = vmatprep.subr.bf16.mxu0 0
    %656 = vmatpush1.bf16.msra.mxu0 0
    %657 = vmatprep.subr.bf16.mxu0 0
    %658 = vmatpush1.bf16.msra.mxu0 0
    %659 = vmatprep.subr.bf16.mxu0 0
    %660 = vmatpush1.bf16.msra.mxu0 0
    %661 = vmatprep.subr.bf16.mxu0 0
    %662 = vmatpush1.bf16.msra.mxu0 0
    %663 = vmatprep.subr.bf16.mxu0 0
    %664 = vmatpush1.bf16.msra.mxu0 0
    %665 = vmatprep.subr.bf16.mxu0 0
    %666 = vmatpush1.bf16.msra.mxu0 0
    %667 = vmatprep.subr.bf16.mxu0 0
    %668 = vmatpush1.bf16.msra.mxu0 0
    %669 = vmatprep.subr.bf16.mxu0 0
    %670 = vmatpush1.bf16.msra.mxu0 0
    %671 = vmatprep.subr.bf16.mxu0 0
    %672 = vmatpush1.bf16.msra.mxu0 0
    %673 = vmatprep.subr.bf16.mxu0 0
    %674 = vmatpush1.bf16.msra.mxu0 0
    %675 = vmatprep.subr.bf16.mxu0 0
    %676 = vmatpush1.bf16.msra.mxu0 0
    %677 = vmatprep.mubr.bf16.mxu0 0
    %678 = vmatmul.mubr.bf16.gmra.mrb[0].mxu0 %v640
    %v679 = vpop.f32.mrb[0].mxu0
    %v680 = vadd.f32 %v633, %v679
    %v681 = vpop.f32.mrb[0].mxu0
    %v682 = vpop.f32.mrb[0].mxu0
    %v683 = vadd.f32 %v636, %v682
    %v684 = vpop.f32.mrb[0].mxu0
    %685 = vdwg.mxu0
    %686 = vrot.lane.b32.xlu0 %v143, 112
    %v687 = vpop.permute.xlu0 %686
    %688 = vrot.lane.b32.xlu0 %v148, 80
    %v689 = vpop.permute.xlu0 %688
    %v691 = vsel %vm151, %v687, 0
    %v694 = vsel %vm151, %v689, 0
    %696 = vmatprep.subr.bf16.mxu0 0
    %697 = vmatpush1.bf16.xpose.msra.mxu0 %v694
    %698 = vmatprep.subr.bf16.mxu0 0
    %699 = vmatpush1.bf16.xpose.msra.mxu0 0
    %700 = vmatprep.subr.bf16.mxu0 0
    %701 = vmatpush1.bf16.xpose.msra.mxu0 0
    %702 = vmatprep.subr.bf16.mxu0 0
    %703 = vmatpush1.bf16.xpose.msra.mxu0 0
    %704 = vmatprep.subr.bf16.mxu0 0
    %705 = vmatpush1.bf16.xpose.msra.mxu0 0
    %706 = vmatprep.subr.bf16.mxu0 0
    %707 = vmatpush1.bf16.xpose.msra.mxu0 0
    %708 = vmatprep.subr.bf16.mxu0 0
    %709 = vmatpush1.bf16.xpose.msra.mxu0 0
    %710 = vmatprep.subr.bf16.mxu0 0
    %711 = vmatpush1.bf16.xpose.msra.mxu0 0
    %712 = vmatprep.subr.bf16.mxu0 0
    %713 = vmatpush1.bf16.xpose.msra.mxu0 0
    %714 = vmatprep.subr.bf16.mxu0 0
    %715 = vmatpush1.bf16.xpose.msra.mxu0 0
    %716 = vmatprep.subr.bf16.mxu0 0
    %717 = vmatpush1.bf16.xpose.msra.mxu0 0
    %718 = vmatprep.subr.bf16.mxu0 0
    %719 = vmatpush1.bf16.xpose.msra.mxu0 0
    %720 = vmatprep.subr.bf16.mxu0 0
    %721 = vmatpush1.bf16.xpose.msra.mxu0 0
    %722 = vmatprep.subr.bf16.mxu0 0
    %723 = vmatpush1.bf16.xpose.msra.mxu0 0
    %724 = vmatprep.subr.bf16.mxu0 0
    %725 = vmatpush1.bf16.xpose.msra.mxu0 0
    %726 = vmatprep.subr.bf16.mxu0 0
    %727 = vmatpush1.bf16.xpose.msra.mxu0 0
    %728 = vmatprep.mubr.bf16.mxu0 0
    %729 = vmatmul.mubr.bf16.gmra.mrb[0].mxu0 %v691
    %v730 = vpop.f32.mrb[0].mxu0
    %v731 = vadd.f32 0.0, %v730
    %v732 = vpop.f32.mrb[0].mxu0
    %v733 = vpop.f32.mrb[0].mxu0
    %v734 = vpop.f32.mrb[0].mxu0
    %735 = vdwg.mxu0
    %736 = vrot.lane.b32.xlu0 %v144, 112
    %v737 = vpop.permute.xlu0 %736
    %738 = vrot.lane.b32.xlu0 %v198, 80
    %v739 = vpop.permute.xlu0 %738
    %v741 = vsel %vm151, %v737, 0
    %v744 = vsel %vm151, %v739, 0
    %746 = vmatprep.subr.bf16.mxu0 0
    %747 = vmatpush1.bf16.xpose.msra.mxu0 %v744
    %748 = vmatprep.subr.bf16.mxu0 0
    %749 = vmatpush1.bf16.xpose.msra.mxu0 0
    %750 = vmatprep.subr.bf16.mxu0 0
    %751 = vmatpush1.bf16.xpose.msra.mxu0 0
    %752 = vmatprep.subr.bf16.mxu0 0
    %753 = vmatpush1.bf16.xpose.msra.mxu0 0
    %754 = vmatprep.subr.bf16.mxu0 0
    %755 = vmatpush1.bf16.xpose.msra.mxu0 0
    %756 = vmatprep.subr.bf16.mxu0 0
    %757 = vmatpush1.bf16.xpose.msra.mxu0 0
    %758 = vmatprep.subr.bf16.mxu0 0
    %759 = vmatpush1.bf16.xpose.msra.mxu0 0
    %760 = vmatprep.subr.bf16.mxu0 0
    %761 = vmatpush1.bf16.xpose.msra.mxu0 0
    %762 = vmatprep.subr.bf16.mxu0 0
    %763 = vmatpush1.bf16.xpose.msra.mxu0 0
    %764 = vmatprep.subr.bf16.mxu0 0
    %765 = vmatpush1.bf16.xpose.msra.mxu0 0
    %766 = vmatprep.subr.bf16.mxu0 0
    %767 = vmatpush1.bf16.xpose.msra.mxu0 0
    %768 = vmatprep.subr.bf16.mxu0 0
    %769 = vmatpush1.bf16.xpose.msra.mxu0 0
    %770 = vmatprep.subr.bf16.mxu0 0
    %771 = vmatpush1.bf16.xpose.msra.mxu0 0
    %772 = vmatprep.subr.bf16.mxu0 0
    %773 = vmatpush1.bf16.xpose.msra.mxu0 0
    %774 = vmatprep.subr.bf16.mxu0 0
    %775 = vmatpush1.bf16.xpose.msra.mxu0 0
    %776 = vmatprep.subr.bf16.mxu0 0
    %777 = vmatpush1.bf16.xpose.msra.mxu0 0
    %778 = vmatprep.mubr.bf16.mxu0 0
    %779 = vmatmul.mubr.bf16.gmra.mrb[0].mxu0 %v741
    %v780 = vpop.f32.mrb[0].mxu0
    %v781 = vadd.f32 0.0, %v780
    %v782 = vpop.f32.mrb[0].mxu0
    %v783 = vpop.f32.mrb[0].mxu0
    %v784 = vpop.f32.mrb[0].mxu0
    %785 = vdwg.mxu0
    %v786 = vsel %vm151, %v731, -inf
    %787 = vmax.xlane.f32.xlu0 %v786
    %v788 = vpop.xlane.xlu0 %787
    %v789 = vsel %vm151, %v781, -inf
    %790 = vmax.xlane.f32.xlu0 %v789
    %v791 = vpop.xlane.xlu0 %790
    %v792 = vsub.f32 %v731, %v788
    %v793 = vsub.f32 %v781, %v791
    %v794 = vmul.f32 %v792, 1.442695
    %v795 = vpow.pop %v794
    %v796 = vmul.f32 %v793, 1.442695
    %v797 = vpow.pop %v796
    %v798 = vsel %vm151, %v795, 0.0
    %799 = vadd.xlane.f32.xlu0 %v798
    %v800 = vpop.xlane.xlu0 %799
    %v801 = vsel %vm151, %v797, 0.0
    %802 = vadd.xlane.f32.xlu0 %v801
    %v803 = vpop.xlane.xlu0 %802
    %v804 = vrcp.pop %v800
    %v805 = vrcp.pop %v803
    %v806 = vmul.f32 %v795, %v804
    %v807 = vmul.f32 %v797, %v805
    %v808 = vpack.c.bf16 %v806, %v806
    %v809 = vpack.c.bf16 %v807, %v807
    %810 = vrot.lane.b32.xlu0 %v148, 48
    %v811 = vpop.permute.xlu0 %810
    %v813 = vsel %vm151, %v808, 0
    %v816 = vsel %vm276, %v811, 0
    %818 = vmatprep.subr.bf16.mxu0 0
    %819 = vmatpush1.bf16.msra.mxu0 %v816
    %820 = vmatprep.subr.bf16.mxu0 0
    %821 = vmatpush1.bf16.msra.mxu0 0
    %822 = vmatprep.subr.bf16.mxu0 0
    %823 = vmatpush1.bf16.msra.mxu0 0
    %824 = vmatprep.subr.bf16.mxu0 0
    %825 = vmatpush1.bf16.msra.mxu0 0
    %826 = vmatprep.subr.bf16.mxu0 0
    %827 = vmatpush1.bf16.msra.mxu0 0
    %828 = vmatprep.subr.bf16.mxu0 0
    %829 = vmatpush1.bf16.msra.mxu0 0
    %830 = vmatprep.subr.bf16.mxu0 0
    %831 = vmatpush1.bf16.msra.mxu0 0
    %832 = vmatprep.subr.bf16.mxu0 0
    %833 = vmatpush1.bf16.msra.mxu0 0
    %834 = vmatprep.subr.bf16.mxu0 0
    %835 = vmatpush1.bf16.msra.mxu0 0
    %836 = vmatprep.subr.bf16.mxu0 0
    %837 = vmatpush1.bf16.msra.mxu0 0
    %838 = vmatprep.subr.bf16.mxu0 0
    %839 = vmatpush1.bf16.msra.mxu0 0
    %840 = vmatprep.subr.bf16.mxu0 0
    %841 = vmatpush1.bf16.msra.mxu0 0
    %842 = vmatprep.subr.bf16.mxu0 0
    %843 = vmatpush1.bf16.msra.mxu0 0
    %844 = vmatprep.subr.bf16.mxu0 0
    %845 = vmatpush1.bf16.msra.mxu0 0
    %846 = vmatprep.subr.bf16.mxu0 0
    %847 = vmatpush1.bf16.msra.mxu0 0
    %848 = vmatprep.subr.bf16.mxu0 0
    %849 = vmatpush1.bf16.msra.mxu0 0
    %850 = vmatprep.mubr.bf16.mxu0 0
    %851 = vmatmul.mubr.bf16.gmra.mrb[0].mxu0 %v813
    %v852 = vpop.f32.mrb[0].mxu0
    %v853 = vadd.f32 0.0, %v852
    %v854 = vpop.f32.mrb[0].mxu0
    %v855 = vpop.f32.mrb[0].mxu0
    %v856 = vpop.f32.mrb[0].mxu0
    %857 = vdwg.mxu0
    %858 = vrot.lane.b32.xlu0 %v198, 48
    %v859 = vpop.permute.xlu0 %858
    %v861 = vsel %vm151, %v809, 0
    %v864 = vsel %vm276, %v859, 0
    %866 = vmatprep.subr.bf16.mxu0 0
    %867 = vmatpush1.bf16.msra.mxu0 %v864
    %868 = vmatprep.subr.bf16.mxu0 0
    %869 = vmatpush1.bf16.msra.mxu0 0
    %870 = vmatprep.subr.bf16.mxu0 0
    %871 = vmatpush1.bf16.msra.mxu0 0
    %872 = vmatprep.subr.bf16.mxu0 0
    %873 = vmatpush1.bf16.msra.mxu0 0
    %874 = vmatprep.subr.bf16.mxu0 0
    %875 = vmatpush1.bf16.msra.mxu0 0
    %876 = vmatprep.subr.bf16.mxu0 0
    %877 = vmatpush1.bf16.msra.mxu0 0
    %878 = vmatprep.subr.bf16.mxu0 0
    %879 = vmatpush1.bf16.msra.mxu0 0
    %880 = vmatprep.subr.bf16.mxu0 0
    %881 = vmatpush1.bf16.msra.mxu0 0
    %882 = vmatprep.subr.bf16.mxu0 0
    %883 = vmatpush1.bf16.msra.mxu0 0
    %884 = vmatprep.subr.bf16.mxu0 0
    %885 = vmatpush1.bf16.msra.mxu0 0
    %886 = vmatprep.subr.bf16.mxu0 0
    %887 = vmatpush1.bf16.msra.mxu0 0
    %888 = vmatprep.subr.bf16.mxu0 0
    %889 = vmatpush1.bf16.msra.mxu0 0
    %890 = vmatprep.subr.bf16.mxu0 0
    %891 = vmatpush1.bf16.msra.mxu0 0
    %892 = vmatprep.subr.bf16.mxu0 0
    %893 = vmatpush1.bf16.msra.mxu0 0
    %894 = vmatprep.subr.bf16.mxu0 0
    %895 = vmatpush1.bf16.msra.mxu0 0
    %896 = vmatprep.subr.bf16.mxu0 0
    %897 = vmatpush1.bf16.msra.mxu0 0
    %898 = vmatprep.mubr.bf16.mxu0 0
    %899 = vmatmul.mubr.bf16.gmra.mrb[0].mxu0 %v861
    %v900 = vpop.f32.mrb[0].mxu0
    %v901 = vadd.f32 0.0, %v900
    %v902 = vpop.f32.mrb[0].mxu0
    %v903 = vpop.f32.mrb[0].mxu0
    %v904 = vpop.f32.mrb[0].mxu0
    %905 = vdwg.mxu0
    %v906 = vpack.c.bf16 %v901, %v853
    %v907 = vld [vmem:[%s3 + $0x8] sm:$0xf]
    %v909 = vsel %vm151, %v906, 0
    %v912 = vsel %vm276, %v907, 0
    %914 = vmatprep.subr.bf16.mxu0 0
    %915 = vmatpush1.bf16.msra.mxu0 %v912
    %916 = vmatprep.subr.bf16.mxu0 0
    %917 = vmatpush1.bf16.msra.mxu0 0
    %918 = vmatprep.subr.bf16.mxu0 0
    %919 = vmatpush1.bf16.msra.mxu0 0
    %920 = vmatprep.subr.bf16.mxu0 0
    %921 = vmatpush1.bf16.msra.mxu0 0
    %922 = vmatprep.subr.bf16.mxu0 0
    %923 = vmatpush1.bf16.msra.mxu0 0
    %924 = vmatprep.subr.bf16.mxu0 0
    %925 = vmatpush1.bf16.msra.mxu0 0
    %926 = vmatprep.subr.bf16.mxu0 0
    %927 = vmatpush1.bf16.msra.mxu0 0
    %928 = vmatprep.subr.bf16.mxu0 0
    %929 = vmatpush1.bf16.msra.mxu0 0
    %930 = vmatprep.subr.bf16.mxu0 0
    %931 = vmatpush1.bf16.msra.mxu0 0
    %932 = vmatprep.subr.bf16.mxu0 0
    %933 = vmatpush1.bf16.msra.mxu0 0
    %934 = vmatprep.subr.bf16.mxu0 0
    %935 = vmatpush1.bf16.msra.mxu0 0
    %936 = vmatprep.subr.bf16.mxu0 0
    %937 = vmatpush1.bf16.msra.mxu0 0
    %938 = vmatprep.subr.bf16.mxu0 0
    %939 = vmatpush1.bf16.msra.mxu0 0
    %940 = vmatprep.subr.bf16.mxu0 0
    %941 = vmatpush1.bf16.msra.mxu0 0
    %942 = vmatprep.subr.bf16.mxu0 0
    %943 = vmatpush1.bf16.msra.mxu0 0
    %944 = vmatprep.subr.bf16.mxu0 0
    %945 = vmatpush1.bf16.msra.mxu0 0
    %946 = vmatprep.mubr.bf16.mxu0 0
    %947 = vmatmul.mubr.bf16.gmra.mrb[0].mxu0 %v909
    %v948 = vpop.f32.mrb[0].mxu0
    %v949 = vadd.f32 0.0, %v948
    %v950 = vpop.f32.mrb[0].mxu0
    %v951 = vpop.f32.mrb[0].mxu0
    %v952 = vadd.f32 0.0, %v951
    %v953 = vpop.f32.mrb[0].mxu0
    %954 = vdwg.mxu0
    %v955 = vadd.f32 %v680, %v949
    %v956 = vadd.f32 %v683, %v952
    %957 = vrot.lane.b32.xlu0 %v143, 104
    %v958 = vpop.permute.xlu0 %957
    %959 = vrot.lane.b32.xlu0 %v148, 72
    %v960 = vpop.permute.xlu0 %959
    %v962 = vsel %vm151, %v958, 0
    %v965 = vsel %vm151, %v960, 0
    %967 = vmatprep.subr.bf16.mxu0 0
    %968 = vmatpush1.bf16.xpose.msra.mxu0 %v965
    %969 = vmatprep.subr.bf16.mxu0 0
    %970 = vmatpush1.bf16.xpose.msra.mxu0 0
    %971 = vmatprep.subr.bf16.mxu0 0
    %972 = vmatpush1.bf16.xpose.msra.mxu0 0
    %973 = vmatprep.subr.bf16.mxu0 0
    %974 = vmatpush1.bf16.xpose.msra.mxu0 0
    %975 = vmatprep.subr.bf16.mxu0 0
    %976 = vmatpush1.bf16.xpose.msra.mxu0 0
    %977 = vmatprep.subr.bf16.mxu0 0
    %978 = vmatpush1.bf16.xpose.msra.mxu0 0
    %979 = vmatprep.subr.bf16.mxu0 0
    %980 = vmatpush1.bf16.xpose.msra.mxu0 0
    %981 = vmatprep.subr.bf16.mxu0 0
    %982 = vmatpush1.bf16.xpose.msra.mxu0 0
    %983 = vmatprep.subr.bf16.mxu0 0
    %984 = vmatpush1.bf16.xpose.msra.mxu0 0
    %985 = vmatprep.subr.bf16.mxu0 0
    %986 = vmatpush1.bf16.xpose.msra.mxu0 0
    %987 = vmatprep.subr.bf16.mxu0 0
    %988 = vmatpush1.bf16.xpose.msra.mxu0 0
    %989 = vmatprep.subr.bf16.mxu0 0
    %990 = vmatpush1.bf16.xpose.msra.mxu0 0
    %991 = vmatprep.subr.bf16.mxu0 0
    %992 = vmatpush1.bf16.xpose.msra.mxu0 0
    %993 = vmatprep.subr.bf16.mxu0 0
    %994 = vmatpush1.bf16.xpose.msra.mxu0 0
    %995 = vmatprep.subr.bf16.mxu0 0
    %996 = vmatpush1.bf16.xpose.msra.mxu0 0
    %997 = vmatprep.subr.bf16.mxu0 0
    %998 = vmatpush1.bf16.xpose.msra.mxu0 0
    %999 = vmatprep.mubr.bf16.mxu0 0
    %1000 = vmatmul.mubr.bf16.gmra.mrb[0].mxu0 %v962
    %v1001 = vpop.f32.mrb[0].mxu0
    %v1002 = vadd.f32 0.0, %v1001
    %v1003 = vpop.f32.mrb[0].mxu0
    %v1004 = vpop.f32.mrb[0].mxu0
    %v1005 = vpop.f32.mrb[0].mxu0
    %1006 = vdwg.mxu0
    %1007 = vrot.lane.b32.xlu0 %v144, 104
    %v1008 = vpop.permute.xlu0 %1007
    %1009 = vrot.lane.b32.xlu0 %v198, 72
    %v1010 = vpop.permute.xlu0 %1009
    %v1012 = vsel %vm151, %v1008, 0
    %v1015 = vsel %vm151, %v1010, 0
    %1017 = vmatprep.subr.bf16.mxu0 0
    %1018 = vmatpush1.bf16.xpose.msra.mxu0 %v1015
    %1019 = vmatprep.subr.bf16.mxu0 0
    %1020 = vmatpush1.bf16.xpose.msra.mxu0 0
    %1021 = vmatprep.subr.bf16.mxu0 0
    %1022 = vmatpush1.bf16.xpose.msra.mxu0 0
    %1023 = vmatprep.subr.bf16.mxu0 0
    %1024 = vmatpush1.bf16.xpose.msra.mxu0 0
    %1025 = vmatprep.subr.bf16.mxu0 0
    %1026 = vmatpush1.bf16.xpose.msra.mxu0 0
    %1027 = vmatprep.subr.bf16.mxu0 0
    %1028 = vmatpush1.bf16.xpose.msra.mxu0 0
    %1029 = vmatprep.subr.bf16.mxu0 0
    %1030 = vmatpush1.bf16.xpose.msra.mxu0 0
    %1031 = vmatprep.subr.bf16.mxu0 0
    %1032 = vmatpush1.bf16.xpose.msra.mxu0 0
    %1033 = vmatprep.subr.bf16.mxu0 0
    %1034 = vmatpush1.bf16.xpose.msra.mxu0 0
    %1035 = vmatprep.subr.bf16.mxu0 0
    %1036 = vmatpush1.bf16.xpose.msra.mxu0 0
    %1037 = vmatprep.subr.bf16.mxu0 0
    %1038 = vmatpush1.bf16.xpose.msra.mxu0 0
    %1039 = vmatprep.subr.bf16.mxu0 0
    %1040 = vmatpush1.bf16.xpose.msra.mxu0 0
    %1041 = vmatprep.subr.bf16.mxu0 0
    %1042 = vmatpush1.bf16.xpose.msra.mxu0 0
    %1043 = vmatprep.subr.bf16.mxu0 0
    %1044 = vmatpush1.bf16.xpose.msra.mxu0 0
    %1045 = vmatprep.subr.bf16.mxu0 0
    %1046 = vmatpush1.bf16.xpose.msra.mxu0 0
    %1047 = vmatprep.subr.bf16.mxu0 0
    %1048 = vmatpush1.bf16.xpose.msra.mxu0 0
    %1049 = vmatprep.mubr.bf16.mxu0 0
    %1050 = vmatmul.mubr.bf16.gmra.mrb[0].mxu0 %v1012
    %v1051 = vpop.f32.mrb[0].mxu0
    %v1052 = vadd.f32 0.0, %v1051
    %v1053 = vpop.f32.mrb[0].mxu0
    %v1054 = vpop.f32.mrb[0].mxu0
    %v1055 = vpop.f32.mrb[0].mxu0
    %1056 = vdwg.mxu0
    %v1057 = vsel %vm151, %v1002, -inf
    %1058 = vmax.xlane.f32.xlu0 %v1057
    %v1059 = vpop.xlane.xlu0 %1058
    %v1060 = vsel %vm151, %v1052, -inf
    %1061 = vmax.xlane.f32.xlu0 %v1060
    %v1062 = vpop.xlane.xlu0 %1061
    %v1063 = vsub.f32 %v1002, %v1059
    %v1064 = vsub.f32 %v1052, %v1062
    %v1065 = vmul.f32 %v1063, 1.442695
    %v1066 = vpow.pop %v1065
    %v1067 = vmul.f32 %v1064, 1.442695
    %v1068 = vpow.pop %v1067
    %v1069 = vsel %vm151, %v1066, 0.0
    %1070 = vadd.xlane.f32.xlu0 %v1069
    %v1071 = vpop.xlane.xlu0 %1070
    %v1072 = vsel %vm151, %v1068, 0.0
    %1073 = vadd.xlane.f32.xlu0 %v1072
    %v1074 = vpop.xlane.xlu0 %1073
    %v1075 = vrcp.pop %v1071
    %v1076 = vrcp.pop %v1074
    %v1077 = vmul.f32 %v1066, %v1075
    %v1078 = vmul.f32 %v1068, %v1076
    %v1079 = vpack.c.bf16 %v1077, %v1077
    %v1080 = vpack.c.bf16 %v1078, %v1078
    %1081 = vrot.lane.b32.xlu0 %v148, 40
    %v1082 = vpop.permute.xlu0 %1081
    %v1084 = vsel %vm151, %v1079, 0
    %v1087 = vsel %vm276, %v1082, 0
    %1089 = vmatprep.subr.bf16.mxu0 0
    %1090 = vmatpush1.bf16.msra.mxu0 %v1087
    %1091 = vmatprep.subr.bf16.mxu0 0
    %1092 = vmatpush1.bf16.msra.mxu0 0
    %1093 = vmatprep.subr.bf16.mxu0 0
    %1094 = vmatpush1.bf16.msra.mxu0 0
    %1095 = vmatprep.subr.bf16.mxu0 0
    %1096 = vmatpush1.bf16.msra.mxu0 0
    %1097 = vmatprep.subr.bf16.mxu0 0
    %1098 = vmatpush1.bf16.msra.mxu0 0
    %1099 = vmatprep.subr.bf16.mxu0 0
    %1100 = vmatpush1.bf16.msra.mxu0 0
    %1101 = vmatprep.subr.bf16.mxu0 0
    %1102 = vmatpush1.bf16.msra.mxu0 0
    %1103 = vmatprep.subr.bf16.mxu0 0
    %1104 = vmatpush1.bf16.msra.mxu0 0
    %1105 = vmatprep.subr.bf16.mxu0 0
    %1106 = vmatpush1.bf16.msra.mxu0 0
    %1107 = vmatprep.subr.bf16.mxu0 0
    %1108 = vmatpush1.bf16.msra.mxu0 0
    %1109 = vmatprep.subr.bf16.mxu0 0
    %1110 = vmatpush1.bf16.msra.mxu0 0
    %1111 = vmatprep.subr.bf16.mxu0 0
    %1112 = vmatpush1.bf16.msra.mxu0 0
    %1113 = vmatprep.subr.bf16.mxu0 0
    %1114 = vmatpush1.bf16.msra.mxu0 0
    %1115 = vmatprep.subr.bf16.mxu0 0
    %1116 = vmatpush1.bf16.msra.mxu0 0
    %1117 = vmatprep.subr.bf16.mxu0 0
    %1118 = vmatpush1.bf16.msra.mxu0 0
    %1119 = vmatprep.subr.bf16.mxu0 0
    %1120 = vmatpush1.bf16.msra.mxu0 0
    %1121 = vmatprep.mubr.bf16.mxu0 0
    %1122 = vmatmul.mubr.bf16.gmra.mrb[0].mxu0 %v1084
    %v1123 = vpop.f32.mrb[0].mxu0
    %v1124 = vadd.f32 0.0, %v1123
    %v1125 = vpop.f32.mrb[0].mxu0
    %v1126 = vpop.f32.mrb[0].mxu0
    %v1127 = vpop.f32.mrb[0].mxu0
    %1128 = vdwg.mxu0
    %1129 = vrot.lane.b32.xlu0 %v198, 40
    %v1130 = vpop.permute.xlu0 %1129
    %v1132 = vsel %vm151, %v1080, 0
    %v1135 = vsel %vm276, %v1130, 0
    %1137 = vmatprep.subr.bf16.mxu0 0
    %1138 = vmatpush1.bf16.msra.mxu0 %v1135
    %1139 = vmatprep.subr.bf16.mxu0 0
    %1140 = vmatpush1.bf16.msra.mxu0 0
    %1141 = vmatprep.subr.bf16.mxu0 0
    %1142 = vmatpush1.bf16.msra.mxu0 0
    %1143 = vmatprep.subr.bf16.mxu0 0
    %1144 = vmatpush1.bf16.msra.mxu0 0
    %1145 = vmatprep.subr.bf16.mxu0 0
    %1146 = vmatpush1.bf16.msra.mxu0 0
    %1147 = vmatprep.subr.bf16.mxu0 0
    %1148 = vmatpush1.bf16.msra.mxu0 0
    %1149 = vmatprep.subr.bf16.mxu0 0
    %1150 = vmatpush1.bf16.msra.mxu0 0
    %1151 = vmatprep.subr.bf16.mxu0 0
    %1152 = vmatpush1.bf16.msra.mxu0 0
    %1153 = vmatprep.subr.bf16.mxu0 0
    %1154 = vmatpush1.bf16.msra.mxu0 0
    %1155 = vmatprep.subr.bf16.mxu0 0
    %1156 = vmatpush1.bf16.msra.mxu0 0
    %1157 = vmatprep.subr.bf16.mxu0 0
    %1158 = vmatpush1.bf16.msra.mxu0 0
    %1159 = vmatprep.subr.bf16.mxu0 0
    %1160 = vmatpush1.bf16.msra.mxu0 0
    %1161 = vmatprep.subr.bf16.mxu0 0
    %1162 = vmatpush1.bf16.msra.mxu0 0
    %1163 = vmatprep.subr.bf16.mxu0 0
    %1164 = vmatpush1.bf16.msra.mxu0 0
    %1165 = vmatprep.subr.bf16.mxu0 0
    %1166 = vmatpush1.bf16.msra.mxu0 0
    %1167 = vmatprep.subr.bf16.mxu0 0
    %1168 = vmatpush1.bf16.msra.mxu0 0
    %1169 = vmatprep.mubr.bf16.mxu0 0
    %1170 = vmatmul.mubr.bf16.gmra.mrb[0].mxu0 %v1132
    %v1171 = vpop.f32.mrb[0].mxu0
    %v1172 = vadd.f32 0.0, %v1171
    %v1173 = vpop.f32.mrb[0].mxu0
    %v1174 = vpop.f32.mrb[0].mxu0
    %v1175 = vpop.f32.mrb[0].mxu0
    %1176 = vdwg.mxu0
    %v1177 = vpack.c.bf16 %v1172, %v1124
    %v1178 = vld [vmem:[%s3 + $0xc] sm:$0xf]
    %v1180 = vsel %vm151, %v1177, 0
    %v1183 = vsel %vm276, %v1178, 0
    %1185 = vmatprep.subr.bf16.mxu0 0
    %1186 = vmatpush1.bf16.msra.mxu0 %v1183
    %1187 = vmatprep.subr.bf16.mxu0 0
    %1188 = vmatpush1.bf16.msra.mxu0 0
    %1189 = vmatprep.subr.bf16.mxu0 0
    %1190 = vmatpush1.bf16.msra.mxu0 0
    %1191 = vmatprep.subr.bf16.mxu0 0
    %1192 = vmatpush1.bf16.msra.mxu0 0
    %1193 = vmatprep.subr.bf16.mxu0 0
    %1194 = vmatpush1.bf16.msra.mxu0 0
    %1195 = vmatprep.subr.bf16.mxu0 0
    %1196 = vmatpush1.bf16.msra.mxu0 0
    %1197 = vmatprep.subr.bf16.mxu0 0
    %1198 = vmatpush1.bf16.msra.mxu0 0
    %1199 = vmatprep.subr.bf16.mxu0 0
    %1200 = vmatpush1.bf16.msra.mxu0 0
    %1201 = vmatprep.subr.bf16.mxu0 0
    %1202 = vmatpush1.bf16.msra.mxu0 0
    %1203 = vmatprep.subr.bf16.mxu0 0
    %1204 = vmatpush1.bf16.msra.mxu0 0
    %1205 = vmatprep.subr.bf16.mxu0 0
    %1206 = vmatpush1.bf16.msra.mxu0 0
    %1207 = vmatprep.subr.bf16.mxu0 0
    %1208 = vmatpush1.bf16.msra.mxu0 0
    %1209 = vmatprep.subr.bf16.mxu0 0
    %1210 = vmatpush1.bf16.msra.mxu0 0
    %1211 = vmatprep.subr.bf16.mxu0 0
    %1212 = vmatpush1.bf16.msra.mxu0 0
    %1213 = vmatprep.subr.bf16.mxu0 0
    %1214 = vmatpush1.bf16.msra.mxu0 0
    %1215 = vmatprep.subr.bf16.mxu0 0
    %1216 = vmatpush1.bf16.msra.mxu0 0
    %1217 = vmatprep.mubr.bf16.mxu0 0
    %1218 = vmatmul.mubr.bf16.gmra.mrb[0].mxu0 %v1180
    %v1219 = vpop.f32.mrb[0].mxu0
    %v1220 = vadd.f32 0.0, %v1219
    %v1221 = vpop.f32.mrb[0].mxu0
    %v1222 = vpop.f32.mrb[0].mxu0
    %v1223 = vadd.f32 0.0, %v1222
    %v1224 = vpop.f32.mrb[0].mxu0
    %1225 = vdwg.mxu0
    %v1226 = vadd.f32 %v955, %v1220
    %v1227 = vadd.f32 %v956, %v1223
    %v1228 = vld [vmem:[%s4] sm:$0x1]
    %v1230 = vlaneseq
    %v1231 = vshrl.u32 %v1230, 7
    %v1232 = vsub.s32 0, %v1231
    %v1233 = vrot.slane %v1228, %v1232
    %v1235 = vadd.f32 %v1226, %v1233
    %v1236 = vadd.f32 %v1227, %v1233
    %v1237 = vadd.f32 %v63, %v1235
    %v1238 = vadd.f32 %v64, %v1236
    %v1239 = vld [vmem:[%s5] sm:$0x1]
    %v1240 = vld [vmem:[%s6] sm:$0x1]
    %v1241 = vsel %vm93, %v1237, 0.0
    %1242 = vadd.xlane.f32.xlu0 %v1241
    %v1243 = vpop.xlane.xlu0 %1242
    %v1244 = vsel %vm93, %v1238, 0.0
    %1245 = vadd.xlane.f32.xlu0 %v1244
    %v1246 = vpop.xlane.xlu0 %1245
    %v1247 = vrcp.pop 32.0
    %v1248 = vmul.f32 %v1243, %v1247
    %v1249 = vmul.f32 %v1246, %v1247
    %v1250 = vmul.f32 %v1237, %v1237
    %v1251 = vmul.f32 %v1238, %v1238
    %v1252 = vsel %vm93, %v1250, 0.0
    %1253 = vadd.xlane.f32.xlu0 %v1252
    %v1254 = vpop.xlane.xlu0 %1253
    %v1255 = vsel %vm93, %v1251, 0.0
    %1256 = vadd.xlane.f32.xlu0 %v1255
    %v1257 = vpop.xlane.xlu0 %1256
    %v1258 = vmul.f32 %v1254, %v1247
    %v1259 = vmul.f32 %v1257, %v1247
    %v1260 = vmul.f32 %v1248, %v1248
    %v1261 = vmul.f32 %v1249, %v1249
    %v1262 = vsub.f32 %v1258, %v1260
    %v1263 = vsub.f32 %v1259, %v1261
    %v1264 = vmax.f32 %v1262, 0.0
    %v1265 = vmax.f32 %v1263, 0.0
    %v1266 = vsub.f32 %v1237, %v1248
    %v1267 = vsub.f32 %v1238, %v1249
    %v1268 = vadd.f32 %v1264, 1e-05
    %v1269 = vadd.f32 %v1265, 1e-05
    %v1270 = vrsqrt.pop %v1268
    %v1271 = vrsqrt.pop %v1269
    %v1272 = vmul.f32 %v1266, %v1270
    %v1273 = vmul.f32 %v1267, %v1271
    %v1275 = vlaneseq
    %v1276 = vshrl.u32 %v1275, 7
    %v1277 = vsub.s32 0, %v1276
    %v1278 = vrot.slane %v1239, %v1277
    %v1280 = vmul.f32 %v1272, %v1278
    %v1281 = vmul.f32 %v1273, %v1278
    %v1283 = vlaneseq
    %v1284 = vshrl.u32 %v1283, 7
    %v1285 = vsub.s32 0, %v1284
    %v1286 = vrot.slane %v1240, %v1285
    %v1288 = vadd.f32 %v1280, %v1286
    %v1289 = vadd.f32 %v1281, %v1286
    %v1290 = vpack.c.bf16 %v1289, %v1288
    %v1291 = vld [vmem:[%s7] sm:$0xf]
    %v1292 = vld [vmem:[%s7 + $0x4] sm:$0xf]
    %v1293 = vld [vmem:[%s7 + $0x8] sm:$0xf]
    %v1294 = vld [vmem:[%s7 + $0xc] sm:$0xf]
    %v1295 = vld [vmem:[%s8] sm:$0x1]
    %v1297 = vlaneseq
    %v1298 = vshrl.u32 %v1297, 7
    %v1299 = vsub.s32 0, %v1298
    %v1300 = vrot.slane %v1295, %v1299
    %v1306 = vunpack.c.l.b16 %v1291
    %v1307 = vunpack.c.l.b16 %v1292
    %v1308 = vunpack.c.l.b16 %v1293
    %v1309 = vunpack.c.l.b16 %v1294
    %v1310 = vpack.c.b16 %v1307, %v1306
    %v1311 = vpack.c.b16 %v1309, %v1308
    %v1315 = vsel %vm93, %v1290, 0
    %1317 = vmatprep.subr.bf16.mxu0 0
    %1318 = vmatpush1.bf16.msra.mxu0 %v1310
    %1319 = vmatprep.subr.bf16.mxu0 0
    %1320 = vmatpush1.bf16.msra.mxu0 %v1311
    %1321 = vmatprep.subr.bf16.mxu0 0
    %1322 = vmatpush1.bf16.msra.mxu0 0
    %1323 = vmatprep.subr.bf16.mxu0 0
    %1324 = vmatpush1.bf16.msra.mxu0 0
    %1325 = vmatprep.subr.bf16.mxu0 0
    %1326 = vmatpush1.bf16.msra.mxu0 0
    %1327 = vmatprep.subr.bf16.mxu0 0
    %1328 = vmatpush1.bf16.msra.mxu0 0
    %1329 = vmatprep.subr.bf16.mxu0 0
    %1330 = vmatpush1.bf16.msra.mxu0 0
    %1331 = vmatprep.subr.bf16.mxu0 0
    %1332 = vmatpush1.bf16.msra.mxu0 0
    %1333 = vmatprep.subr.bf16.mxu0 0
    %1334 = vmatpush1.bf16.msra.mxu0 0
    %1335 = vmatprep.subr.bf16.mxu0 0
    %1336 = vmatpush1.bf16.msra.mxu0 0
    %1337 = vmatprep.subr.bf16.mxu0 0
    %1338 = vmatpush1.bf16.msra.mxu0 0
    %1339 = vmatprep.subr.bf16.mxu0 0
    %1340 = vmatpush1.bf16.msra.mxu0 0
    %1341 = vmatprep.subr.bf16.mxu0 0
    %1342 = vmatpush1.bf16.msra.mxu0 0
    %1343 = vmatprep.subr.bf16.mxu0 0
    %1344 = vmatpush1.bf16.msra.mxu0 0
    %1345 = vmatprep.subr.bf16.mxu0 0
    %1346 = vmatpush1.bf16.msra.mxu0 0
    %1347 = vmatprep.subr.bf16.mxu0 0
    %1348 = vmatpush1.bf16.msra.mxu0 0
    %1349 = vmatprep.mubr.bf16.mxu0 0
    %1350 = vmatmul.mubr.bf16.gmra.mrb[0].mxu0 %v1315
    %v1351 = vpop.f32.mrb[0].mxu0
    %v1352 = vadd.f32 %v1300, %v1351
    %v1353 = vpop.f32.mrb[0].mxu0
    %v1354 = vpop.f32.mrb[0].mxu0
    %v1355 = vadd.f32 %v1300, %v1354
    %v1356 = vpop.f32.mrb[0].mxu0
    %1357 = vdwg.mxu0
    %v1358 = vmax.f32 %v1352, 0.0
    %v1359 = vmax.f32 %v1355, 0.0
    %v1360 = vpack.c.bf16 %v1359, %v1358
    %v1361 = vld [vmem:[%s9] sm:$0xf]
    %v1362 = vld [vmem:[%s9 + $0x4] sm:$0xf]
    %v1363 = vld [vmem:[%s9 + $0x8] sm:$0xf]
    %v1364 = vld [vmem:[%s9 + $0xc] sm:$0xf]
    %v1365 = vld [vmem:[%s9 + $0x10] sm:$0xf]
    %v1366 = vld [vmem:[%s9 + $0x14] sm:$0xf]
    %v1367 = vld [vmem:[%s9 + $0x18] sm:$0xf]
    %v1368 = vld [vmem:[%s9 + $0x1c] sm:$0xf]
    %v1369 = vld [vmem:[%s10] sm:$0x1]
    %v1371 = vlaneseq
    %v1372 = vshrl.u32 %v1371, 7
    %v1373 = vsub.s32 0, %v1372
    %v1374 = vrot.slane %v1369, %v1373
    %v1384 = vunpack.c.l.b16 %v1361
    %v1385 = vunpack.c.l.b16 %v1362
    %v1386 = vunpack.c.l.b16 %v1363
    %v1387 = vunpack.c.l.b16 %v1364
    %v1388 = vunpack.c.l.b16 %v1365
    %v1389 = vunpack.c.l.b16 %v1366
    %v1390 = vunpack.c.l.b16 %v1367
    %v1391 = vunpack.c.l.b16 %v1368
    %v1392 = vpack.c.b16 %v1385, %v1384
    %v1393 = vpack.c.b16 %v1387, %v1386
    %v1394 = vpack.c.b16 %v1389, %v1388
    %v1395 = vpack.c.b16 %v1391, %v1390
    %vm1400 = vcmask 523264
    %v1402 = vsel %vm1400, %v1360, 0
    %1404 = vmatprep.subr.bf16.mxu0 0
    %1405 = vmatpush1.bf16.msra.mxu0 %v1392
    %1406 = vmatprep.subr.bf16.mxu0 0
    %1407 = vmatpush1.bf16.msra.mxu0 %v1393
    %1408 = vmatprep.subr.bf16.mxu0 0
    %1409 = vmatpush1.bf16.msra.mxu0 %v1394
    %1410 = vmatprep.subr.bf16.mxu0 0
    %1411 = vmatpush1.bf16.msra.mxu0 %v1395
    %1412 = vmatprep.subr.bf16.mxu0 0
    %1413 = vmatpush1.bf16.msra.mxu0 0
    %1414 = vmatprep.subr.bf16.mxu0 0
    %1415 = vmatpush1.bf16.msra.mxu0 0
    %1416 = vmatprep.subr.bf16.mxu0 0
    %1417 = vmatpush1.bf16.msra.mxu0 0
    %1418 = vmatprep.subr.bf16.mxu0 0
    %1419 = vmatpush1.bf16.msra.mxu0 0
    %1420 = vmatprep.subr.bf16.mxu0 0
    %1421 = vmatpush1.bf16.msra.mxu0 0
    %1422 = vmatprep.subr.bf16.mxu0 0
    %1423 = vmatpush1.bf16.msra.mxu0 0
    %1424 = vmatprep.subr.bf16.mxu0 0
    %1425 = vmatpush1.bf16.msra.mxu0 0
    %1426 = vmatprep.subr.bf16.mxu0 0
    %1427 = vmatpush1.bf16.msra.mxu0 0
    %1428 = vmatprep.subr.bf16.mxu0 0
    %1429 = vmatpush1.bf16.msra.mxu0 0
    %1430 = vmatprep.subr.bf16.mxu0 0
    %1431 = vmatpush1.bf16.msra.mxu0 0
    %1432 = vmatprep.subr.bf16.mxu0 0
    %1433 = vmatpush1.bf16.msra.mxu0 0
    %1434 = vmatprep.subr.bf16.mxu0 0
    %1435 = vmatpush1.bf16.msra.mxu0 0
    %1436 = vmatprep.mubr.bf16.mxu0 0
    %1437 = vmatmul.mubr.bf16.gmra.mrb[0].mxu0 %v1402
    %v1438 = vpop.f32.mrb[0].mxu0
    %v1439 = vadd.f32 %v1374, %v1438
    %v1440 = vpop.f32.mrb[0].mxu0
    %v1441 = vpop.f32.mrb[0].mxu0
    %v1442 = vadd.f32 %v1374, %v1441
    %v1443 = vpop.f32.mrb[0].mxu0
    %1444 = vdwg.mxu0
    %v1445 = vadd.f32 %v1288, %v1439
    %v1446 = vadd.f32 %v1289, %v1442
    %v1447 = vld [vmem:[%s11] sm:$0x1]
    %v1448 = vld [vmem:[%s12] sm:$0x1]
    %v1449 = vsel %vm93, %v1445, 0.0
    %1450 = vadd.xlane.f32.xlu0 %v1449
    %v1451 = vpop.xlane.xlu0 %1450
    %v1452 = vsel %vm93, %v1446, 0.0
    %1453 = vadd.xlane.f32.xlu0 %v1452
    %v1454 = vpop.xlane.xlu0 %1453
    %v1455 = vmul.f32 %v1451, %v1247
    %v1456 = vmul.f32 %v1454, %v1247
    %v1457 = vmul.f32 %v1445, %v1445
    %v1458 = vmul.f32 %v1446, %v1446
    %v1459 = vsel %vm93, %v1457, 0.0
    %1460 = vadd.xlane.f32.xlu0 %v1459
    %v1461 = vpop.xlane.xlu0 %1460
    %v1462 = vsel %vm93, %v1458, 0.0
    %1463 = vadd.xlane.f32.xlu0 %v1462
    %v1464 = vpop.xlane.xlu0 %1463
    %v1465 = vmul.f32 %v1461, %v1247
    %v1466 = vmul.f32 %v1464, %v1247
    %v1467 = vmul.f32 %v1455, %v1455
    %v1468 = vmul.f32 %v1456, %v1456
    %v1469 = vsub.f32 %v1465, %v1467
    %v1470 = vsub.f32 %v1466, %v1468
    %v1471 = vmax.f32 %v1469, 0.0
    %v1472 = vmax.f32 %v1470, 0.0
    %v1473 = vsub.f32 %v1445, %v1455
    %v1474 = vsub.f32 %v1446, %v1456
    %v1475 = vadd.f32 %v1471, 1e-05
    %v1476 = vadd.f32 %v1472, 1e-05
    %v1477 = vrsqrt.pop %v1475
    %v1478 = vrsqrt.pop %v1476
    %v1479 = vmul.f32 %v1473, %v1477
    %v1480 = vmul.f32 %v1474, %v1478
    %v1482 = vlaneseq
    %v1483 = vshrl.u32 %v1482, 7
    %v1484 = vsub.s32 0, %v1483
    %v1485 = vrot.slane %v1447, %v1484
    %v1487 = vmul.f32 %v1479, %v1485
    %v1488 = vmul.f32 %v1480, %v1485
    %v1490 = vlaneseq
    %v1491 = vshrl.u32 %v1490, 7
    %v1492 = vsub.s32 0, %v1491
    %v1493 = vrot.slane %v1448, %v1492
    %v1495 = vadd.f32 %v1487, %v1493
    %v1496 = vadd.f32 %v1488, %v1493
    %v1497 = vpack.c.bf16 %v1495, %v1495
    %v1498 = vpack.c.bf16 %v1496, %v1496
    %vm1499 = vcmask 257024
    %1500 = vst.msk [vmem:[#allocation5] sm:$0xf] %vm1499, %v1497
    %1501 = vst.msk [vmem:[#allocation5 + $0x4] sm:$0xf] %vm1499, %v1498
    // Predicated region
    $region58: #{tpu_custom_call.1} parent=1 // pred_check
      _
    $region59: #{tpu_custom_call.1} parent=1 // pred_check_branch
      %1503 = sbr.rel (0) target = $region61
    $region60: #{tpu_custom_call.1} parent=1 // pred_region
      %s1505 = ssub.s32 128, 128
      %1506 = vsyncadd [#allocation4], %s1505
      %s1507 = sshll.u32 [#allocation5], 4
      %s1508 = int_to_ptr.vmem [resolvable:$true] %s1507
      %1513 = dma.vmem_to_hbm [thread:$0]  %s1508, 128, %s13, [#allocation4], 64, 64, 4
    $region61: #{tpu_custom_call.1} parent=1 // pred_fallthru
      _
    // Predicated region
    $region62: #{tpu_custom_call.1} parent=1 // pred_check
      _
    $region63: #{tpu_custom_call.1} parent=1 // pred_check_branch
      %1515 = sbr.rel (0) target = $region65
    $region64: #{tpu_custom_call.1} parent=1 // pred_region
      %1516 = dma.done [#allocation4], 128
    $region65: #{tpu_custom_call.1} parent=1 // pred_fallthru
      _
    %1517 = vsyncpa [#allocation3], 1
    %1518 = vsyncpa [#allocation4], 1

</llo_original>
